<compile_context>
chip_gen: v5e
topology: v5e:2x2
jax: 0.10.0
libtpu: 0.0.40
codegen_flags: <defaults>
</compile_context>

<pallas_src>
import functools

import jax
import jax.numpy as jnp
from jax.experimental import pallas as pl
from jax.experimental.pallas import tpu as pltpu

EXPANSION = 4
BN_EPS = 1e-5
LANE = 128


def _round_up(n, m):
    return (n + m - 1) // m * m


# ----------------------------------------------------------------------------
# Pallas kernel: one batch element per grid step, everything fused.
# ----------------------------------------------------------------------------
def bottleneck_kernel(*refs, stride, has_shortcut_conv):
    has_xs = has_shortcut_conv and stride > 1
    it = iter(refs)
    x_ref = next(it)
    xs_ref = next(it) if has_xs else None
    w1_ref, s1_ref, b1_ref = next(it), next(it), next(it)
    w2_ref, s2_ref, b2_ref = next(it), next(it), next(it)
    w3_ref, s3_ref, b3_ref = next(it), next(it), next(it)
    wsc_ref = next(it) if has_shortcut_conv else None
    ssc_ref, bsc_ref, o_ref = next(it), next(it), next(it)

    H, W, Cin = x_ref.shape
    Cmid = w1_ref.shape[1]
    Cout = w3_ref.shape[1]
    Ho = (H - 1) // stride + 1      # H is strided inside the kernel.
    # W stays full-resolution inside the kernel (stride-1 conv along W); the
    # wrapper keeps every `stride`-th output column.  All in-kernel slices are
    # unit-stride, all reshapes touch only leading/flattened dims.

    x = x_ref[...]                                      # bf16 (H, W, Cin)
    xf = x.reshape(H * W, Cin)

    # ---- conv1: 1x1 (MXU bf16xbf16 -> f32) + BN + ReLU (f32 on the VPU) ----
    y1 = jnp.dot(xf, w1_ref[...], preferred_element_type=jnp.float32)
    y1 = jnp.maximum(y1 * s1_ref[...] + b1_ref[...], 0.0)
    y1 = y1.astype(jnp.bfloat16).reshape(H, W, Cmid)

    # ---- conv2: 3x3, pad=1 -> single im2col matmul, K = 9*Cmid -------------
    pb = max(1, stride * Ho + 1 - H)   # bottom pad so row taps stay in bounds
    ypad = jnp.concatenate(
        [jnp.zeros((1, W, Cmid), jnp.bfloat16), y1,
         jnp.zeros((pb, W, Cmid), jnp.bfloat16)], axis=0)
    Hp = 1 + H + pb
    ypad = jnp.concatenate(
        [jnp.zeros((Hp, 1, Cmid), jnp.bfloat16), ypad,
         jnp.zeros((Hp, 1, Cmid), jnp.bfloat16)], axis=1)
    Wp = W + 2

    taps = []
    for kh in range(3):
        rows = ypad[kh:kh + stride * Ho]          # unit-stride, leading dim
        if stride > 1:
            # Row subsample (keep rows kh, kh+stride, ...) via a reshape plus
            # a unit-stride slice -- no strided value slice needed.
            rows = rows.reshape(Ho, stride * Wp, Cmid)[:, :Wp, :]
        for kw in range(3):
            taps.append(rows[:, kw:kw + W, :])    # unit-stride, sublane dim
    cols = jnp.concatenate(taps, axis=-1).reshape(Ho * W, 9 * Cmid)
    y2 = jnp.dot(cols, w2_ref[...], preferred_element_type=jnp.float32)
    y2 = jnp.maximum(y2 * s2_ref[...] + b2_ref[...], 0.0).astype(jnp.bfloat16)

    # ---- conv3: 1x1 (MXU) + BN ----
    y3 = jnp.dot(y2, w3_ref[...], preferred_element_type=jnp.float32)
    y3 = y3 * s3_ref[...] + b3_ref[...]

    # ---- shortcut ----
    if has_shortcut_conv:
        xsf = xs_ref[...].reshape(Ho * W, Cin) if has_xs else xf
        sc = jnp.dot(xsf, wsc_ref[...], preferred_element_type=jnp.float32)
        sc = sc * ssc_ref[...] + bsc_ref[...]
    else:
        # BN-only shortcut: no matmul, no resident identity weight.
        sc = xf.astype(jnp.float32) * ssc_ref[...] + bsc_ref[...]

    # ---- add + ReLU; lane-dense (Cout multiple of 128) store ----
    out = jnp.maximum(y3 + sc, 0.0)
    o_ref[...] = out.reshape(Ho, W, Cout).astype(o_ref.dtype)


# ----------------------------------------------------------------------------
# Wrappers
# ----------------------------------------------------------------------------
def bottleneck_forward_nhwc(x_nhwc, params, *, stride):
    (w1, s1, b1, w2, s2, b2, w3, s3, b3, wsc, ssc, bsc) = params
    has_shortcut_conv = wsc is not None
    has_xs = has_shortcut_conv and stride > 1

    N, H, W, Cin = x_nhwc.shape
    Cmid = w1.shape[1]
    Cout = w3.shape[1]
    Ho = (H - 1) // stride + 1

    Cin_p = _round_up(Cin, LANE)
    Cmid_p = _round_up(Cmid, LANE)
    Cout_p = _round_up(Cout, LANE)

    # bf16 activations for the MXU; channel axis zero-padded to lane width.
    x = jnp.pad(x_nhwc, ((0, 0), (0, 0), (0, 0), (0, Cin_p - Cin)))
    x = x.astype(jnp.bfloat16)

    def pad_mat(w, rp, cp):
        return jnp.pad(w, ((0, rp - w.shape[0]),
                           (0, cp - w.shape[1]))).astype(jnp.bfloat16)

    def pad_vec(v, cp):
        return jnp.pad(v, (0, cp - v.shape[0])).astype(jnp.float32)[None, :]

    w1p = pad_mat(w1, Cin_p, Cmid_p)
    w2p = jnp.pad(w2, ((0, 0), (0, 0), (0, Cmid_p - Cmid),
                       (0, Cmid_p - Cmid))).astype(jnp.bfloat16)
    w2p = w2p.reshape(9 * Cmid_p, Cmid_p)          # im2col weight layout
    w3p = pad_mat(w3, Cmid_p, Cout_p)
    s1p, b1p = pad_vec(s1, Cmid_p), pad_vec(b1, Cmid_p)
    s2p, b2p = pad_vec(s2, Cmid_p), pad_vec(b2, Cmid_p)
    s3p, b3p = pad_vec(s3, Cout_p), pad_vec(b3, Cout_p)
    sscp, bscp = pad_vec(ssc, Cout_p), pad_vec(bsc, Cout_p)

    def full_spec(a):
        nd = a.ndim
        return pl.BlockSpec(a.shape, lambda n, _nd=nd: (0,) * _nd)

    inputs = [x]
    in_specs = [pl.BlockSpec((None, H, W, Cin_p), lambda n: (n, 0, 0, 0))]
    if has_xs:
        # Wrapper-side H subsample for the strided 1x1 shortcut (contiguous
        # XLA gather); the W subsample happens once on the final output.
        xs = x[:, ::stride, :, :]
        inputs.append(xs)
        in_specs.append(pl.BlockSpec((None, Ho, W, Cin_p),
                                     lambda n: (n, 0, 0, 0)))
    inputs += [w1p, s1p, b1p, w2p, s2p, b2p, w3p, s3p, b3p]
    in_specs += [full_spec(a) for a in (w1p, s1p, b1p, w2p, s2p, b2p,
                                        w3p, s3p, b3p)]
    if has_shortcut_conv:
        wscp = pad_mat(wsc, Cin_p, Cout_p)
        inputs.append(wscp)
        in_specs.append(full_spec(wscp))
    inputs += [sscp, bscp]
    in_specs += [full_spec(sscp), full_spec(bscp)]

    out_nhwc = pl.pallas_call(
        functools.partial(bottleneck_kernel, stride=stride,
                          has_shortcut_conv=has_shortcut_conv),
        out_shape=jax.ShapeDtypeStruct((N, Ho, W, Cout_p), jnp.float32),
        grid=(N,),
        in_specs=in_specs,
        out_specs=pl.BlockSpec((None, Ho, W, Cout_p),
                               lambda n: (n, 0, 0, 0)),
        compiler_params=pltpu.CompilerParams(
            dimension_semantics=("parallel",),
            # Explicit scoped-VMEM budget above the 32 MiB default so large
            # ResNet stages don't silently cripple double-buffering.
            vmem_limit_bytes=64 * 1024 * 1024),
    )(*inputs)

    # Stride-subsample W and drop channel padding (cheap XLA slice).
    return out_nhwc[:, :, ::stride, :Cout]


def bottleneck_forward(x_nchw, params, *, stride):
    # TODO(synk): keep a full network in NHWC end-to-end (call
    #             bottleneck_forward_nhwc) instead of a transpose per block.
    x_nhwc = jnp.transpose(x_nchw, (0, 2, 3, 1))
    out = bottleneck_forward_nhwc(x_nhwc, params, stride=stride)
    return jnp.transpose(out, (0, 3, 1, 2))


# ----------------------------------------------------------------------------
# Deterministic synthetic parameters (shapes follow the nn.Module __init__).
# ----------------------------------------------------------------------------
def make_params(key, in_channels, out_channels, stride):
    cmid = out_channels
    cout = out_channels * EXPANSION
    ks = jax.random.split(key, 8)

    def bn(k, c):
        k0, k1, k2, k3 = jax.random.split(k, 4)
        gamma = 1.0 + 0.1 * jax.random.normal(k0, (c,), jnp.float32)
        beta = 0.1 * jax.random.normal(k1, (c,), jnp.float32)
        mean = 0.1 * jax.random.normal(k2, (c,), jnp.float32)
        var = jnp.abs(jax.random.normal(k3, (c,), jnp.float32)) + 0.5
        scale = gamma / jnp.sqrt(var + BN_EPS)
        bias = beta - mean * scale
        return scale, bias

    # conv weights stored in kernel-friendly layouts:
    #   1x1 conv -> (Cin, Cout_of_conv);  3x3 conv -> HWIO (3, 3, Cin, Cout)
    w1 = 0.2 * jax.random.normal(ks[0], (in_channels, cmid), jnp.float32)
    w2 = 0.2 * jax.random.normal(ks[1], (3, 3, cmid, cmid), jnp.float32)
    w3 = 0.2 * jax.random.normal(ks[2], (cmid, cout), jnp.float32)
    s1, b1 = bn(ks[3], cmid)
    s2, b2 = bn(ks[4], cmid)
    s3, b3 = bn(ks[5], cout)

    if in_channels != cout or stride != 1:
        wsc = 0.2 * jax.random.normal(ks[6], (in_channels, cout), jnp.float32)
    else:
        wsc = None          # PyTorch shortcut is BN-only (identity path).
    ssc, bsc = bn(ks[7], cout)
    return (w1, s1, b1, w2, s2, b2, w3, s3, b3, wsc, ssc, bsc)


# ----------------------------------------------------------------------------
# Pure-JAX reference (lax convs, same bf16 MXU inputs) for correctness check.
# ----------------------------------------------------------------------------
def reference_forward(x_nchw, params, *, stride):
    (w1, s1, b1, w2, s2, b2, w3, s3, b3, wsc, ssc, bsc) = params
    x = jnp.transpose(x_nchw, (0, 2, 3, 1))
    xq = x.astype(jnp.bfloat16)            # mirror the kernel's bf16 inputs
    dn = ("NHWC", "HWIO", "NHWC")

    def conv(v, w, strides, pad):
        return jax.lax.conv_general_dilated(
            v.astype(jnp.bfloat16), w.astype(jnp.bfloat16), strides, pad,
            dimension_numbers=dn, preferred_element_type=jnp.float32)

    y = conv(xq, w1[None, None], (1, 1), "VALID")
    y = jnp.maximum(y * s1 + b1, 0.0)
    y = conv(y, w2, (stride, stride), [(1, 1), (1, 1)])
    y = jnp.maximum(y * s2 + b2, 0.0)
    y = conv(y, w3[None, None], (1, 1), "VALID")
    y = y * s3 + b3
    if wsc is not None:
        sc = conv(xq, wsc[None, None], (stride, stride), "VALID")
        sc = sc * ssc + bsc
    else:
        sc = xq.astype(jnp.float32) * ssc + bsc
    out = jnp.maximum(y + sc, 0.0)
    return jnp.transpose(out, (0, 3, 1, 2))


if __name__ == "__main__":
    key = jax.random.PRNGKey(0)
    fwd = jax.jit(bottleneck_forward, static_argnames=("stride",))

    configs = [
        # (N, Cin, H, W, out_channels, stride)
        (2, 4, 16, 16, 4, 1),    # projection (1x1 conv) shortcut
        (2, 16, 16, 16, 4, 1),   # BN-only identity shortcut (Cin == out*4)
        (2, 8, 16, 16, 4, 2),    # downsampling block: stride-2 + projection
    ]
    for i, (N, Cin, H, W, out_channels, stride) in enumerate(configs):
        k_x, k_p = jax.random.split(jax.random.fold_in(key, i))
        x = jax.random.normal(k_x, (N, Cin, H, W), jnp.float32)
        params = make_params(k_p, Cin, out_channels, stride)

        out = jax.block_until_ready(fwd(x, params, stride=stride))
        ref = jax.block_until_ready(
            reference_forward(x, params, stride=stride))

        Ho = (H - 1) // stride + 1
        Wo = (W - 1) // stride + 1
        assert out.shape == (N, out_channels * EXPANSION, Ho, Wo), out.shape
        max_err = jnp.max(jnp.abs(out - ref))
        assert jnp.allclose(out, ref, rtol=2e-2, atol=2e-2), \
            f"config {i}: max abs diff {max_err}"

    print("KERNEL_OK")
</pallas_src>

<mosaic_0001>
module attributes {stable_mosaic.version = 11 : i64} {
  func.func @bottleneck_kernel(%arg0: i32, %arg1: memref<1x16x16x128xbf16, #tpu.memory_space<vmem>>, %arg2: memref<128x128xbf16, #tpu.memory_space<vmem>>, %arg3: memref<1x128xf32, #tpu.memory_space<vmem>>, %arg4: memref<1x128xf32, #tpu.memory_space<vmem>>, %arg5: memref<1152x128xbf16, #tpu.memory_space<vmem>>, %arg6: memref<1x128xf32, #tpu.memory_space<vmem>>, %arg7: memref<1x128xf32, #tpu.memory_space<vmem>>, %arg8: memref<128x128xbf16, #tpu.memory_space<vmem>>, %arg9: memref<1x128xf32, #tpu.memory_space<vmem>>, %arg10: memref<1x128xf32, #tpu.memory_space<vmem>>, %arg11: memref<128x128xbf16, #tpu.memory_space<vmem>>, %arg12: memref<1x128xf32, #tpu.memory_space<vmem>>, %arg13: memref<1x128xf32, #tpu.memory_space<vmem>>, %arg14: memref<1x16x16x128xf32, #tpu.memory_space<vmem>>) attributes {dimension_semantics = [#tpu.dimension_semantics<parallel>], iteration_bounds = array<i64: 2>, scalar_prefetch = 0 : i64, scratch_operands = 0 : i64, tpu.core_type = #tpu.core_type<tc>, window_params = [{transform_indices = @transform_0, window_bounds = array<i64: 1, 16, 16, 128>}, {pipeline_mode = #tpu.pipeline_mode<synchronous>, transform_indices = @transform_1, window_bounds = array<i64: 128, 128>}, {pipeline_mode = #tpu.pipeline_mode<synchronous>, transform_indices = @transform_2, window_bounds = array<i64: 1, 128>}, {pipeline_mode = #tpu.pipeline_mode<synchronous>, transform_indices = @transform_3, window_bounds = array<i64: 1, 128>}, {pipeline_mode = #tpu.pipeline_mode<synchronous>, transform_indices = @transform_4, window_bounds = array<i64: 1152, 128>}, {pipeline_mode = #tpu.pipeline_mode<synchronous>, transform_indices = @transform_5, window_bounds = array<i64: 1, 128>}, {pipeline_mode = #tpu.pipeline_mode<synchronous>, transform_indices = @transform_6, window_bounds = array<i64: 1, 128>}, {pipeline_mode = #tpu.pipeline_mode<synchronous>, transform_indices = @transform_7, window_bounds = array<i64: 128, 128>}, {pipeline_mode = #tpu.pipeline_mode<synchronous>, transform_indices = @transform_8, window_bounds = array<i64: 1, 128>}, {pipeline_mode = #tpu.pipeline_mode<synchronous>, transform_indices = @transform_9, window_bounds = array<i64: 1, 128>}, {pipeline_mode = #tpu.pipeline_mode<synchronous>, transform_indices = @transform_10, window_bounds = array<i64: 128, 128>}, {pipeline_mode = #tpu.pipeline_mode<synchronous>, transform_indices = @transform_11, window_bounds = array<i64: 1, 128>}, {pipeline_mode = #tpu.pipeline_mode<synchronous>, transform_indices = @transform_12, window_bounds = array<i64: 1, 128>}, {transform_indices = @transform_13, window_bounds = array<i64: 1, 16, 16, 128>}]} {
    %c0 = arith.constant 0 : index
    %c0_0 = arith.constant 0 : index
    %c0_1 = arith.constant 0 : index
    %c0_2 = arith.constant 0 : index
    %0 = vector.load %arg1[%c0, %c0_0, %c0_1, %c0_2] : memref<1x16x16x128xbf16, #tpu.memory_space<vmem>>, vector<1x16x16x128xbf16>
    %1 = vector.shape_cast %0 : vector<1x16x16x128xbf16> to vector<16x16x128xbf16>
    %2 = vector.shape_cast %1 : vector<16x16x128xbf16> to vector<256x128xbf16>
    %c0_3 = arith.constant 0 : index
    %c0_4 = arith.constant 0 : index
    %3 = vector.load %arg2[%c0_3, %c0_4] : memref<128x128xbf16, #tpu.memory_space<vmem>>, vector<128x128xbf16>
    %cst = arith.constant dense<0.000000e+00> : vector<256x128xf32>
    %4 = tpu.matmul %2, %3, %cst {dimension_numbers = #tpu.dot_dimension_numbers<[1], [0], [0], [1], [0, 0, 1, 1], [], []>} : vector<256x128xbf16>, vector<128x128xbf16>, vector<256x128xf32> -> vector<256x128xf32>
    %c0_5 = arith.constant 0 : index
    %c0_6 = arith.constant 0 : index
    %5 = vector.load %arg3[%c0_5, %c0_6] : memref<1x128xf32, #tpu.memory_space<vmem>>, vector<1x128xf32>
    %6 = vector.broadcast %5 : vector<1x128xf32> to vector<256x128xf32>
    %7 = arith.mulf %4, %6 : vector<256x128xf32>
    %c0_7 = arith.constant 0 : index
    %c0_8 = arith.constant 0 : index
    %8 = vector.load %arg4[%c0_7, %c0_8] : memref<1x128xf32, #tpu.memory_space<vmem>>, vector<1x128xf32>
    %9 = vector.broadcast %8 : vector<1x128xf32> to vector<256x128xf32>
    %10 = arith.addf %7, %9 : vector<256x128xf32>
    %cst_9 = arith.constant 0.000000e+00 : f32
    %11 = vector.broadcast %cst_9 : f32 to vector<256x128xf32>
    %12 = arith.maximumf %10, %11 : vector<256x128xf32>
    %13 = arith.truncf %12 : vector<256x128xf32> to vector<256x128xbf16>
    %14 = vector.shape_cast %13 : vector<256x128xbf16> to vector<16x16x128xbf16>
    %cst_10 = arith.constant 0.000000e+00 : bf16
    %15 = vector.broadcast %cst_10 : bf16 to vector<1x16x128xbf16>
    %cst_11 = arith.constant 0.000000e+00 : bf16
    %16 = vector.broadcast %cst_11 : bf16 to vector<1x16x128xbf16>
    %17 = tpu.concatenate %15, %14, %16 in 0 : vector<1x16x128xbf16>, vector<16x16x128xbf16>, vector<1x16x128xbf16> -> vector<18x16x128xbf16>
    %cst_12 = arith.constant 0.000000e+00 : bf16
    %18 = vector.broadcast %cst_12 : bf16 to vector<18x1x128xbf16>
    %cst_13 = arith.constant 0.000000e+00 : bf16
    %19 = vector.broadcast %cst_13 : bf16 to vector<18x1x128xbf16>
    %20 = tpu.concatenate %18, %17, %19 in 1 : vector<18x1x128xbf16>, vector<18x16x128xbf16>, vector<18x1x128xbf16> -> vector<18x18x128xbf16>
    %21 = vector.extract_strided_slice %20 {offsets = [0, 0, 0], sizes = [16, 18, 128], strides = [1, 1, 1]} : vector<18x18x128xbf16> to vector<16x18x128xbf16>
    %22 = vector.extract_strided_slice %21 {offsets = [0, 0, 0], sizes = [16, 16, 128], strides = [1, 1, 1]} : vector<16x18x128xbf16> to vector<16x16x128xbf16>
    %23 = vector.extract_strided_slice %21 {offsets = [0, 1, 0], sizes = [16, 16, 128], strides = [1, 1, 1]} : vector<16x18x128xbf16> to vector<16x16x128xbf16>
    %24 = vector.extract_strided_slice %21 {offsets = [0, 2, 0], sizes = [16, 16, 128], strides = [1, 1, 1]} : vector<16x18x128xbf16> to vector<16x16x128xbf16>
    %25 = vector.extract_strided_slice %20 {offsets = [1, 0, 0], sizes = [16, 18, 128], strides = [1, 1, 1]} : vector<18x18x128xbf16> to vector<16x18x128xbf16>
    %26 = vector.extract_strided_slice %25 {offsets = [0, 0, 0], sizes = [16, 16, 128], strides = [1, 1, 1]} : vector<16x18x128xbf16> to vector<16x16x128xbf16>
    %27 = vector.extract_strided_slice %25 {offsets = [0, 1, 0], sizes = [16, 16, 128], strides = [1, 1, 1]} : vector<16x18x128xbf16> to vector<16x16x128xbf16>
    %28 = vector.extract_strided_slice %25 {offsets = [0, 2, 0], sizes = [16, 16, 128], strides = [1, 1, 1]} : vector<16x18x128xbf16> to vector<16x16x128xbf16>
    %29 = vector.extract_strided_slice %20 {offsets = [2, 0, 0], sizes = [16, 18, 128], strides = [1, 1, 1]} : vector<18x18x128xbf16> to vector<16x18x128xbf16>
    %30 = vector.extract_strided_slice %29 {offsets = [0, 0, 0], sizes = [16, 16, 128], strides = [1, 1, 1]} : vector<16x18x128xbf16> to vector<16x16x128xbf16>
    %31 = vector.extract_strided_slice %29 {offsets = [0, 1, 0], sizes = [16, 16, 128], strides = [1, 1, 1]} : vector<16x18x128xbf16> to vector<16x16x128xbf16>
    %32 = vector.extract_strided_slice %29 {offsets = [0, 2, 0], sizes = [16, 16, 128], strides = [1, 1, 1]} : vector<16x18x128xbf16> to vector<16x16x128xbf16>
    %33 = tpu.concatenate %22, %23, %24, %26, %27, %28, %30, %31, %32 in 2 : vector<16x16x128xbf16>, vector<16x16x128xbf16>, vector<16x16x128xbf16>, vector<16x16x128xbf16>, vector<16x16x128xbf16>, vector<16x16x128xbf16>, vector<16x16x128xbf16>, vector<16x16x128xbf16>, vector<16x16x128xbf16> -> vector<16x16x1152xbf16>
    %34 = vector.shape_cast %33 : vector<16x16x1152xbf16> to vector<256x1152xbf16>
    %c0_14 = arith.constant 0 : index
    %c0_15 = arith.constant 0 : index
    %35 = vector.load %arg5[%c0_14, %c0_15] : memref<1152x128xbf16, #tpu.memory_space<vmem>>, vector<1152x128xbf16>
    %cst_16 = arith.constant dense<0.000000e+00> : vector<256x128xf32>
    %36 = tpu.matmul %34, %35, %cst_16 {dimension_numbers = #tpu.dot_dimension_numbers<[1], [0], [0], [1], [0, 0, 1, 1], [], []>} : vector<256x1152xbf16>, vector<1152x128xbf16>, vector<256x128xf32> -> vector<256x128xf32>
    %c0_17 = arith.constant 0 : index
    %c0_18 = arith.constant 0 : index
    %37 = vector.load %arg6[%c0_17, %c0_18] : memref<1x128xf32, #tpu.memory_space<vmem>>, vector<1x128xf32>
    %38 = vector.broadcast %37 : vector<1x128xf32> to vector<256x128xf32>
    %39 = arith.mulf %36, %38 : vector<256x128xf32>
    %c0_19 = arith.constant 0 : index
    %c0_20 = arith.constant 0 : index
    %40 = vector.load %arg7[%c0_19, %c0_20] : memref<1x128xf32, #tpu.memory_space<vmem>>, vector<1x128xf32>
    %41 = vector.broadcast %40 : vector<1x128xf32> to vector<256x128xf32>
    %42 = arith.addf %39, %41 : vector<256x128xf32>
    %cst_21 = arith.constant 0.000000e+00 : f32
    %43 = vector.broadcast %cst_21 : f32 to vector<256x128xf32>
    %44 = arith.maximumf %42, %43 : vector<256x128xf32>
    %45 = arith.truncf %44 : vector<256x128xf32> to vector<256x128xbf16>
    %c0_22 = arith.constant 0 : index
    %c0_23 = arith.constant 0 : index
    %46 = vector.load %arg8[%c0_22, %c0_23] : memref<128x128xbf16, #tpu.memory_space<vmem>>, vector<128x128xbf16>
    %cst_24 = arith.constant dense<0.000000e+00> : vector<256x128xf32>
    %47 = tpu.matmul %45, %46, %cst_24 {dimension_numbers = #tpu.dot_dimension_numbers<[1], [0], [0], [1], [0, 0, 1, 1], [], []>} : vector<256x128xbf16>, vector<128x128xbf16>, vector<256x128xf32> -> vector<256x128xf32>
    %c0_25 = arith.constant 0 : index
    %c0_26 = arith.constant 0 : index
    %48 = vector.load %arg9[%c0_25, %c0_26] : memref<1x128xf32, #tpu.memory_space<vmem>>, vector<1x128xf32>
    %49 = vector.broadcast %48 : vector<1x128xf32> to vector<256x128xf32>
    %50 = arith.mulf %47, %49 : vector<256x128xf32>
    %c0_27 = arith.constant 0 : index
    %c0_28 = arith.constant 0 : index
    %51 = vector.load %arg10[%c0_27, %c0_28] : memref<1x128xf32, #tpu.memory_space<vmem>>, vector<1x128xf32>
    %52 = vector.broadcast %51 : vector<1x128xf32> to vector<256x128xf32>
    %53 = arith.addf %50, %52 : vector<256x128xf32>
    %c0_29 = arith.constant 0 : index
    %c0_30 = arith.constant 0 : index
    %54 = vector.load %arg11[%c0_29, %c0_30] : memref<128x128xbf16, #tpu.memory_space<vmem>>, vector<128x128xbf16>
    %cst_31 = arith.constant dense<0.000000e+00> : vector<256x128xf32>
    %55 = tpu.matmul %2, %54, %cst_31 {dimension_numbers = #tpu.dot_dimension_numbers<[1], [0], [0], [1], [0, 0, 1, 1], [], []>} : vector<256x128xbf16>, vector<128x128xbf16>, vector<256x128xf32> -> vector<256x128xf32>
    %c0_32 = arith.constant 0 : index
    %c0_33 = arith.constant 0 : index
    %56 = vector.load %arg12[%c0_32, %c0_33] : memref<1x128xf32, #tpu.memory_space<vmem>>, vector<1x128xf32>
    %57 = vector.broadcast %56 : vector<1x128xf32> to vector<256x128xf32>
    %58 = arith.mulf %55, %57 : vector<256x128xf32>
    %c0_34 = arith.constant 0 : index
    %c0_35 = arith.constant 0 : index
    %59 = vector.load %arg13[%c0_34, %c0_35] : memref<1x128xf32, #tpu.memory_space<vmem>>, vector<1x128xf32>
    %60 = vector.broadcast %59 : vector<1x128xf32> to vector<256x128xf32>
    %61 = arith.addf %58, %60 : vector<256x128xf32>
    %62 = arith.addf %53, %61 : vector<256x128xf32>
    %cst_36 = arith.constant 0.000000e+00 : f32
    %63 = vector.broadcast %cst_36 : f32 to vector<256x128xf32>
    %64 = arith.maximumf %62, %63 : vector<256x128xf32>
    %65 = vector.shape_cast %64 : vector<256x128xf32> to vector<16x16x128xf32>
    %c0_37 = arith.constant 0 : index
    %c0_38 = arith.constant 0 : index
    %c0_39 = arith.constant 0 : index
    %c0_40 = arith.constant 0 : index
    %66 = vector.load %arg14[%c0_37, %c0_38, %c0_39, %c0_40] : memref<1x16x16x128xf32, #tpu.memory_space<vmem>>, vector<1x16x16x128xf32>
    %67 = vector.shape_cast %66 : vector<1x16x16x128xf32> to vector<16x16x128xf32>
    %68 = vector.shape_cast %65 : vector<16x16x128xf32> to vector<1x16x16x128xf32>
    tpu.vector_store %arg14[%c0_37, %c0_38, %c0_39, %c0_40], %68 {strides = array<i32>} : memref<1x16x16x128xf32, #tpu.memory_space<vmem>>, vector<1x16x16x128xf32>,
    return
  }
  func.func @transform_0(%arg0: i32) -> (i32, i32, i32, i32) {
    %c0_i32 = arith.constant 0 : i32
    %c0_i32_0 = arith.constant 0 : i32
    %c0_i32_1 = arith.constant 0 : i32
    %c0_i32_2 = arith.constant 0 : i32
    return %arg0, %c0_i32, %c0_i32_0, %c0_i32_1 : i32, i32, i32, i32
  }
  func.func @transform_1(%arg0: i32) -> (i32, i32) {
    %c0_i32 = arith.constant 0 : i32
    %c0_i32_0 = arith.constant 0 : i32
    %c0_i32_1 = arith.constant 0 : i32
    return %c0_i32, %c0_i32_0 : i32, i32
  }
  func.func @transform_2(%arg0: i32) -> (i32, i32) {
    %c0_i32 = arith.constant 0 : i32
    %c0_i32_0 = arith.constant 0 : i32
    %c0_i32_1 = arith.constant 0 : i32
    return %c0_i32, %c0_i32_0 : i32, i32
  }
  func.func @transform_3(%arg0: i32) -> (i32, i32) {
    %c0_i32 = arith.constant 0 : i32
    %c0_i32_0 = arith.constant 0 : i32
    %c0_i32_1 = arith.constant 0 : i32
    return %c0_i32, %c0_i32_0 : i32, i32
  }
  func.func @transform_4(%arg0: i32) -> (i32, i32) {
    %c0_i32 = arith.constant 0 : i32
    %c0_i32_0 = arith.constant 0 : i32
    %c0_i32_1 = arith.constant 0 : i32
    return %c0_i32, %c0_i32_0 : i32, i32
  }
  func.func @transform_5(%arg0: i32) -> (i32, i32) {
    %c0_i32 = arith.constant 0 : i32
    %c0_i32_0 = arith.constant 0 : i32
    %c0_i32_1 = arith.constant 0 : i32
    return %c0_i32, %c0_i32_0 : i32, i32
  }
  func.func @transform_6(%arg0: i32) -> (i32, i32) {
    %c0_i32 = arith.constant 0 : i32
    %c0_i32_0 = arith.constant 0 : i32
    %c0_i32_1 = arith.constant 0 : i32
    return %c0_i32, %c0_i32_0 : i32, i32
  }
  func.func @transform_7(%arg0: i32) -> (i32, i32) {
    %c0_i32 = arith.constant 0 : i32
    %c0_i32_0 = arith.constant 0 : i32
    %c0_i32_1 = arith.constant 0 : i32
    return %c0_i32, %c0_i32_0 : i32, i32
  }
  func.func @transform_8(%arg0: i32) -> (i32, i32) {
    %c0_i32 = arith.constant 0 : i32
    %c0_i32_0 = arith.constant 0 : i32
    %c0_i32_1 = arith.constant 0 : i32
    return %c0_i32, %c0_i32_0 : i32, i32
  }
  func.func @transform_9(%arg0: i32) -> (i32, i32) {
    %c0_i32 = arith.constant 0 : i32
    %c0_i32_0 = arith.constant 0 : i32
    %c0_i32_1 = arith.constant 0 : i32
    return %c0_i32, %c0_i32_0 : i32, i32
  }
  func.func @transform_10(%arg0: i32) -> (i32, i32) {
    %c0_i32 = arith.constant 0 : i32
    %c0_i32_0 = arith.constant 0 : i32
    %c0_i32_1 = arith.constant 0 : i32
    return %c0_i32, %c0_i32_0 : i32, i32
  }
  func.func @transform_11(%arg0: i32) -> (i32, i32) {
    %c0_i32 = arith.constant 0 : i32
    %c0_i32_0 = arith.constant 0 : i32
    %c0_i32_1 = arith.constant 0 : i32
    return %c0_i32, %c0_i32_0 : i32, i32
  }
  func.func @transform_12(%arg0: i32) -> (i32, i32) {
    %c0_i32 = arith.constant 0 : i32
    %c0_i32_0 = arith.constant 0 : i32
    %c0_i32_1 = arith.constant 0 : i32
    return %c0_i32, %c0_i32_0 : i32, i32
  }
  func.func @transform_13(%arg0: i32) -> (i32, i32, i32, i32) {
    %c0_i32 = arith.constant 0 : i32
    %c0_i32_0 = arith.constant 0 : i32
    %c0_i32_1 = arith.constant 0 : i32
    %c0_i32_2 = arith.constant 0 : i32
    return %arg0, %c0_i32, %c0_i32_0, %c0_i32_1 : i32, i32, i32, i32
  }
}

</mosaic_0001>

<llo_original>
// kernel: bottleneck_forward.1
$region0: #{bottleneck_forward.1}
  #allocation0 [shape = 'u32[]', space=smem, size = 0x4, offset = 0x4, fixed_abs, tag = 'smem constant byte address 0x4 - core index']
  #allocation1 [shape = 'u32[72,128]{1,0:T(1,128)}', space=vmem, size = 0x9000, scoped, tag = 'internal scratch']
  %s0 = inlined_call_operand.vmem [shape: bf16[2,16,16,128], index: 0, kind: input, shape index: {}]
  %s1 = inlined_call_operand.vmem [shape: bf16[128,128], index: 1, kind: input, shape index: {}]
  %s2 = inlined_call_operand.vmem [shape: f32[1,128], index: 2, kind: input, shape index: {}]
  %s3 = inlined_call_operand.vmem [shape: f32[1,128], index: 3, kind: input, shape index: {}]
  %s4 = inlined_call_operand.vmem [shape: bf16[1152,128], index: 4, kind: input, shape index: {}]
  %s5 = inlined_call_operand.vmem [shape: f32[1,128], index: 5, kind: input, shape index: {}]
  %s6 = inlined_call_operand.vmem [shape: f32[1,128], index: 6, kind: input, shape index: {}]
  %s7 = inlined_call_operand.vmem [shape: bf16[128,128], index: 7, kind: input, shape index: {}]
  %s8 = inlined_call_operand.vmem [shape: f32[1,128], index: 8, kind: input, shape index: {}]
  %s9 = inlined_call_operand.vmem [shape: f32[1,128], index: 9, kind: input, shape index: {}]
  %s10 = inlined_call_operand.vmem [shape: bf16[128,128], index: 10, kind: input, shape index: {}]
  %s11 = inlined_call_operand.vmem [shape: f32[1,128], index: 11, kind: input, shape index: {}]
  %s12 = inlined_call_operand.vmem [shape: f32[1,128], index: 12, kind: input, shape index: {}]
  %s13 = inlined_call_operand.vmem [shape: f32[2,16,16,128], index: 13, kind: output, shape index: {}]
  %s14 = sld [smem:[#allocation0]]
  $region85: #{bottleneck_forward.1} parent=0
    _
  %s16 = ssub.s32 1, %s14
  %s17 = scalar_select 0, %s16, %s14
  loop: start=0, step=1, limit=4
  $region2: #{bottleneck_forward.1} parent=0 // loop_pre_header
    _
  $region3: #{bottleneck_forward.1} parent=0 // loop_header
    %s19 = sphi 0, %s23
    %p20 = scmp.ge.s32.totalorder %s19, 4
    %s29 = sphi 0, %s31
    %s32 = sphi 0, %s29
    %s33 = sphi 0, %s32
    %s49 = sphi 0, %s33
    %s53 = sphi 0, %s53
    %s55 = sphi 0, %s53
    %s56 = sphi 0, %s55
    %s70 = sphi 0, %s56
    %s74 = sphi 0, %s74
    %s76 = sphi 0, %s74
    %s77 = sphi 0, %s76
    %s91 = sphi 0, %s77
    %s95 = sphi 0, %s95
    %s97 = sphi 0, %s95
    %s98 = sphi 0, %s97
    %s112 = sphi 0, %s98
    %s116 = sphi 0, %s116
    %s118 = sphi 0, %s116
    %s119 = sphi 0, %s118
    %s133 = sphi 0, %s119
    %s137 = sphi 0, %s137
    %s139 = sphi 0, %s137
    %s140 = sphi 0, %s139
    %s154 = sphi 0, %s140
    %s158 = sphi 0, %s158
    %s160 = sphi 0, %s158
    %s161 = sphi 0, %s160
    %s175 = sphi 0, %s161
    %s179 = sphi 0, %s179
    %s181 = sphi 0, %s179
    %s182 = sphi 0, %s181
    %s196 = sphi 0, %s182
    %s200 = sphi 0, %s200
    %s202 = sphi 0, %s200
    %s203 = sphi 0, %s202
    %s217 = sphi 0, %s203
    %s221 = sphi 0, %s221
    %s223 = sphi 0, %s221
    %s224 = sphi 0, %s223
    %s238 = sphi 0, %s224
    %s242 = sphi 0, %s242
    %s244 = sphi 0, %s242
    %s245 = sphi 0, %s244
    %s259 = sphi 0, %s245
    %s263 = sphi 0, %s263
    %s265 = sphi 0, %s263
    %s266 = sphi 0, %s265
    %s280 = sphi 0, %s266
    %s284 = sphi 0, %s284
    %s286 = sphi 0, %s284
    %s287 = sphi 0, %s286
    %s301 = sphi 0, %s287
    %s307 = sphi 0, %s309
    %s310 = sphi 0, %s307
    %s311 = sphi 0, %s310
    %s327 = sphi 0, %s311
  $region4: #{bottleneck_forward.1} parent=0 // loop_header_branch
    %22 = sbr.rel (%p20) target = $region8
  $region5: #{bottleneck_forward.1} parent=0 // loop_body
    %s24 = ssub.s32 %s19, 1
    %s25 = ssub.s32 %s19, 2
    %s26 = sadd.s32 %s19, 1
    %s27 = ssub.s32 %s19, %s26
    %p28 = scmp.eq.s32.totalorder %s27, 0
    %s30 = sadd.s32 %s29, 1
    %s31 = scalar_select %p28, %s29, %s30
    %p34 = pneg %p28
    %p35 = scmp.eq.s32.totalorder %s19, 1
    %p36 = por %p34, %p35
    %p37 = scmp.ne.s32.totalorder %s29, %s32
    %p38 = scmp.eq.s32.totalorder %s19, 0
    %p39 = por %p37, %p38
    %p40 = scmp.ne.s32.totalorder %s29, %s32
    %p41 = scmp.eq.s32.totalorder %s24, 1
    %p42 = por %p40, %p41
    %p43 = scmp.ne.s32.totalorder %s32, %s33
    %p44 = scmp.eq.s32.totalorder %s24, 0
    %p45 = por %p43, %p44
    %p46 = scmp.ne.s32.totalorder %s32, %s33
    %p47 = scmp.eq.s32.totalorder %s25, 1
    %p48 = por %p46, %p47
    %p50 = scmp.ne.s32.totalorder %s33, %s49
    %p51 = scmp.eq.s32.totalorder %s25, 0
    %p52 = por %p50, %p51
    %s54 = sadd.s32 %s53, 1
    %p57 = scmp.eq.s32.totalorder %s19, 1
    %p58 = scmp.ne.s32.totalorder %s53, %s55
    %p59 = scmp.eq.s32.totalorder %s19, 0
    %p60 = por %p58, %p59
    %p61 = scmp.ne.s32.totalorder %s53, %s55
    %p62 = scmp.eq.s32.totalorder %s24, 1
    %p63 = por %p61, %p62
    %p64 = scmp.ne.s32.totalorder %s55, %s56
    %p65 = scmp.eq.s32.totalorder %s24, 0
    %p66 = por %p64, %p65
    %p67 = scmp.ne.s32.totalorder %s55, %s56
    %p68 = scmp.eq.s32.totalorder %s25, 1
    %p69 = por %p67, %p68
    %p71 = scmp.ne.s32.totalorder %s56, %s70
    %p72 = scmp.eq.s32.totalorder %s25, 0
    %p73 = por %p71, %p72
    %s75 = sadd.s32 %s74, 1
    %p78 = scmp.eq.s32.totalorder %s19, 1
    %p79 = scmp.ne.s32.totalorder %s74, %s76
    %p80 = scmp.eq.s32.totalorder %s19, 0
    %p81 = por %p79, %p80
    %p82 = scmp.ne.s32.totalorder %s74, %s76
    %p83 = scmp.eq.s32.totalorder %s24, 1
    %p84 = por %p82, %p83
    %p85 = scmp.ne.s32.totalorder %s76, %s77
    %p86 = scmp.eq.s32.totalorder %s24, 0
    %p87 = por %p85, %p86
    %p88 = scmp.ne.s32.totalorder %s76, %s77
    %p89 = scmp.eq.s32.totalorder %s25, 1
    %p90 = por %p88, %p89
    %p92 = scmp.ne.s32.totalorder %s77, %s91
    %p93 = scmp.eq.s32.totalorder %s25, 0
    %p94 = por %p92, %p93
    %s96 = sadd.s32 %s95, 1
    %p99 = scmp.eq.s32.totalorder %s19, 1
    %p100 = scmp.ne.s32.totalorder %s95, %s97
    %p101 = scmp.eq.s32.totalorder %s19, 0
    %p102 = por %p100, %p101
    %p103 = scmp.ne.s32.totalorder %s95, %s97
    %p104 = scmp.eq.s32.totalorder %s24, 1
    %p105 = por %p103, %p104
    %p106 = scmp.ne.s32.totalorder %s97, %s98
    %p107 = scmp.eq.s32.totalorder %s24, 0
    %p108 = por %p106, %p107
    %p109 = scmp.ne.s32.totalorder %s97, %s98
    %p110 = scmp.eq.s32.totalorder %s25, 1
    %p111 = por %p109, %p110
    %p113 = scmp.ne.s32.totalorder %s98, %s112
    %p114 = scmp.eq.s32.totalorder %s25, 0
    %p115 = por %p113, %p114
    %s117 = sadd.s32 %s116, 1
    %p120 = scmp.eq.s32.totalorder %s19, 1
    %p121 = scmp.ne.s32.totalorder %s116, %s118
    %p122 = scmp.eq.s32.totalorder %s19, 0
    %p123 = por %p121, %p122
    %p124 = scmp.ne.s32.totalorder %s116, %s118
    %p125 = scmp.eq.s32.totalorder %s24, 1
    %p126 = por %p124, %p125
    %p127 = scmp.ne.s32.totalorder %s118, %s119
    %p128 = scmp.eq.s32.totalorder %s24, 0
    %p129 = por %p127, %p128
    %p130 = scmp.ne.s32.totalorder %s118, %s119
    %p131 = scmp.eq.s32.totalorder %s25, 1
    %p132 = por %p130, %p131
    %p134 = scmp.ne.s32.totalorder %s119, %s133
    %p135 = scmp.eq.s32.totalorder %s25, 0
    %p136 = por %p134, %p135
    %s138 = sadd.s32 %s137, 1
    %p141 = scmp.eq.s32.totalorder %s19, 1
    %p142 = scmp.ne.s32.totalorder %s137, %s139
    %p143 = scmp.eq.s32.totalorder %s19, 0
    %p144 = por %p142, %p143
    %p145 = scmp.ne.s32.totalorder %s137, %s139
    %p146 = scmp.eq.s32.totalorder %s24, 1
    %p147 = por %p145, %p146
    %p148 = scmp.ne.s32.totalorder %s139, %s140
    %p149 = scmp.eq.s32.totalorder %s24, 0
    %p150 = por %p148, %p149
    %p151 = scmp.ne.s32.totalorder %s139, %s140
    %p152 = scmp.eq.s32.totalorder %s25, 1
    %p153 = por %p151, %p152
    %p155 = scmp.ne.s32.totalorder %s140, %s154
    %p156 = scmp.eq.s32.totalorder %s25, 0
    %p157 = por %p155, %p156
    %s159 = sadd.s32 %s158, 1
    %p162 = scmp.eq.s32.totalorder %s19, 1
    %p163 = scmp.ne.s32.totalorder %s158, %s160
    %p164 = scmp.eq.s32.totalorder %s19, 0
    %p165 = por %p163, %p164
    %p166 = scmp.ne.s32.totalorder %s158, %s160
    %p167 = scmp.eq.s32.totalorder %s24, 1
    %p168 = por %p166, %p167
    %p169 = scmp.ne.s32.totalorder %s160, %s161
    %p170 = scmp.eq.s32.totalorder %s24, 0
    %p171 = por %p169, %p170
    %p172 = scmp.ne.s32.totalorder %s160, %s161
    %p173 = scmp.eq.s32.totalorder %s25, 1
    %p174 = por %p172, %p173
    %p176 = scmp.ne.s32.totalorder %s161, %s175
    %p177 = scmp.eq.s32.totalorder %s25, 0
    %p178 = por %p176, %p177
    %s180 = sadd.s32 %s179, 1
    %p183 = scmp.eq.s32.totalorder %s19, 1
    %p184 = scmp.ne.s32.totalorder %s179, %s181
    %p185 = scmp.eq.s32.totalorder %s19, 0
    %p186 = por %p184, %p185
    %p187 = scmp.ne.s32.totalorder %s179, %s181
    %p188 = scmp.eq.s32.totalorder %s24, 1
    %p189 = por %p187, %p188
    %p190 = scmp.ne.s32.totalorder %s181, %s182
    %p191 = scmp.eq.s32.totalorder %s24, 0
    %p192 = por %p190, %p191
    %p193 = scmp.ne.s32.totalorder %s181, %s182
    %p194 = scmp.eq.s32.totalorder %s25, 1
    %p195 = por %p193, %p194
    %p197 = scmp.ne.s32.totalorder %s182, %s196
    %p198 = scmp.eq.s32.totalorder %s25, 0
    %p199 = por %p197, %p198
    %s201 = sadd.s32 %s200, 1
    %p204 = scmp.eq.s32.totalorder %s19, 1
    %p205 = scmp.ne.s32.totalorder %s200, %s202
    %p206 = scmp.eq.s32.totalorder %s19, 0
    %p207 = por %p205, %p206
    %p208 = scmp.ne.s32.totalorder %s200, %s202
    %p209 = scmp.eq.s32.totalorder %s24, 1
    %p210 = por %p208, %p209
    %p211 = scmp.ne.s32.totalorder %s202, %s203
    %p212 = scmp.eq.s32.totalorder %s24, 0
    %p213 = por %p211, %p212
    %p214 = scmp.ne.s32.totalorder %s202, %s203
    %p215 = scmp.eq.s32.totalorder %s25, 1
    %p216 = por %p214, %p215
    %p218 = scmp.ne.s32.totalorder %s203, %s217
    %p219 = scmp.eq.s32.totalorder %s25, 0
    %p220 = por %p218, %p219
    %s222 = sadd.s32 %s221, 1
    %p225 = scmp.eq.s32.totalorder %s19, 1
    %p226 = scmp.ne.s32.totalorder %s221, %s223
    %p227 = scmp.eq.s32.totalorder %s19, 0
    %p228 = por %p226, %p227
    %p229 = scmp.ne.s32.totalorder %s221, %s223
    %p230 = scmp.eq.s32.totalorder %s24, 1
    %p231 = por %p229, %p230
    %p232 = scmp.ne.s32.totalorder %s223, %s224
    %p233 = scmp.eq.s32.totalorder %s24, 0
    %p234 = por %p232, %p233
    %p235 = scmp.ne.s32.totalorder %s223, %s224
    %p236 = scmp.eq.s32.totalorder %s25, 1
    %p237 = por %p235, %p236
    %p239 = scmp.ne.s32.totalorder %s224, %s238
    %p240 = scmp.eq.s32.totalorder %s25, 0
    %p241 = por %p239, %p240
    %s243 = sadd.s32 %s242, 1
    %p246 = scmp.eq.s32.totalorder %s19, 1
    %p247 = scmp.ne.s32.totalorder %s242, %s244
    %p248 = scmp.eq.s32.totalorder %s19, 0
    %p249 = por %p247, %p248
    %p250 = scmp.ne.s32.totalorder %s242, %s244
    %p251 = scmp.eq.s32.totalorder %s24, 1
    %p252 = por %p250, %p251
    %p253 = scmp.ne.s32.totalorder %s244, %s245
    %p254 = scmp.eq.s32.totalorder %s24, 0
    %p255 = por %p253, %p254
    %p256 = scmp.ne.s32.totalorder %s244, %s245
    %p257 = scmp.eq.s32.totalorder %s25, 1
    %p258 = por %p256, %p257
    %p260 = scmp.ne.s32.totalorder %s245, %s259
    %p261 = scmp.eq.s32.totalorder %s25, 0
    %p262 = por %p260, %p261
    %s264 = sadd.s32 %s263, 1
    %p267 = scmp.eq.s32.totalorder %s19, 1
    %p268 = scmp.ne.s32.totalorder %s263, %s265
    %p269 = scmp.eq.s32.totalorder %s19, 0
    %p270 = por %p268, %p269
    %p271 = scmp.ne.s32.totalorder %s263, %s265
    %p272 = scmp.eq.s32.totalorder %s24, 1
    %p273 = por %p271, %p272
    %p274 = scmp.ne.s32.totalorder %s265, %s266
    %p275 = scmp.eq.s32.totalorder %s24, 0
    %p276 = por %p274, %p275
    %p277 = scmp.ne.s32.totalorder %s265, %s266
    %p278 = scmp.eq.s32.totalorder %s25, 1
    %p279 = por %p277, %p278
    %p281 = scmp.ne.s32.totalorder %s266, %s280
    %p282 = scmp.eq.s32.totalorder %s25, 0
    %p283 = por %p281, %p282
    %s285 = sadd.s32 %s284, 1
    %p288 = scmp.eq.s32.totalorder %s19, 1
    %p289 = scmp.ne.s32.totalorder %s284, %s286
    %p290 = scmp.eq.s32.totalorder %s19, 0
    %p291 = por %p289, %p290
    %p292 = scmp.ne.s32.totalorder %s284, %s286
    %p293 = scmp.eq.s32.totalorder %s24, 1
    %p294 = por %p292, %p293
    %p295 = scmp.ne.s32.totalorder %s286, %s287
    %p296 = scmp.eq.s32.totalorder %s24, 0
    %p297 = por %p295, %p296
    %p298 = scmp.ne.s32.totalorder %s286, %s287
    %p299 = scmp.eq.s32.totalorder %s25, 1
    %p300 = por %p298, %p299
    %p302 = scmp.ne.s32.totalorder %s287, %s301
    %p303 = scmp.eq.s32.totalorder %s25, 0
    %p304 = por %p302, %p303
    %s305 = ssub.s32 %s19, %s26
    %p306 = scmp.eq.s32.totalorder %s305, 0
    %s308 = sadd.s32 %s307, 1
    %s309 = scalar_select %p306, %s307, %s308
    %p312 = pneg %p306
    %p313 = scmp.eq.s32.totalorder %s19, 1
    %p314 = por %p312, %p313
    %p315 = scmp.ne.s32.totalorder %s307, %s310
    %p316 = scmp.eq.s32.totalorder %s19, 0
    %p317 = por %p315, %p316
    %p318 = scmp.ne.s32.totalorder %s307, %s310
    %p319 = scmp.eq.s32.totalorder %s24, 1
    %p320 = por %p318, %p319
    %p321 = scmp.ne.s32.totalorder %s310, %s311
    %p322 = scmp.eq.s32.totalorder %s24, 0
    %p323 = por %p321, %p322
    %p324 = scmp.ne.s32.totalorder %s310, %s311
    %p325 = scmp.eq.s32.totalorder %s25, 1
    %p326 = por %p324, %p325
    %p328 = scmp.ne.s32.totalorder %s311, %s327
    %p329 = scmp.eq.s32.totalorder %s25, 0
    %p330 = por %p328, %p329
    %p331 = scmp.le.s32.totalorder 1, %s19
    %p332 = scmp.lt.s32.totalorder %s19, 3
    %p333 = pnand %p331, %p332
    %p334 = pneg %p333
    // Predicated region
    $region9: #{bottleneck_forward.1} parent=5 // pred_check
      _
    $region10: #{bottleneck_forward.1} parent=5 // pred_check_branch
      %336 = sbr.rel (%p333) target = $region12
    $region11: #{bottleneck_forward.1} parent=5 // pred_region
      %s337 = ssub.s32 %s19, 1
      // Predicated region
      $region13: #{bottleneck_forward.1} parent=11 // pred_check
        %p338 = pneg %p66
      $region14: #{bottleneck_forward.1} parent=11 // pred_check_branch
        %340 = sbr.rel (%p338) target = $region16
      $region15: #{bottleneck_forward.1} parent=11 // pred_region
        _
      $region16: #{bottleneck_forward.1} parent=11 // pred_fallthru
        _
      // Predicated region
      $region17: #{bottleneck_forward.1} parent=11 // pred_check
        %p341 = pneg %p87
      $region18: #{bottleneck_forward.1} parent=11 // pred_check_branch
        %343 = sbr.rel (%p341) target = $region20
      $region19: #{bottleneck_forward.1} parent=11 // pred_region
        _
      $region20: #{bottleneck_forward.1} parent=11 // pred_fallthru
        _
      // Predicated region
      $region21: #{bottleneck_forward.1} parent=11 // pred_check
        %p344 = pneg %p108
      $region22: #{bottleneck_forward.1} parent=11 // pred_check_branch
        %346 = sbr.rel (%p344) target = $region24
      $region23: #{bottleneck_forward.1} parent=11 // pred_region
        _
      $region24: #{bottleneck_forward.1} parent=11 // pred_fallthru
        _
      // Predicated region
      $region25: #{bottleneck_forward.1} parent=11 // pred_check
        %p347 = pneg %p129
      $region26: #{bottleneck_forward.1} parent=11 // pred_check_branch
        %349 = sbr.rel (%p347) target = $region28
      $region27: #{bottleneck_forward.1} parent=11 // pred_region
        _
      $region28: #{bottleneck_forward.1} parent=11 // pred_fallthru
        _
      // Predicated region
      $region29: #{bottleneck_forward.1} parent=11 // pred_check
        %p350 = pneg %p150
      $region30: #{bottleneck_forward.1} parent=11 // pred_check_branch
        %352 = sbr.rel (%p350) target = $region32
      $region31: #{bottleneck_forward.1} parent=11 // pred_region
        _
      $region32: #{bottleneck_forward.1} parent=11 // pred_fallthru
        _
      // Predicated region
      $region33: #{bottleneck_forward.1} parent=11 // pred_check
        %p353 = pneg %p171
      $region34: #{bottleneck_forward.1} parent=11 // pred_check_branch
        %355 = sbr.rel (%p353) target = $region36
      $region35: #{bottleneck_forward.1} parent=11 // pred_region
        _
      $region36: #{bottleneck_forward.1} parent=11 // pred_fallthru
        _
      // Predicated region
      $region37: #{bottleneck_forward.1} parent=11 // pred_check
        %p356 = pneg %p192
      $region38: #{bottleneck_forward.1} parent=11 // pred_check_branch
        %358 = sbr.rel (%p356) target = $region40
      $region39: #{bottleneck_forward.1} parent=11 // pred_region
        _
      $region40: #{bottleneck_forward.1} parent=11 // pred_fallthru
        _
      // Predicated region
      $region41: #{bottleneck_forward.1} parent=11 // pred_check
        %p359 = pneg %p213
      $region42: #{bottleneck_forward.1} parent=11 // pred_check_branch
        %361 = sbr.rel (%p359) target = $region44
      $region43: #{bottleneck_forward.1} parent=11 // pred_region
        _
      $region44: #{bottleneck_forward.1} parent=11 // pred_fallthru
        _
      // Predicated region
      $region45: #{bottleneck_forward.1} parent=11 // pred_check
        %p362 = pneg %p234
      $region46: #{bottleneck_forward.1} parent=11 // pred_check_branch
        %364 = sbr.rel (%p362) target = $region48
      $region47: #{bottleneck_forward.1} parent=11 // pred_region
        _
      $region48: #{bottleneck_forward.1} parent=11 // pred_fallthru
        _
      // Predicated region
      $region49: #{bottleneck_forward.1} parent=11 // pred_check
        %p365 = pneg %p255
      $region50: #{bottleneck_forward.1} parent=11 // pred_check_branch
        %367 = sbr.rel (%p365) target = $region52
      $region51: #{bottleneck_forward.1} parent=11 // pred_region
        _
      $region52: #{bottleneck_forward.1} parent=11 // pred_fallthru
        _
      // Predicated region
      $region53: #{bottleneck_forward.1} parent=11 // pred_check
        %p368 = pneg %p276
      $region54: #{bottleneck_forward.1} parent=11 // pred_check_branch
        %370 = sbr.rel (%p368) target = $region56
      $region55: #{bottleneck_forward.1} parent=11 // pred_region
        _
      $region56: #{bottleneck_forward.1} parent=11 // pred_fallthru
        _
      // Predicated region
      $region57: #{bottleneck_forward.1} parent=11 // pred_check
        %p371 = pneg %p297
      $region58: #{bottleneck_forward.1} parent=11 // pred_check_branch
        %373 = sbr.rel (%p371) target = $region60
      $region59: #{bottleneck_forward.1} parent=11 // pred_region
        _
      $region60: #{bottleneck_forward.1} parent=11 // pred_fallthru
        _
    $region12: #{bottleneck_forward.1} parent=5 // pred_fallthru
      _
    %p374 = scmp.lt.s32.totalorder %s19, 2
    // Predicated region
    $region61: #{bottleneck_forward.1} parent=5 // pred_check
      %p375 = pneg %p374
    $region62: #{bottleneck_forward.1} parent=5 // pred_check_branch
      %377 = sbr.rel (%p375) target = $region64
    $region63: #{bottleneck_forward.1} parent=5 // pred_region
      // Predicated region
      $region65: #{bottleneck_forward.1} parent=63 // pred_check
        %p378 = pneg %p39
      $region66: #{bottleneck_forward.1} parent=63 // pred_check_branch
        %380 = sbr.rel (%p378) target = $region68
      $region67: #{bottleneck_forward.1} parent=63 // pred_region
        %p381 = scmp.lt.s32.totalorder %s19, 1
        %s382 = scalar_select %p381, %s19, 1
        %s383 = smul.addr %s382, 32
        %s384 = smul.addr %s383, 4
        %s385 = scalar_lea.vmem %s0, %s384
      $region68: #{bottleneck_forward.1} parent=63 // pred_fallthru
        _
    $region64: #{bottleneck_forward.1} parent=5 // pred_fallthru
      _
    %p386 = scmp.le.s32.totalorder 1, %s19
    %p387 = scmp.lt.s32.totalorder %s19, 3
    %p388 = pnand %p386, %p387
    %p389 = pneg %p388
    // Predicated region
    $region69: #{bottleneck_forward.1} parent=5 // pred_check
      _
    $region70: #{bottleneck_forward.1} parent=5 // pred_check_branch
      %391 = sbr.rel (%p388) target = $region72
    $region71: #{bottleneck_forward.1} parent=5 // pred_region
      %s392 = ssub.s32 %s19, 1
      %p393 = scmp.lt.s32.totalorder %s24, 1
      %s394 = scalar_select %p393, %s24, 1
      %s395 = smul.addr %s394, 32
      %s396 = smul.addr %s395, 4
      %s397 = scalar_lea.vmem %s0, %s396
      %p398 = pneg %p45
      %p399 = pneg %p42
      %p400 = pneg %p66
      %p401 = pneg %p63
      %p402 = pneg %p87
      %p403 = pneg %p84
      %p404 = pneg %p108
      %p405 = pneg %p105
      %p406 = pneg %p129
      %p407 = pneg %p126
      %p408 = pneg %p150
      %p409 = pneg %p147
      %p410 = pneg %p171
      %p411 = pneg %p168
      %p412 = pneg %p192
      %p413 = pneg %p189
      %p414 = pneg %p213
      %p415 = pneg %p210
      %p416 = pneg %p234
      %p417 = pneg %p231
      %p418 = pneg %p255
      %p419 = pneg %p252
      %p420 = pneg %p276
      %p421 = pneg %p273
      %p422 = pneg %p297
      %p423 = pneg %p294
      %p424 = pneg %p323
      %p425 = pneg %p320
      %p426 = scmp.lt.s32.totalorder %s24, 1
      %s427 = scalar_select %p426, %s24, 1
      %s428 = smul.addr %s427, 32
      %s429 = smul.addr %s428, 8
      %s430 = scalar_lea.vmem %s13, %s429
      %p431 = scmp.lt.s32.totalorder %s24, 1
      %s432 = scalar_select %p431, %s24, 1
      %s433 = smul.addr %s432, 32
      %s434 = smul.addr %s433, 4
      %s435 = scalar_lea.vmem %s0, %s434
      %p436 = scmp.lt.s32.totalorder %s24, 1
      %s437 = scalar_select %p436, %s24, 1
      %s438 = smul.addr %s437, 32
      %s439 = smul.addr %s438, 8
      %s440 = scalar_lea.vmem %s13, %s439
      %v442 = vld [vmem:[%s435] sm:$0xf]
      %v443 = vld [vmem:[%s435 + $0x4] sm:$0xf]
      %v444 = vld [vmem:[%s435 + $0x8] sm:$0xf]
      %v445 = vld [vmem:[%s435 + $0xc] sm:$0xf]
      %v446 = vld [vmem:[%s435 + $0x10] sm:$0xf]
      %v447 = vld [vmem:[%s435 + $0x14] sm:$0xf]
      %v448 = vld [vmem:[%s435 + $0x18] sm:$0xf]
      %v449 = vld [vmem:[%s435 + $0x1c] sm:$0xf]
      %v450 = vld [vmem:[%s435 + $0x20] sm:$0xf]
      %v451 = vld [vmem:[%s435 + $0x24] sm:$0xf]
      %v452 = vld [vmem:[%s435 + $0x28] sm:$0xf]
      %v453 = vld [vmem:[%s435 + $0x2c] sm:$0xf]
      %v454 = vld [vmem:[%s435 + $0x30] sm:$0xf]
      %v455 = vld [vmem:[%s435 + $0x34] sm:$0xf]
      %v456 = vld [vmem:[%s435 + $0x38] sm:$0xf]
      %v457 = vld [vmem:[%s435 + $0x3c] sm:$0xf]
      %v458 = vld [vmem:[%s435 + $0x40] sm:$0xf]
      %v459 = vld [vmem:[%s435 + $0x44] sm:$0xf]
      %v460 = vld [vmem:[%s435 + $0x48] sm:$0xf]
      %v461 = vld [vmem:[%s435 + $0x4c] sm:$0xf]
      %v462 = vld [vmem:[%s435 + $0x50] sm:$0xf]
      %v463 = vld [vmem:[%s435 + $0x54] sm:$0xf]
      %v464 = vld [vmem:[%s435 + $0x58] sm:$0xf]
      %v465 = vld [vmem:[%s435 + $0x5c] sm:$0xf]
      %v466 = vld [vmem:[%s435 + $0x60] sm:$0xf]
      %v467 = vld [vmem:[%s435 + $0x64] sm:$0xf]
      %v468 = vld [vmem:[%s435 + $0x68] sm:$0xf]
      %v469 = vld [vmem:[%s435 + $0x6c] sm:$0xf]
      %v470 = vld [vmem:[%s435 + $0x70] sm:$0xf]
      %v471 = vld [vmem:[%s435 + $0x74] sm:$0xf]
      %v472 = vld [vmem:[%s435 + $0x78] sm:$0xf]
      %v473 = vld [vmem:[%s435 + $0x7c] sm:$0xf]
      %v474 = vld [vmem:[%s1] sm:$0xf]
      %v475 = vld [vmem:[%s1 + $0x4] sm:$0xf]
      %v476 = vld [vmem:[%s1 + $0x8] sm:$0xf]
      %v477 = vld [vmem:[%s1 + $0xc] sm:$0xf]
      %v478 = vld [vmem:[%s1 + $0x10] sm:$0xf]
      %v479 = vld [vmem:[%s1 + $0x14] sm:$0xf]
      %v480 = vld [vmem:[%s1 + $0x18] sm:$0xf]
      %v481 = vld [vmem:[%s1 + $0x1c] sm:$0xf]
      %v482 = vld [vmem:[%s1 + $0x20] sm:$0xf]
      %v483 = vld [vmem:[%s1 + $0x24] sm:$0xf]
      %v484 = vld [vmem:[%s1 + $0x28] sm:$0xf]
      %v485 = vld [vmem:[%s1 + $0x2c] sm:$0xf]
      %v486 = vld [vmem:[%s1 + $0x30] sm:$0xf]
      %v487 = vld [vmem:[%s1 + $0x34] sm:$0xf]
      %v488 = vld [vmem:[%s1 + $0x38] sm:$0xf]
      %v489 = vld [vmem:[%s1 + $0x3c] sm:$0xf]
      %v522 = vunpack.c.l.b16 %v442
      %v523 = vunpack.c.l.b16 %v443
      %v524 = vunpack.c.l.b16 %v444
      %v525 = vunpack.c.l.b16 %v445
      %v526 = vunpack.c.l.b16 %v446
      %v527 = vunpack.c.l.b16 %v447
      %v528 = vunpack.c.l.b16 %v448
      %v529 = vunpack.c.l.b16 %v449
      %v530 = vunpack.c.l.b16 %v450
      %v531 = vunpack.c.l.b16 %v451
      %v532 = vunpack.c.l.b16 %v452
      %v533 = vunpack.c.l.b16 %v453
      %v534 = vunpack.c.l.b16 %v454
      %v535 = vunpack.c.l.b16 %v455
      %v536 = vunpack.c.l.b16 %v456
      %v537 = vunpack.c.l.b16 %v457
      %v538 = vunpack.c.l.b16 %v458
      %v539 = vunpack.c.l.b16 %v459
      %v540 = vunpack.c.l.b16 %v460
      %v541 = vunpack.c.l.b16 %v461
      %v542 = vunpack.c.l.b16 %v462
      %v543 = vunpack.c.l.b16 %v463
      %v544 = vunpack.c.l.b16 %v464
      %v545 = vunpack.c.l.b16 %v465
      %v546 = vunpack.c.l.b16 %v466
      %v547 = vunpack.c.l.b16 %v467
      %v548 = vunpack.c.l.b16 %v468
      %v549 = vunpack.c.l.b16 %v469
      %v550 = vunpack.c.l.b16 %v470
      %v551 = vunpack.c.l.b16 %v471
      %v552 = vunpack.c.l.b16 %v472
      %v553 = vunpack.c.l.b16 %v473
      %v554 = vpack.c.b16 %v523, %v522
      %v555 = vpack.c.b16 %v525, %v524
      %v556 = vpack.c.b16 %v527, %v526
      %v557 = vpack.c.b16 %v529, %v528
      %v558 = vpack.c.b16 %v531, %v530
      %v559 = vpack.c.b16 %v533, %v532
      %v560 = vpack.c.b16 %v535, %v534
      %v561 = vpack.c.b16 %v537, %v536
      %v562 = vpack.c.b16 %v539, %v538
      %v563 = vpack.c.b16 %v541, %v540
      %v564 = vpack.c.b16 %v543, %v542
      %v565 = vpack.c.b16 %v545, %v544
      %v566 = vpack.c.b16 %v547, %v546
      %v567 = vpack.c.b16 %v549, %v548
      %v568 = vpack.c.b16 %v551, %v550
      %v569 = vpack.c.b16 %v553, %v552
      %v602 = vunpack.c.l.b16 %v474
      %v603 = vunpack.c.l.b16 %v475
      %v604 = vunpack.c.l.b16 %v476
      %v605 = vunpack.c.l.b16 %v477
      %v606 = vunpack.c.l.b16 %v478
      %v607 = vunpack.c.l.b16 %v479
      %v608 = vunpack.c.l.b16 %v480
      %v609 = vunpack.c.l.b16 %v481
      %v610 = vunpack.c.l.b16 %v482
      %v611 = vunpack.c.l.b16 %v483
      %v612 = vunpack.c.l.b16 %v484
      %v613 = vunpack.c.l.b16 %v485
      %v614 = vunpack.c.l.b16 %v486
      %v615 = vunpack.c.l.b16 %v487
      %v616 = vunpack.c.l.b16 %v488
      %v617 = vunpack.c.l.b16 %v489
      %v618 = vpack.c.b16 %v603, %v602
      %v619 = vpack.c.b16 %v605, %v604
      %v620 = vpack.c.b16 %v607, %v606
      %v621 = vpack.c.b16 %v609, %v608
      %v622 = vpack.c.b16 %v611, %v610
      %v623 = vpack.c.b16 %v613, %v612
      %v624 = vpack.c.b16 %v615, %v614
      %v625 = vpack.c.b16 %v617, %v616
      %634 = vmatpush.bf16.msra.mxu0 %v625
      %635 = vmatpush.bf16.msra.mxu0 %v624
      %636 = vmatpush.bf16.msra.mxu0 %v623
      %637 = vmatpush.bf16.msra.mxu0 %v622
      %638 = vmatpush.bf16.msra.mxu0 %v621
      %639 = vmatpush.bf16.msra.mxu0 %v620
      %640 = vmatpush.bf16.msra.mxu0 %v619
      %641 = vmatpush.bf16.msra.mxu0 %v618
      %642 = vmatmul.bf16.gmra.mxu0 %v554
      %v643 = vpop.f32.mrf.mxu0
      %v644 = vadd.f32 0.0, %v643
      %v645 = vpop.f32.mrf.mxu0
      %v646 = vadd.f32 0.0, %v645
      %647 = vmatmul.bf16.gmra.mxu0 %v555
      %v648 = vpop.f32.mrf.mxu0
      %v649 = vadd.f32 0.0, %v648
      %v650 = vpop.f32.mrf.mxu0
      %v651 = vadd.f32 0.0, %v650
      %652 = vmatmul.bf16.gmra.mxu0 %v556
      %v653 = vpop.f32.mrf.mxu0
      %v654 = vadd.f32 0.0, %v653
      %v655 = vpop.f32.mrf.mxu0
      %v656 = vadd.f32 0.0, %v655
      %657 = vmatmul.bf16.gmra.mxu0 %v557
      %v658 = vpop.f32.mrf.mxu0
      %v659 = vadd.f32 0.0, %v658
      %v660 = vpop.f32.mrf.mxu0
      %v661 = vadd.f32 0.0, %v660
      %662 = vmatmul.bf16.gmra.mxu0 %v558
      %v663 = vpop.f32.mrf.mxu0
      %v664 = vadd.f32 0.0, %v663
      %v665 = vpop.f32.mrf.mxu0
      %v666 = vadd.f32 0.0, %v665
      %667 = vmatmul.bf16.gmra.mxu0 %v559
      %v668 = vpop.f32.mrf.mxu0
      %v669 = vadd.f32 0.0, %v668
      %v670 = vpop.f32.mrf.mxu0
      %v671 = vadd.f32 0.0, %v670
      %672 = vmatmul.bf16.gmra.mxu0 %v560
      %v673 = vpop.f32.mrf.mxu0
      %v674 = vadd.f32 0.0, %v673
      %v675 = vpop.f32.mrf.mxu0
      %v676 = vadd.f32 0.0, %v675
      %677 = vmatmul.bf16.gmra.mxu0 %v561
      %v678 = vpop.f32.mrf.mxu0
      %v679 = vadd.f32 0.0, %v678
      %v680 = vpop.f32.mrf.mxu0
      %v681 = vadd.f32 0.0, %v680
      %682 = vmatmul.bf16.gmra.mxu0 %v562
      %v683 = vpop.f32.mrf.mxu0
      %v684 = vadd.f32 0.0, %v683
      %v685 = vpop.f32.mrf.mxu0
      %v686 = vadd.f32 0.0, %v685
      %687 = vmatmul.bf16.gmra.mxu0 %v563
      %v688 = vpop.f32.mrf.mxu0
      %v689 = vadd.f32 0.0, %v688
      %v690 = vpop.f32.mrf.mxu0
      %v691 = vadd.f32 0.0, %v690
      %692 = vmatmul.bf16.gmra.mxu0 %v564
      %v693 = vpop.f32.mrf.mxu0
      %v694 = vadd.f32 0.0, %v693
      %v695 = vpop.f32.mrf.mxu0
      %v696 = vadd.f32 0.0, %v695
      %697 = vmatmul.bf16.gmra.mxu0 %v565
      %v698 = vpop.f32.mrf.mxu0
      %v699 = vadd.f32 0.0, %v698
      %v700 = vpop.f32.mrf.mxu0
      %v701 = vadd.f32 0.0, %v700
      %702 = vmatmul.bf16.gmra.mxu0 %v566
      %v703 = vpop.f32.mrf.mxu0
      %v704 = vadd.f32 0.0, %v703
      %v705 = vpop.f32.mrf.mxu0
      %v706 = vadd.f32 0.0, %v705
      %707 = vmatmul.bf16.gmra.mxu0 %v567
      %v708 = vpop.f32.mrf.mxu0
      %v709 = vadd.f32 0.0, %v708
      %v710 = vpop.f32.mrf.mxu0
      %v711 = vadd.f32 0.0, %v710
      %712 = vmatmul.bf16.gmra.mxu0 %v568
      %v713 = vpop.f32.mrf.mxu0
      %v714 = vadd.f32 0.0, %v713
      %v715 = vpop.f32.mrf.mxu0
      %v716 = vadd.f32 0.0, %v715
      %717 = vmatmul.bf16.gmra.mxu0 %v569
      %v718 = vpop.f32.mrf.mxu0
      %v719 = vadd.f32 0.0, %v718
      %v720 = vpop.f32.mrf.mxu0
      %v721 = vadd.f32 0.0, %v720
      %722 = vdwg.mxu0
      %v723 = vld [vmem:[%s2] sm:$0x1]
      %v725 = vperm.slane %v723, 0
      %v727 = vmul.f32 %v644, %v725
      %v728 = vmul.f32 %v646, %v725
      %v729 = vmul.f32 %v649, %v725
      %v730 = vmul.f32 %v651, %v725
      %v731 = vmul.f32 %v654, %v725
      %v732 = vmul.f32 %v656, %v725
      %v733 = vmul.f32 %v659, %v725
      %v734 = vmul.f32 %v661, %v725
      %v735 = vmul.f32 %v664, %v725
      %v736 = vmul.f32 %v666, %v725
      %v737 = vmul.f32 %v669, %v725
      %v738 = vmul.f32 %v671, %v725
      %v739 = vmul.f32 %v674, %v725
      %v740 = vmul.f32 %v676, %v725
      %v741 = vmul.f32 %v679, %v725
      %v742 = vmul.f32 %v681, %v725
      %v743 = vmul.f32 %v684, %v725
      %v744 = vmul.f32 %v686, %v725
      %v745 = vmul.f32 %v689, %v725
      %v746 = vmul.f32 %v691, %v725
      %v747 = vmul.f32 %v694, %v725
      %v748 = vmul.f32 %v696, %v725
      %v749 = vmul.f32 %v699, %v725
      %v750 = vmul.f32 %v701, %v725
      %v751 = vmul.f32 %v704, %v725
      %v752 = vmul.f32 %v706, %v725
      %v753 = vmul.f32 %v709, %v725
      %v754 = vmul.f32 %v711, %v725
      %v755 = vmul.f32 %v714, %v725
      %v756 = vmul.f32 %v716, %v725
      %v757 = vmul.f32 %v719, %v725
      %v758 = vmul.f32 %v721, %v725
      %v759 = vld [vmem:[%s3] sm:$0x1]
      %v761 = vperm.slane %v759, 0
      %v763 = vadd.f32 %v727, %v761
      %v764 = vadd.f32 %v728, %v761
      %v765 = vadd.f32 %v729, %v761
      %v766 = vadd.f32 %v730, %v761
      %v767 = vadd.f32 %v731, %v761
      %v768 = vadd.f32 %v732, %v761
      %v769 = vadd.f32 %v733, %v761
      %v770 = vadd.f32 %v734, %v761
      %v771 = vadd.f32 %v735, %v761
      %v772 = vadd.f32 %v736, %v761
      %v773 = vadd.f32 %v737, %v761
      %v774 = vadd.f32 %v738, %v761
      %v775 = vadd.f32 %v739, %v761
      %v776 = vadd.f32 %v740, %v761
      %v777 = vadd.f32 %v741, %v761
      %v778 = vadd.f32 %v742, %v761
      %v779 = vadd.f32 %v743, %v761
      %v780 = vadd.f32 %v744, %v761
      %v781 = vadd.f32 %v745, %v761
      %v782 = vadd.f32 %v746, %v761
      %v783 = vadd.f32 %v747, %v761
      %v784 = vadd.f32 %v748, %v761
      %v785 = vadd.f32 %v749, %v761
      %v786 = vadd.f32 %v750, %v761
      %v787 = vadd.f32 %v751, %v761
      %v788 = vadd.f32 %v752, %v761
      %v789 = vadd.f32 %v753, %v761
      %v790 = vadd.f32 %v754, %v761
      %v791 = vadd.f32 %v755, %v761
      %v792 = vadd.f32 %v756, %v761
      %v793 = vadd.f32 %v757, %v761
      %v794 = vadd.f32 %v758, %v761
      %v795 = vmax.f32 %v763, 0.0
      %v796 = vmax.f32 %v764, 0.0
      %v797 = vmax.f32 %v765, 0.0
      %v798 = vmax.f32 %v766, 0.0
      %v799 = vmax.f32 %v767, 0.0
      %v800 = vmax.f32 %v768, 0.0
      %v801 = vmax.f32 %v769, 0.0
      %v802 = vmax.f32 %v770, 0.0
      %v803 = vmax.f32 %v771, 0.0
      %v804 = vmax.f32 %v772, 0.0
      %v805 = vmax.f32 %v773, 0.0
      %v806 = vmax.f32 %v774, 0.0
      %v807 = vmax.f32 %v775, 0.0
      %v808 = vmax.f32 %v776, 0.0
      %v809 = vmax.f32 %v777, 0.0
      %v810 = vmax.f32 %v778, 0.0
      %v811 = vmax.f32 %v779, 0.0
      %v812 = vmax.f32 %v780, 0.0
      %v813 = vmax.f32 %v781, 0.0
      %v814 = vmax.f32 %v782, 0.0
      %v815 = vmax.f32 %v783, 0.0
      %v816 = vmax.f32 %v784, 0.0
      %v817 = vmax.f32 %v785, 0.0
      %v818 = vmax.f32 %v786, 0.0
      %v819 = vmax.f32 %v787, 0.0
      %v820 = vmax.f32 %v788, 0.0
      %v821 = vmax.f32 %v789, 0.0
      %v822 = vmax.f32 %v790, 0.0
      %v823 = vmax.f32 %v791, 0.0
      %v824 = vmax.f32 %v792, 0.0
      %v825 = vmax.f32 %v793, 0.0
      %v826 = vmax.f32 %v794, 0.0
      %v827 = vpack.c.bf16 %v795, %v795
      %v828 = vpack.c.bf16 %v796, %v796
      %v829 = vpack.c.bf16 %v797, %v797
      %v830 = vpack.c.bf16 %v798, %v798
      %v831 = vpack.c.bf16 %v799, %v799
      %v832 = vpack.c.bf16 %v800, %v800
      %v833 = vpack.c.bf16 %v801, %v801
      %v834 = vpack.c.bf16 %v802, %v802
      %v835 = vpack.c.bf16 %v803, %v803
      %v836 = vpack.c.bf16 %v804, %v804
      %v837 = vpack.c.bf16 %v805, %v805
      %v838 = vpack.c.bf16 %v806, %v806
      %v839 = vpack.c.bf16 %v807, %v807
      %v840 = vpack.c.bf16 %v808, %v808
      %v841 = vpack.c.bf16 %v809, %v809
      %v842 = vpack.c.bf16 %v810, %v810
      %v843 = vpack.c.bf16 %v811, %v811
      %v844 = vpack.c.bf16 %v812, %v812
      %v845 = vpack.c.bf16 %v813, %v813
      %v846 = vpack.c.bf16 %v814, %v814
      %v847 = vpack.c.bf16 %v815, %v815
      %v848 = vpack.c.bf16 %v816, %v816
      %v849 = vpack.c.bf16 %v817, %v817
      %v850 = vpack.c.bf16 %v818, %v818
      %v851 = vpack.c.bf16 %v819, %v819
      %v852 = vpack.c.bf16 %v820, %v820
      %v853 = vpack.c.bf16 %v821, %v821
      %v854 = vpack.c.bf16 %v822, %v822
      %v855 = vpack.c.bf16 %v823, %v823
      %v856 = vpack.c.bf16 %v824, %v824
      %v857 = vpack.c.bf16 %v825, %v825
      %v858 = vpack.c.bf16 %v826, %v826
      %v891 = vunpack.c.l.b16 %v827
      %v892 = vunpack.c.l.b16 %v828
      %v893 = vunpack.c.l.b16 %v829
      %v894 = vunpack.c.l.b16 %v830
      %v895 = vunpack.c.l.b16 %v831
      %v896 = vunpack.c.l.b16 %v832
      %v897 = vunpack.c.l.b16 %v833
      %v898 = vunpack.c.l.b16 %v834
      %v899 = vunpack.c.l.b16 %v835
      %v900 = vunpack.c.l.b16 %v836
      %v901 = vunpack.c.l.b16 %v837
      %v902 = vunpack.c.l.b16 %v838
      %v903 = vunpack.c.l.b16 %v839
      %v904 = vunpack.c.l.b16 %v840
      %v905 = vunpack.c.l.b16 %v841
      %v906 = vunpack.c.l.b16 %v842
      %v907 = vunpack.c.l.b16 %v843
      %v908 = vunpack.c.l.b16 %v844
      %v909 = vunpack.c.l.b16 %v845
      %v910 = vunpack.c.l.b16 %v846
      %v911 = vunpack.c.l.b16 %v847
      %v912 = vunpack.c.l.b16 %v848
      %v913 = vunpack.c.l.b16 %v849
      %v914 = vunpack.c.l.b16 %v850
      %v915 = vunpack.c.l.b16 %v851
      %v916 = vunpack.c.l.b16 %v852
      %v917 = vunpack.c.l.b16 %v853
      %v918 = vunpack.c.l.b16 %v854
      %v919 = vunpack.c.l.b16 %v855
      %v920 = vunpack.c.l.b16 %v856
      %v921 = vunpack.c.l.b16 %v857
      %v922 = vunpack.c.l.b16 %v858
      %v923 = vpack.c.b16 %v892, %v891
      %v924 = vpack.c.b16 %v894, %v893
      %v925 = vpack.c.b16 %v896, %v895
      %v926 = vpack.c.b16 %v898, %v897
      %v927 = vpack.c.b16 %v900, %v899
      %v928 = vpack.c.b16 %v902, %v901
      %v929 = vpack.c.b16 %v904, %v903
      %v930 = vpack.c.b16 %v906, %v905
      %v931 = vpack.c.b16 %v908, %v907
      %v932 = vpack.c.b16 %v910, %v909
      %v933 = vpack.c.b16 %v912, %v911
      %v934 = vpack.c.b16 %v914, %v913
      %v935 = vpack.c.b16 %v916, %v915
      %v936 = vpack.c.b16 %v918, %v917
      %v937 = vpack.c.b16 %v920, %v919
      %v938 = vpack.c.b16 %v922, %v921
      %v940 = vshrl.u32 0, 16
      %v942 = vrot.slane %v940, 7
      %v943 = vshll.u32 0, 16
      %v945 = vor.u32 %v942, %v943
      %v947 = vshrl.u32 %v923, 16
      %v949 = vrot.slane %v947, 7
      %v950 = vshll.u32 %v923, 16
      %v952 = vor.u32 %v949, %v950
      %v954 = vshrl.u32 %v924, 16
      %v956 = vrot.slane %v954, 7
      %v957 = vshll.u32 %v924, 16
      %v959 = vor.u32 %v956, %v957
      %v961 = vshrl.u32 %v925, 16
      %v963 = vrot.slane %v961, 7
      %v964 = vshll.u32 %v925, 16
      %v966 = vor.u32 %v963, %v964
      %v968 = vshrl.u32 %v926, 16
      %v970 = vrot.slane %v968, 7
      %v971 = vshll.u32 %v926, 16
      %v973 = vor.u32 %v970, %v971
      %v975 = vshrl.u32 %v927, 16
      %v977 = vrot.slane %v975, 7
      %v978 = vshll.u32 %v927, 16
      %v980 = vor.u32 %v977, %v978
      %v982 = vshrl.u32 %v928, 16
      %v984 = vrot.slane %v982, 7
      %v985 = vshll.u32 %v928, 16
      %v987 = vor.u32 %v984, %v985
      %v989 = vshrl.u32 %v929, 16
      %v991 = vrot.slane %v989, 7
      %v992 = vshll.u32 %v929, 16
      %v994 = vor.u32 %v991, %v992
      %v996 = vshrl.u32 %v930, 16
      %v998 = vrot.slane %v996, 7
      %v999 = vshll.u32 %v930, 16
      %v1001 = vor.u32 %v998, %v999
      %v1003 = vshrl.u32 %v931, 16
      %v1005 = vrot.slane %v1003, 7
      %v1006 = vshll.u32 %v931, 16
      %v1008 = vor.u32 %v1005, %v1006
      %v1010 = vshrl.u32 %v932, 16
      %v1012 = vrot.slane %v1010, 7
      %v1013 = vshll.u32 %v932, 16
      %v1015 = vor.u32 %v1012, %v1013
      %v1017 = vshrl.u32 %v933, 16
      %v1019 = vrot.slane %v1017, 7
      %v1020 = vshll.u32 %v933, 16
      %v1022 = vor.u32 %v1019, %v1020
      %v1024 = vshrl.u32 %v934, 16
      %v1026 = vrot.slane %v1024, 7
      %v1027 = vshll.u32 %v934, 16
      %v1029 = vor.u32 %v1026, %v1027
      %v1031 = vshrl.u32 %v935, 16
      %v1033 = vrot.slane %v1031, 7
      %v1034 = vshll.u32 %v935, 16
      %v1036 = vor.u32 %v1033, %v1034
      %v1038 = vshrl.u32 %v936, 16
      %v1040 = vrot.slane %v1038, 7
      %v1041 = vshll.u32 %v936, 16
      %v1043 = vor.u32 %v1040, %v1041
      %v1045 = vshrl.u32 %v937, 16
      %v1047 = vrot.slane %v1045, 7
      %v1048 = vshll.u32 %v937, 16
      %v1050 = vor.u32 %v1047, %v1048
      %v1052 = vshrl.u32 %v938, 16
      %v1054 = vrot.slane %v1052, 7
      %v1055 = vshll.u32 %v938, 16
      %v1057 = vor.u32 %v1054, %v1055
      %vm1092 = vcmask 1040384
      %vm1093 = vsmask.f32 256
      %vm1094 = vmand %vm1092, %vm1093
      %v1095 = vsel %vm1094, 0, %v945
      %v1096 = vsel %vm1094, 0, %v952
      %v1097 = vsel %vm1094, 0, %v959
      %v1098 = vsel %vm1094, 0, %v966
      %v1099 = vsel %vm1094, 0, %v973
      %v1100 = vsel %vm1094, 0, %v980
      %v1101 = vsel %vm1094, 0, %v987
      %v1102 = vsel %vm1094, 0, %v994
      %v1103 = vsel %vm1094, 0, %v1001
      %v1104 = vsel %vm1094, 0, %v1008
      %v1105 = vsel %vm1094, 0, %v1015
      %v1106 = vsel %vm1094, 0, %v1022
      %v1107 = vsel %vm1094, 0, %v1029
      %v1108 = vsel %vm1094, 0, %v1036
      %v1109 = vsel %vm1094, 0, %v1043
      %v1110 = vsel %vm1094, 0, %v1050
      %v1111 = vsel %vm1094, 0, %v1057
      %v1112 = vsel %vm1094, %v942, 0
      %v1113 = vsel %vm1094, %v949, 0
      %v1114 = vsel %vm1094, %v956, 0
      %v1115 = vsel %vm1094, %v963, 0
      %v1116 = vsel %vm1094, %v970, 0
      %v1117 = vsel %vm1094, %v977, 0
      %v1118 = vsel %vm1094, %v984, 0
      %v1119 = vsel %vm1094, %v991, 0
      %v1120 = vsel %vm1094, %v998, 0
      %v1121 = vsel %vm1094, %v1005, 0
      %v1122 = vsel %vm1094, %v1012, 0
      %v1123 = vsel %vm1094, %v1019, 0
      %v1124 = vsel %vm1094, %v1026, 0
      %v1125 = vsel %vm1094, %v1033, 0
      %v1126 = vsel %vm1094, %v1040, 0
      %v1127 = vsel %vm1094, %v1047, 0
      %v1128 = vsel %vm1094, %v1054, 0
      %vm1129 = vsmask.f32 7424
      %v1131 = vshrl.u32 %v1095, 16
      %v1133 = vshll.u32 %v1095, 16
      %v1135 = vrot.slane %v1133, 1
      %v1136 = vor.u32 %v1131, %v1135
      %v1138 = vshll.u32 %v1112, 16
      %v1140 = vrot.slane %v1138, 1
      %v1141 = vsel %vm1129, %v1136, %v1140
      %v1143 = vshrl.u32 %v1096, 16
      %v1145 = vshll.u32 %v1096, 16
      %v1147 = vrot.slane %v1145, 1
      %v1148 = vor.u32 %v1143, %v1147
      %v1150 = vshll.u32 %v1113, 16
      %v1152 = vrot.slane %v1150, 1
      %v1153 = vsel %vm1129, %v1148, %v1152
      %v1155 = vshrl.u32 %v1097, 16
      %v1157 = vshll.u32 %v1097, 16
      %v1159 = vrot.slane %v1157, 1
      %v1160 = vor.u32 %v1155, %v1159
      %v1162 = vshll.u32 %v1114, 16
      %v1164 = vrot.slane %v1162, 1
      %v1165 = vsel %vm1129, %v1160, %v1164
      %v1167 = vshrl.u32 %v1098, 16
      %v1169 = vshll.u32 %v1098, 16
      %v1171 = vrot.slane %v1169, 1
      %v1172 = vor.u32 %v1167, %v1171
      %v1174 = vshll.u32 %v1115, 16
      %v1176 = vrot.slane %v1174, 1
      %v1177 = vsel %vm1129, %v1172, %v1176
      %v1179 = vshrl.u32 %v1099, 16
      %v1181 = vshll.u32 %v1099, 16
      %v1183 = vrot.slane %v1181, 1
      %v1184 = vor.u32 %v1179, %v1183
      %v1186 = vshll.u32 %v1116, 16
      %v1188 = vrot.slane %v1186, 1
      %v1189 = vsel %vm1129, %v1184, %v1188
      %v1191 = vshrl.u32 %v1100, 16
      %v1193 = vshll.u32 %v1100, 16
      %v1195 = vrot.slane %v1193, 1
      %v1196 = vor.u32 %v1191, %v1195
      %v1198 = vshll.u32 %v1117, 16
      %v1200 = vrot.slane %v1198, 1
      %v1201 = vsel %vm1129, %v1196, %v1200
      %v1203 = vshrl.u32 %v1101, 16
      %v1205 = vshll.u32 %v1101, 16
      %v1207 = vrot.slane %v1205, 1
      %v1208 = vor.u32 %v1203, %v1207
      %v1210 = vshll.u32 %v1118, 16
      %v1212 = vrot.slane %v1210, 1
      %v1213 = vsel %vm1129, %v1208, %v1212
      %v1215 = vshrl.u32 %v1102, 16
      %v1217 = vshll.u32 %v1102, 16
      %v1219 = vrot.slane %v1217, 1
      %v1220 = vor.u32 %v1215, %v1219
      %v1222 = vshll.u32 %v1119, 16
      %v1224 = vrot.slane %v1222, 1
      %v1225 = vsel %vm1129, %v1220, %v1224
      %v1227 = vshrl.u32 %v1103, 16
      %v1229 = vshll.u32 %v1103, 16
      %v1231 = vrot.slane %v1229, 1
      %v1232 = vor.u32 %v1227, %v1231
      %v1234 = vshll.u32 %v1120, 16
      %v1236 = vrot.slane %v1234, 1
      %v1237 = vsel %vm1129, %v1232, %v1236
      %v1239 = vshrl.u32 %v1104, 16
      %v1241 = vshll.u32 %v1104, 16
      %v1243 = vrot.slane %v1241, 1
      %v1244 = vor.u32 %v1239, %v1243
      %v1246 = vshll.u32 %v1121, 16
      %v1248 = vrot.slane %v1246, 1
      %v1249 = vsel %vm1129, %v1244, %v1248
      %v1251 = vshrl.u32 %v1105, 16
      %v1253 = vshll.u32 %v1105, 16
      %v1255 = vrot.slane %v1253, 1
      %v1256 = vor.u32 %v1251, %v1255
      %v1258 = vshll.u32 %v1122, 16
      %v1260 = vrot.slane %v1258, 1
      %v1261 = vsel %vm1129, %v1256, %v1260
      %v1263 = vshrl.u32 %v1106, 16
      %v1265 = vshll.u32 %v1106, 16
      %v1267 = vrot.slane %v1265, 1
      %v1268 = vor.u32 %v1263, %v1267
      %v1270 = vshll.u32 %v1123, 16
      %v1272 = vrot.slane %v1270, 1
      %v1273 = vsel %vm1129, %v1268, %v1272
      %v1275 = vshrl.u32 %v1107, 16
      %v1277 = vshll.u32 %v1107, 16
      %v1279 = vrot.slane %v1277, 1
      %v1280 = vor.u32 %v1275, %v1279
      %v1282 = vshll.u32 %v1124, 16
      %v1284 = vrot.slane %v1282, 1
      %v1285 = vsel %vm1129, %v1280, %v1284
      %v1287 = vshrl.u32 %v1108, 16
      %v1289 = vshll.u32 %v1108, 16
      %v1291 = vrot.slane %v1289, 1
      %v1292 = vor.u32 %v1287, %v1291
      %v1294 = vshll.u32 %v1125, 16
      %v1296 = vrot.slane %v1294, 1
      %v1297 = vsel %vm1129, %v1292, %v1296
      %v1299 = vshrl.u32 %v1109, 16
      %v1301 = vshll.u32 %v1109, 16
      %v1303 = vrot.slane %v1301, 1
      %v1304 = vor.u32 %v1299, %v1303
      %v1306 = vshll.u32 %v1126, 16
      %v1308 = vrot.slane %v1306, 1
      %v1309 = vsel %vm1129, %v1304, %v1308
      %v1311 = vshrl.u32 %v1110, 16
      %v1313 = vshll.u32 %v1110, 16
      %v1315 = vrot.slane %v1313, 1
      %v1316 = vor.u32 %v1311, %v1315
      %v1318 = vshll.u32 %v1127, 16
      %v1320 = vrot.slane %v1318, 1
      %v1321 = vsel %vm1129, %v1316, %v1320
      %vm1370 = vcmask 1046528
      %v1371 = vrot.slane %v1095, 1
      %v1372 = vrot.slane %v1112, 1
      %v1373 = vsel %vm1370, %v1371, %v1372
      %v1374 = vrot.slane %v1096, 1
      %v1375 = vrot.slane %v1113, 1
      %v1376 = vsel %vm1370, %v1374, %v1375
      %v1377 = vrot.slane %v1097, 1
      %v1378 = vrot.slane %v1114, 1
      %v1379 = vsel %vm1370, %v1377, %v1378
      %v1380 = vrot.slane %v1098, 1
      %v1381 = vrot.slane %v1115, 1
      %v1382 = vsel %vm1370, %v1380, %v1381
      %v1383 = vrot.slane %v1099, 1
      %v1384 = vrot.slane %v1116, 1
      %v1385 = vsel %vm1370, %v1383, %v1384
      %v1386 = vrot.slane %v1100, 1
      %v1387 = vrot.slane %v1117, 1
      %v1388 = vsel %vm1370, %v1386, %v1387
      %v1389 = vrot.slane %v1101, 1
      %v1390 = vrot.slane %v1118, 1
      %v1391 = vsel %vm1370, %v1389, %v1390
      %v1392 = vrot.slane %v1102, 1
      %v1393 = vrot.slane %v1119, 1
      %v1394 = vsel %vm1370, %v1392, %v1393
      %v1395 = vrot.slane %v1103, 1
      %v1396 = vrot.slane %v1120, 1
      %v1397 = vsel %vm1370, %v1395, %v1396
      %v1398 = vrot.slane %v1104, 1
      %v1399 = vrot.slane %v1121, 1
      %v1400 = vsel %vm1370, %v1398, %v1399
      %v1401 = vrot.slane %v1105, 1
      %v1402 = vrot.slane %v1122, 1
      %v1403 = vsel %vm1370, %v1401, %v1402
      %v1404 = vrot.slane %v1106, 1
      %v1405 = vrot.slane %v1123, 1
      %v1406 = vsel %vm1370, %v1404, %v1405
      %v1407 = vrot.slane %v1107, 1
      %v1408 = vrot.slane %v1124, 1
      %v1409 = vsel %vm1370, %v1407, %v1408
      %v1410 = vrot.slane %v1108, 1
      %v1411 = vrot.slane %v1125, 1
      %v1412 = vsel %vm1370, %v1410, %v1411
      %v1413 = vrot.slane %v1109, 1
      %v1414 = vrot.slane %v1126, 1
      %v1415 = vsel %vm1370, %v1413, %v1414
      %v1416 = vrot.slane %v1110, 1
      %v1417 = vrot.slane %v1127, 1
      %v1418 = vsel %vm1370, %v1416, %v1417
      %v1436 = vshrl.u32 %v1111, 16
      %v1438 = vshll.u32 %v1111, 16
      %v1440 = vrot.slane %v1438, 1
      %v1441 = vor.u32 %v1436, %v1440
      %v1443 = vshll.u32 %v1128, 16
      %v1445 = vrot.slane %v1443, 1
      %v1446 = vsel %vm1129, %v1441, %v1445
      %v1450 = vrot.slane %v1111, 1
      %v1451 = vrot.slane %v1128, 1
      %v1452 = vsel %vm1370, %v1450, %v1451
      %v1454 = vld [vmem:[%s4] sm:$0xf]
      %v1455 = vld [vmem:[%s4 + $0x4] sm:$0xf]
      %v1456 = vld [vmem:[%s4 + $0x8] sm:$0xf]
      %v1457 = vld [vmem:[%s4 + $0xc] sm:$0xf]
      %v1458 = vld [vmem:[%s4 + $0x10] sm:$0xf]
      %v1459 = vld [vmem:[%s4 + $0x14] sm:$0xf]
      %v1460 = vld [vmem:[%s4 + $0x18] sm:$0xf]
      %v1461 = vld [vmem:[%s4 + $0x1c] sm:$0xf]
      %v1462 = vld [vmem:[%s4 + $0x20] sm:$0xf]
      %v1463 = vld [vmem:[%s4 + $0x24] sm:$0xf]
      %v1464 = vld [vmem:[%s4 + $0x28] sm:$0xf]
      %v1465 = vld [vmem:[%s4 + $0x2c] sm:$0xf]
      %v1466 = vld [vmem:[%s4 + $0x30] sm:$0xf]
      %v1467 = vld [vmem:[%s4 + $0x34] sm:$0xf]
      %v1468 = vld [vmem:[%s4 + $0x38] sm:$0xf]
      %v1469 = vld [vmem:[%s4 + $0x3c] sm:$0xf]
      %v1470 = vld [vmem:[%s4 + $0x40] sm:$0xf]
      %v1471 = vld [vmem:[%s4 + $0x44] sm:$0xf]
      %v1472 = vld [vmem:[%s4 + $0x48] sm:$0xf]
      %v1473 = vld [vmem:[%s4 + $0x4c] sm:$0xf]
      %v1474 = vld [vmem:[%s4 + $0x50] sm:$0xf]
      %v1475 = vld [vmem:[%s4 + $0x54] sm:$0xf]
      %v1476 = vld [vmem:[%s4 + $0x58] sm:$0xf]
      %v1477 = vld [vmem:[%s4 + $0x5c] sm:$0xf]
      %v1478 = vld [vmem:[%s4 + $0x60] sm:$0xf]
      %v1479 = vld [vmem:[%s4 + $0x64] sm:$0xf]
      %v1480 = vld [vmem:[%s4 + $0x68] sm:$0xf]
      %v1481 = vld [vmem:[%s4 + $0x6c] sm:$0xf]
      %v1482 = vld [vmem:[%s4 + $0x70] sm:$0xf]
      %v1483 = vld [vmem:[%s4 + $0x74] sm:$0xf]
      %v1484 = vld [vmem:[%s4 + $0x78] sm:$0xf]
      %v1485 = vld [vmem:[%s4 + $0x7c] sm:$0xf]
      %v1486 = vld [vmem:[%s4 + $0x80] sm:$0xf]
      %v1487 = vld [vmem:[%s4 + $0x84] sm:$0xf]
      %v1488 = vld [vmem:[%s4 + $0x88] sm:$0xf]
      %v1489 = vld [vmem:[%s4 + $0x8c] sm:$0xf]
      %v1490 = vld [vmem:[%s4 + $0x90] sm:$0xf]
      %v1491 = vld [vmem:[%s4 + $0x94] sm:$0xf]
      %v1492 = vld [vmem:[%s4 + $0x98] sm:$0xf]
      %v1493 = vld [vmem:[%s4 + $0x9c] sm:$0xf]
      %v1494 = vld [vmem:[%s4 + $0xa0] sm:$0xf]
      %v1495 = vld [vmem:[%s4 + $0xa4] sm:$0xf]
      %v1496 = vld [vmem:[%s4 + $0xa8] sm:$0xf]
      %v1497 = vld [vmem:[%s4 + $0xac] sm:$0xf]
      %v1498 = vld [vmem:[%s4 + $0xb0] sm:$0xf]
      %v1499 = vld [vmem:[%s4 + $0xb4] sm:$0xf]
      %v1500 = vld [vmem:[%s4 + $0xb8] sm:$0xf]
      %v1501 = vld [vmem:[%s4 + $0xbc] sm:$0xf]
      %v1502 = vld [vmem:[%s4 + $0xc0] sm:$0xf]
      %v1503 = vld [vmem:[%s4 + $0xc4] sm:$0xf]
      %v1504 = vld [vmem:[%s4 + $0xc8] sm:$0xf]
      %v1505 = vld [vmem:[%s4 + $0xcc] sm:$0xf]
      %v1506 = vld [vmem:[%s4 + $0xd0] sm:$0xf]
      %v1507 = vld [vmem:[%s4 + $0xd4] sm:$0xf]
      %v1508 = vld [vmem:[%s4 + $0xd8] sm:$0xf]
      %v1509 = vld [vmem:[%s4 + $0xdc] sm:$0xf]
      %v1510 = vld [vmem:[%s4 + $0xe0] sm:$0xf]
      %v1511 = vld [vmem:[%s4 + $0xe4] sm:$0xf]
      %v1512 = vld [vmem:[%s4 + $0xe8] sm:$0xf]
      %v1513 = vld [vmem:[%s4 + $0xec] sm:$0xf]
      %v1514 = vld [vmem:[%s4 + $0xf0] sm:$0xf]
      %v1515 = vld [vmem:[%s4 + $0xf4] sm:$0xf]
      %v1516 = vld [vmem:[%s4 + $0xf8] sm:$0xf]
      %v1517 = vld [vmem:[%s4 + $0xfc] sm:$0xf]
      %v1518 = vld [vmem:[%s4 + $0x100] sm:$0xf]
      %v1519 = vld [vmem:[%s4 + $0x104] sm:$0xf]
      %v1520 = vld [vmem:[%s4 + $0x108] sm:$0xf]
      %v1521 = vld [vmem:[%s4 + $0x10c] sm:$0xf]
      %v1522 = vld [vmem:[%s4 + $0x110] sm:$0xf]
      %v1523 = vld [vmem:[%s4 + $0x114] sm:$0xf]
      %v1524 = vld [vmem:[%s4 + $0x118] sm:$0xf]
      %v1525 = vld [vmem:[%s4 + $0x11c] sm:$0xf]
      %v1526 = vld [vmem:[%s4 + $0x120] sm:$0xf]
      %v1527 = vld [vmem:[%s4 + $0x124] sm:$0xf]
      %v1528 = vld [vmem:[%s4 + $0x128] sm:$0xf]
      %v1529 = vld [vmem:[%s4 + $0x12c] sm:$0xf]
      %v1530 = vld [vmem:[%s4 + $0x130] sm:$0xf]
      %v1531 = vld [vmem:[%s4 + $0x134] sm:$0xf]
      %v1532 = vld [vmem:[%s4 + $0x138] sm:$0xf]
      %v1533 = vld [vmem:[%s4 + $0x13c] sm:$0xf]
      %v1534 = vld [vmem:[%s4 + $0x140] sm:$0xf]
      %v1535 = vld [vmem:[%s4 + $0x144] sm:$0xf]
      %v1536 = vld [vmem:[%s4 + $0x148] sm:$0xf]
      %v1537 = vld [vmem:[%s4 + $0x14c] sm:$0xf]
      %v1538 = vld [vmem:[%s4 + $0x150] sm:$0xf]
      %v1539 = vld [vmem:[%s4 + $0x154] sm:$0xf]
      %v1540 = vld [vmem:[%s4 + $0x158] sm:$0xf]
      %v1541 = vld [vmem:[%s4 + $0x15c] sm:$0xf]
      %v1542 = vld [vmem:[%s4 + $0x160] sm:$0xf]
      %v1543 = vld [vmem:[%s4 + $0x164] sm:$0xf]
      %v1544 = vld [vmem:[%s4 + $0x168] sm:$0xf]
      %v1545 = vld [vmem:[%s4 + $0x16c] sm:$0xf]
      %v1546 = vld [vmem:[%s4 + $0x170] sm:$0xf]
      %v1547 = vld [vmem:[%s4 + $0x174] sm:$0xf]
      %v1548 = vld [vmem:[%s4 + $0x178] sm:$0xf]
      %v1549 = vld [vmem:[%s4 + $0x17c] sm:$0xf]
      %v1550 = vld [vmem:[%s4 + $0x180] sm:$0xf]
      %v1551 = vld [vmem:[%s4 + $0x184] sm:$0xf]
      %v1552 = vld [vmem:[%s4 + $0x188] sm:$0xf]
      %v1553 = vld [vmem:[%s4 + $0x18c] sm:$0xf]
      %v1554 = vld [vmem:[%s4 + $0x190] sm:$0xf]
      %v1555 = vld [vmem:[%s4 + $0x194] sm:$0xf]
      %v1556 = vld [vmem:[%s4 + $0x198] sm:$0xf]
      %v1557 = vld [vmem:[%s4 + $0x19c] sm:$0xf]
      %v1558 = vld [vmem:[%s4 + $0x1a0] sm:$0xf]
      %v1559 = vld [vmem:[%s4 + $0x1a4] sm:$0xf]
      %v1560 = vld [vmem:[%s4 + $0x1a8] sm:$0xf]
      %v1561 = vld [vmem:[%s4 + $0x1ac] sm:$0xf]
      %v1562 = vld [vmem:[%s4 + $0x1b0] sm:$0xf]
      %v1563 = vld [vmem:[%s4 + $0x1b4] sm:$0xf]
      %v1564 = vld [vmem:[%s4 + $0x1b8] sm:$0xf]
      %v1565 = vld [vmem:[%s4 + $0x1bc] sm:$0xf]
      %v1566 = vld [vmem:[%s4 + $0x1c0] sm:$0xf]
      %v1567 = vld [vmem:[%s4 + $0x1c4] sm:$0xf]
      %v1568 = vld [vmem:[%s4 + $0x1c8] sm:$0xf]
      %v1569 = vld [vmem:[%s4 + $0x1cc] sm:$0xf]
      %v1570 = vld [vmem:[%s4 + $0x1d0] sm:$0xf]
      %v1571 = vld [vmem:[%s4 + $0x1d4] sm:$0xf]
      %v1572 = vld [vmem:[%s4 + $0x1d8] sm:$0xf]
      %v1573 = vld [vmem:[%s4 + $0x1dc] sm:$0xf]
      %v1574 = vld [vmem:[%s4 + $0x1e0] sm:$0xf]
      %v1575 = vld [vmem:[%s4 + $0x1e4] sm:$0xf]
      %v1576 = vld [vmem:[%s4 + $0x1e8] sm:$0xf]
      %v1577 = vld [vmem:[%s4 + $0x1ec] sm:$0xf]
      %v1578 = vld [vmem:[%s4 + $0x1f0] sm:$0xf]
      %v1579 = vld [vmem:[%s4 + $0x1f4] sm:$0xf]
      %v1580 = vld [vmem:[%s4 + $0x1f8] sm:$0xf]
      %v1581 = vld [vmem:[%s4 + $0x1fc] sm:$0xf]
      %v1582 = vld [vmem:[%s4 + $0x200] sm:$0xf]
      %v1583 = vld [vmem:[%s4 + $0x204] sm:$0xf]
      %v1584 = vld [vmem:[%s4 + $0x208] sm:$0xf]
      %v1585 = vld [vmem:[%s4 + $0x20c] sm:$0xf]
      %v1586 = vld [vmem:[%s4 + $0x210] sm:$0xf]
      %v1587 = vld [vmem:[%s4 + $0x214] sm:$0xf]
      %v1588 = vld [vmem:[%s4 + $0x218] sm:$0xf]
      %v1589 = vld [vmem:[%s4 + $0x21c] sm:$0xf]
      %v1590 = vld [vmem:[%s4 + $0x220] sm:$0xf]
      %v1591 = vld [vmem:[%s4 + $0x224] sm:$0xf]
      %v1592 = vld [vmem:[%s4 + $0x228] sm:$0xf]
      %v1593 = vld [vmem:[%s4 + $0x22c] sm:$0xf]
      %v1594 = vld [vmem:[%s4 + $0x230] sm:$0xf]
      %v1595 = vld [vmem:[%s4 + $0x234] sm:$0xf]
      %v1596 = vld [vmem:[%s4 + $0x238] sm:$0xf]
      %v1597 = vld [vmem:[%s4 + $0x23c] sm:$0xf]
      %v1742 = vunpack.c.l.b16 %v1454
      %v1743 = vunpack.c.l.b16 %v1455
      %v1744 = vunpack.c.l.b16 %v1456
      %v1745 = vunpack.c.l.b16 %v1457
      %v1746 = vunpack.c.l.b16 %v1458
      %v1747 = vunpack.c.l.b16 %v1459
      %v1748 = vunpack.c.l.b16 %v1460
      %v1749 = vunpack.c.l.b16 %v1461
      %v1750 = vunpack.c.l.b16 %v1462
      %v1751 = vunpack.c.l.b16 %v1463
      %v1752 = vunpack.c.l.b16 %v1464
      %v1753 = vunpack.c.l.b16 %v1465
      %v1754 = vunpack.c.l.b16 %v1466
      %v1755 = vunpack.c.l.b16 %v1467
      %v1756 = vunpack.c.l.b16 %v1468
      %v1757 = vunpack.c.l.b16 %v1469
      %v1758 = vunpack.c.l.b16 %v1470
      %v1759 = vunpack.c.l.b16 %v1471
      %v1760 = vunpack.c.l.b16 %v1472
      %v1761 = vunpack.c.l.b16 %v1473
      %v1762 = vunpack.c.l.b16 %v1474
      %v1763 = vunpack.c.l.b16 %v1475
      %v1764 = vunpack.c.l.b16 %v1476
      %v1765 = vunpack.c.l.b16 %v1477
      %v1766 = vunpack.c.l.b16 %v1478
      %v1767 = vunpack.c.l.b16 %v1479
      %v1768 = vunpack.c.l.b16 %v1480
      %v1769 = vunpack.c.l.b16 %v1481
      %v1770 = vunpack.c.l.b16 %v1482
      %v1771 = vunpack.c.l.b16 %v1483
      %v1772 = vunpack.c.l.b16 %v1484
      %v1773 = vunpack.c.l.b16 %v1485
      %v1774 = vunpack.c.l.b16 %v1486
      %v1775 = vunpack.c.l.b16 %v1487
      %v1776 = vunpack.c.l.b16 %v1488
      %v1777 = vunpack.c.l.b16 %v1489
      %v1778 = vunpack.c.l.b16 %v1490
      %v1779 = vunpack.c.l.b16 %v1491
      %v1780 = vunpack.c.l.b16 %v1492
      %v1781 = vunpack.c.l.b16 %v1493
      %v1782 = vunpack.c.l.b16 %v1494
      %v1783 = vunpack.c.l.b16 %v1495
      %v1784 = vunpack.c.l.b16 %v1496
      %v1785 = vunpack.c.l.b16 %v1497
      %v1786 = vunpack.c.l.b16 %v1498
      %v1787 = vunpack.c.l.b16 %v1499
      %v1788 = vunpack.c.l.b16 %v1500
      %v1789 = vunpack.c.l.b16 %v1501
      %v1790 = vunpack.c.l.b16 %v1502
      %v1791 = vunpack.c.l.b16 %v1503
      %v1792 = vunpack.c.l.b16 %v1504
      %v1793 = vunpack.c.l.b16 %v1505
      %v1794 = vunpack.c.l.b16 %v1506
      %v1795 = vunpack.c.l.b16 %v1507
      %v1796 = vunpack.c.l.b16 %v1508
      %v1797 = vunpack.c.l.b16 %v1509
      %v1798 = vunpack.c.l.b16 %v1510
      %v1799 = vunpack.c.l.b16 %v1511
      %v1800 = vunpack.c.l.b16 %v1512
      %v1801 = vunpack.c.l.b16 %v1513
      %v1802 = vunpack.c.l.b16 %v1514
      %v1803 = vunpack.c.l.b16 %v1515
      %v1804 = vunpack.c.l.b16 %v1516
      %v1805 = vunpack.c.l.b16 %v1517
      %v1806 = vunpack.c.l.b16 %v1518
      %v1807 = vunpack.c.l.b16 %v1519
      %v1808 = vunpack.c.l.b16 %v1520
      %v1809 = vunpack.c.l.b16 %v1521
      %v1810 = vunpack.c.l.b16 %v1522
      %v1811 = vunpack.c.l.b16 %v1523
      %v1812 = vunpack.c.l.b16 %v1524
      %v1813 = vunpack.c.l.b16 %v1525
      %v1814 = vunpack.c.l.b16 %v1526
      %v1815 = vunpack.c.l.b16 %v1527
      %v1816 = vunpack.c.l.b16 %v1528
      %v1817 = vunpack.c.l.b16 %v1529
      %v1818 = vunpack.c.l.b16 %v1530
      %v1819 = vunpack.c.l.b16 %v1531
      %v1820 = vunpack.c.l.b16 %v1532
      %v1821 = vunpack.c.l.b16 %v1533
      %v1822 = vunpack.c.l.b16 %v1534
      %v1823 = vunpack.c.l.b16 %v1535
      %v1824 = vunpack.c.l.b16 %v1536
      %v1825 = vunpack.c.l.b16 %v1537
      %v1826 = vunpack.c.l.b16 %v1538
      %v1827 = vunpack.c.l.b16 %v1539
      %v1828 = vunpack.c.l.b16 %v1540
      %v1829 = vunpack.c.l.b16 %v1541
      %v1830 = vunpack.c.l.b16 %v1542
      %v1831 = vunpack.c.l.b16 %v1543
      %v1832 = vunpack.c.l.b16 %v1544
      %v1833 = vunpack.c.l.b16 %v1545
      %v1834 = vunpack.c.l.b16 %v1546
      %v1835 = vunpack.c.l.b16 %v1547
      %v1836 = vunpack.c.l.b16 %v1548
      %v1837 = vunpack.c.l.b16 %v1549
      %v1838 = vunpack.c.l.b16 %v1550
      %v1839 = vunpack.c.l.b16 %v1551
      %v1840 = vunpack.c.l.b16 %v1552
      %v1841 = vunpack.c.l.b16 %v1553
      %v1842 = vunpack.c.l.b16 %v1554
      %v1843 = vunpack.c.l.b16 %v1555
      %v1844 = vunpack.c.l.b16 %v1556
      %v1845 = vunpack.c.l.b16 %v1557
      %v1846 = vunpack.c.l.b16 %v1558
      %v1847 = vunpack.c.l.b16 %v1559
      %v1848 = vunpack.c.l.b16 %v1560
      %v1849 = vunpack.c.l.b16 %v1561
      %v1850 = vunpack.c.l.b16 %v1562
      %v1851 = vunpack.c.l.b16 %v1563
      %v1852 = vunpack.c.l.b16 %v1564
      %v1853 = vunpack.c.l.b16 %v1565
      %v1854 = vunpack.c.l.b16 %v1566
      %v1855 = vunpack.c.l.b16 %v1567
      %v1856 = vunpack.c.l.b16 %v1568
      %v1857 = vunpack.c.l.b16 %v1569
      %v1858 = vunpack.c.l.b16 %v1570
      %v1859 = vunpack.c.l.b16 %v1571
      %v1860 = vunpack.c.l.b16 %v1572
      %v1861 = vunpack.c.l.b16 %v1573
      %v1862 = vunpack.c.l.b16 %v1574
      %v1863 = vunpack.c.l.b16 %v1575
      %v1864 = vunpack.c.l.b16 %v1576
      %v1865 = vunpack.c.l.b16 %v1577
      %v1866 = vunpack.c.l.b16 %v1578
      %v1867 = vunpack.c.l.b16 %v1579
      %v1868 = vunpack.c.l.b16 %v1580
      %v1869 = vunpack.c.l.b16 %v1581
      %v1870 = vunpack.c.l.b16 %v1582
      %v1871 = vunpack.c.l.b16 %v1583
      %v1872 = vunpack.c.l.b16 %v1584
      %v1873 = vunpack.c.l.b16 %v1585
      %v1874 = vunpack.c.l.b16 %v1586
      %v1875 = vunpack.c.l.b16 %v1587
      %v1876 = vunpack.c.l.b16 %v1588
      %v1877 = vunpack.c.l.b16 %v1589
      %v1878 = vunpack.c.l.b16 %v1590
      %v1879 = vunpack.c.l.b16 %v1591
      %v1880 = vunpack.c.l.b16 %v1592
      %v1881 = vunpack.c.l.b16 %v1593
      %v1882 = vunpack.c.l.b16 %v1594
      %v1883 = vunpack.c.l.b16 %v1595
      %v1884 = vunpack.c.l.b16 %v1596
      %v1885 = vunpack.c.l.b16 %v1597
      %v1886 = vpack.c.b16 %v1743, %v1742
      %v1887 = vpack.c.b16 %v1745, %v1744
      %v1888 = vpack.c.b16 %v1747, %v1746
      %v1889 = vpack.c.b16 %v1749, %v1748
      %v1890 = vpack.c.b16 %v1751, %v1750
      %v1891 = vpack.c.b16 %v1753, %v1752
      %v1892 = vpack.c.b16 %v1755, %v1754
      %v1893 = vpack.c.b16 %v1757, %v1756
      %v1894 = vpack.c.b16 %v1759, %v1758
      %v1895 = vpack.c.b16 %v1761, %v1760
      %v1896 = vpack.c.b16 %v1763, %v1762
      %v1897 = vpack.c.b16 %v1765, %v1764
      %v1898 = vpack.c.b16 %v1767, %v1766
      %v1899 = vpack.c.b16 %v1769, %v1768
      %v1900 = vpack.c.b16 %v1771, %v1770
      %v1901 = vpack.c.b16 %v1773, %v1772
      %v1902 = vpack.c.b16 %v1775, %v1774
      %v1903 = vpack.c.b16 %v1777, %v1776
      %v1904 = vpack.c.b16 %v1779, %v1778
      %v1905 = vpack.c.b16 %v1781, %v1780
      %v1906 = vpack.c.b16 %v1783, %v1782
      %v1907 = vpack.c.b16 %v1785, %v1784
      %v1908 = vpack.c.b16 %v1787, %v1786
      %v1909 = vpack.c.b16 %v1789, %v1788
      %v1910 = vpack.c.b16 %v1791, %v1790
      %v1911 = vpack.c.b16 %v1793, %v1792
      %v1912 = vpack.c.b16 %v1795, %v1794
      %v1913 = vpack.c.b16 %v1797, %v1796
      %v1914 = vpack.c.b16 %v1799, %v1798
      %v1915 = vpack.c.b16 %v1801, %v1800
      %v1916 = vpack.c.b16 %v1803, %v1802
      %v1917 = vpack.c.b16 %v1805, %v1804
      %v1918 = vpack.c.b16 %v1807, %v1806
      %v1919 = vpack.c.b16 %v1809, %v1808
      %v1920 = vpack.c.b16 %v1811, %v1810
      %v1921 = vpack.c.b16 %v1813, %v1812
      %v1922 = vpack.c.b16 %v1815, %v1814
      %v1923 = vpack.c.b16 %v1817, %v1816
      %v1924 = vpack.c.b16 %v1819, %v1818
      %v1925 = vpack.c.b16 %v1821, %v1820
      %v1926 = vpack.c.b16 %v1823, %v1822
      %v1927 = vpack.c.b16 %v1825, %v1824
      %v1928 = vpack.c.b16 %v1827, %v1826
      %v1929 = vpack.c.b16 %v1829, %v1828
      %v1930 = vpack.c.b16 %v1831, %v1830
      %v1931 = vpack.c.b16 %v1833, %v1832
      %v1932 = vpack.c.b16 %v1835, %v1834
      %v1933 = vpack.c.b16 %v1837, %v1836
      %v1934 = vpack.c.b16 %v1839, %v1838
      %v1935 = vpack.c.b16 %v1841, %v1840
      %v1936 = vpack.c.b16 %v1843, %v1842
      %v1937 = vpack.c.b16 %v1845, %v1844
      %v1938 = vpack.c.b16 %v1847, %v1846
      %v1939 = vpack.c.b16 %v1849, %v1848
      %v1940 = vpack.c.b16 %v1851, %v1850
      %v1941 = vpack.c.b16 %v1853, %v1852
      %v1942 = vpack.c.b16 %v1855, %v1854
      %v1943 = vpack.c.b16 %v1857, %v1856
      %v1944 = vpack.c.b16 %v1859, %v1858
      %v1945 = vpack.c.b16 %v1861, %v1860
      %v1946 = vpack.c.b16 %v1863, %v1862
      %v1947 = vpack.c.b16 %v1865, %v1864
      %v1948 = vpack.c.b16 %v1867, %v1866
      %v1949 = vpack.c.b16 %v1869, %v1868
      %v1950 = vpack.c.b16 %v1871, %v1870
      %v1951 = vpack.c.b16 %v1873, %v1872
      %v1952 = vpack.c.b16 %v1875, %v1874
      %v1953 = vpack.c.b16 %v1877, %v1876
      %v1954 = vpack.c.b16 %v1879, %v1878
      %v1955 = vpack.c.b16 %v1881, %v1880
      %v1956 = vpack.c.b16 %v1883, %v1882
      %v1957 = vpack.c.b16 %v1885, %v1884
      %2030 = vmatpush.bf16.msra.mxu0 %v1893
      %2031 = vmatpush.bf16.msra.mxu0 %v1892
      %2032 = vmatpush.bf16.msra.mxu0 %v1891
      %2033 = vmatpush.bf16.msra.mxu0 %v1890
      %2034 = vmatpush.bf16.msra.mxu0 %v1889
      %2035 = vmatpush.bf16.msra.mxu0 %v1888
      %2036 = vmatpush.bf16.msra.mxu0 %v1887
      %2037 = vmatpush.bf16.msra.mxu0 %v1886
      %2038 = vmatmul.bf16.gmra.mxu0 %v1095
      %v2039 = vpop.f32.mrf.mxu0
      %v2040 = vadd.f32 0.0, %v2039
      %v2041 = vpop.f32.mrf.mxu0
      %v2042 = vadd.f32 0.0, %v2041
      %2043 = vmatmul.bf16.gmra.mxu0 %v1096
      %v2044 = vpop.f32.mrf.mxu0
      %v2045 = vadd.f32 0.0, %v2044
      %v2046 = vpop.f32.mrf.mxu0
      %v2047 = vadd.f32 0.0, %v2046
      %2048 = vmatmul.bf16.gmra.mxu0 %v1097
      %v2049 = vpop.f32.mrf.mxu0
      %v2050 = vadd.f32 0.0, %v2049
      %v2051 = vpop.f32.mrf.mxu0
      %v2052 = vadd.f32 0.0, %v2051
      %2053 = vmatmul.bf16.gmra.mxu0 %v1098
      %v2054 = vpop.f32.mrf.mxu0
      %v2055 = vadd.f32 0.0, %v2054
      %v2056 = vpop.f32.mrf.mxu0
      %v2057 = vadd.f32 0.0, %v2056
      %2058 = vmatmul.bf16.gmra.mxu0 %v1099
      %v2059 = vpop.f32.mrf.mxu0
      %v2060 = vadd.f32 0.0, %v2059
      %v2061 = vpop.f32.mrf.mxu0
      %v2062 = vadd.f32 0.0, %v2061
      %2063 = vmatmul.bf16.gmra.mxu0 %v1100
      %v2064 = vpop.f32.mrf.mxu0
      %v2065 = vadd.f32 0.0, %v2064
      %v2066 = vpop.f32.mrf.mxu0
      %v2067 = vadd.f32 0.0, %v2066
      %2068 = vmatmul.bf16.gmra.mxu0 %v1101
      %v2069 = vpop.f32.mrf.mxu0
      %v2070 = vadd.f32 0.0, %v2069
      %v2071 = vpop.f32.mrf.mxu0
      %v2072 = vadd.f32 0.0, %v2071
      %2073 = vmatmul.bf16.gmra.mxu0 %v1102
      %v2074 = vpop.f32.mrf.mxu0
      %v2075 = vadd.f32 0.0, %v2074
      %v2076 = vpop.f32.mrf.mxu0
      %v2077 = vadd.f32 0.0, %v2076
      %2078 = vmatmul.bf16.gmra.mxu0 %v1103
      %v2079 = vpop.f32.mrf.mxu0
      %v2080 = vadd.f32 0.0, %v2079
      %v2081 = vpop.f32.mrf.mxu0
      %v2082 = vadd.f32 0.0, %v2081
      %2083 = vmatmul.bf16.gmra.mxu0 %v1104
      %v2084 = vpop.f32.mrf.mxu0
      %v2085 = vadd.f32 0.0, %v2084
      %v2086 = vpop.f32.mrf.mxu0
      %v2087 = vadd.f32 0.0, %v2086
      %2088 = vmatmul.bf16.gmra.mxu0 %v1105
      %v2089 = vpop.f32.mrf.mxu0
      %v2090 = vadd.f32 0.0, %v2089
      %v2091 = vpop.f32.mrf.mxu0
      %v2092 = vadd.f32 0.0, %v2091
      %2093 = vmatmul.bf16.gmra.mxu0 %v1106
      %v2094 = vpop.f32.mrf.mxu0
      %v2095 = vadd.f32 0.0, %v2094
      %v2096 = vpop.f32.mrf.mxu0
      %v2097 = vadd.f32 0.0, %v2096
      %2098 = vmatmul.bf16.gmra.mxu0 %v1107
      %v2099 = vpop.f32.mrf.mxu0
      %v2100 = vadd.f32 0.0, %v2099
      %v2101 = vpop.f32.mrf.mxu0
      %v2102 = vadd.f32 0.0, %v2101
      %2103 = vmatmul.bf16.gmra.mxu0 %v1108
      %v2104 = vpop.f32.mrf.mxu0
      %v2105 = vadd.f32 0.0, %v2104
      %v2106 = vpop.f32.mrf.mxu0
      %v2107 = vadd.f32 0.0, %v2106
      %2108 = vmatmul.bf16.gmra.mxu0 %v1109
      %v2109 = vpop.f32.mrf.mxu0
      %v2110 = vadd.f32 0.0, %v2109
      %v2111 = vpop.f32.mrf.mxu0
      %v2112 = vadd.f32 0.0, %v2111
      %2113 = vmatmul.bf16.gmra.mxu0 %v1110
      %v2114 = vpop.f32.mrf.mxu0
      %v2115 = vadd.f32 0.0, %v2114
      %v2116 = vpop.f32.mrf.mxu0
      %v2117 = vadd.f32 0.0, %v2116
      %2118 = vdwg.mxu0
      %2119 = vmatpush.bf16.msra.mxu0 %v1901
      %2120 = vmatpush.bf16.msra.mxu0 %v1900
      %2121 = vmatpush.bf16.msra.mxu0 %v1899
      %2122 = vmatpush.bf16.msra.mxu0 %v1898
      %2123 = vmatpush.bf16.msra.mxu0 %v1897
      %2124 = vmatpush.bf16.msra.mxu0 %v1896
      %2125 = vmatpush.bf16.msra.mxu0 %v1895
      %2126 = vmatpush.bf16.msra.mxu0 %v1894
      %2127 = vmatmul.bf16.gmra.mxu0 %v1141
      %v2128 = vpop.f32.mrf.mxu0
      %v2129 = vadd.f32 %v2040, %v2128
      %v2130 = vpop.f32.mrf.mxu0
      %v2131 = vadd.f32 %v2042, %v2130
      %2132 = vmatmul.bf16.gmra.mxu0 %v1153
      %v2133 = vpop.f32.mrf.mxu0
      %v2134 = vadd.f32 %v2045, %v2133
      %v2135 = vpop.f32.mrf.mxu0
      %v2136 = vadd.f32 %v2047, %v2135
      %2137 = vmatmul.bf16.gmra.mxu0 %v1165
      %v2138 = vpop.f32.mrf.mxu0
      %v2139 = vadd.f32 %v2050, %v2138
      %v2140 = vpop.f32.mrf.mxu0
      %v2141 = vadd.f32 %v2052, %v2140
      %2142 = vmatmul.bf16.gmra.mxu0 %v1177
      %v2143 = vpop.f32.mrf.mxu0
      %v2144 = vadd.f32 %v2055, %v2143
      %v2145 = vpop.f32.mrf.mxu0
      %v2146 = vadd.f32 %v2057, %v2145
      %2147 = vmatmul.bf16.gmra.mxu0 %v1189
      %v2148 = vpop.f32.mrf.mxu0
      %v2149 = vadd.f32 %v2060, %v2148
      %v2150 = vpop.f32.mrf.mxu0
      %v2151 = vadd.f32 %v2062, %v2150
      %2152 = vmatmul.bf16.gmra.mxu0 %v1201
      %v2153 = vpop.f32.mrf.mxu0
      %v2154 = vadd.f32 %v2065, %v2153
      %v2155 = vpop.f32.mrf.mxu0
      %v2156 = vadd.f32 %v2067, %v2155
      %2157 = vmatmul.bf16.gmra.mxu0 %v1213
      %v2158 = vpop.f32.mrf.mxu0
      %v2159 = vadd.f32 %v2070, %v2158
      %v2160 = vpop.f32.mrf.mxu0
      %v2161 = vadd.f32 %v2072, %v2160
      %2162 = vmatmul.bf16.gmra.mxu0 %v1225
      %v2163 = vpop.f32.mrf.mxu0
      %v2164 = vadd.f32 %v2075, %v2163
      %v2165 = vpop.f32.mrf.mxu0
      %v2166 = vadd.f32 %v2077, %v2165
      %2167 = vmatmul.bf16.gmra.mxu0 %v1237
      %v2168 = vpop.f32.mrf.mxu0
      %v2169 = vadd.f32 %v2080, %v2168
      %v2170 = vpop.f32.mrf.mxu0
      %v2171 = vadd.f32 %v2082, %v2170
      %2172 = vmatmul.bf16.gmra.mxu0 %v1249
      %v2173 = vpop.f32.mrf.mxu0
      %v2174 = vadd.f32 %v2085, %v2173
      %v2175 = vpop.f32.mrf.mxu0
      %v2176 = vadd.f32 %v2087, %v2175
      %2177 = vmatmul.bf16.gmra.mxu0 %v1261
      %v2178 = vpop.f32.mrf.mxu0
      %v2179 = vadd.f32 %v2090, %v2178
      %v2180 = vpop.f32.mrf.mxu0
      %v2181 = vadd.f32 %v2092, %v2180
      %2182 = vmatmul.bf16.gmra.mxu0 %v1273
      %v2183 = vpop.f32.mrf.mxu0
      %v2184 = vadd.f32 %v2095, %v2183
      %v2185 = vpop.f32.mrf.mxu0
      %v2186 = vadd.f32 %v2097, %v2185
      %2187 = vmatmul.bf16.gmra.mxu0 %v1285
      %v2188 = vpop.f32.mrf.mxu0
      %v2189 = vadd.f32 %v2100, %v2188
      %v2190 = vpop.f32.mrf.mxu0
      %v2191 = vadd.f32 %v2102, %v2190
      %2192 = vmatmul.bf16.gmra.mxu0 %v1297
      %v2193 = vpop.f32.mrf.mxu0
      %v2194 = vadd.f32 %v2105, %v2193
      %v2195 = vpop.f32.mrf.mxu0
      %v2196 = vadd.f32 %v2107, %v2195
      %2197 = vmatmul.bf16.gmra.mxu0 %v1309
      %v2198 = vpop.f32.mrf.mxu0
      %v2199 = vadd.f32 %v2110, %v2198
      %v2200 = vpop.f32.mrf.mxu0
      %v2201 = vadd.f32 %v2112, %v2200
      %2202 = vmatmul.bf16.gmra.mxu0 %v1321
      %v2203 = vpop.f32.mrf.mxu0
      %v2204 = vadd.f32 %v2115, %v2203
      %v2205 = vpop.f32.mrf.mxu0
      %v2206 = vadd.f32 %v2117, %v2205
      %2207 = vdwg.mxu0
      %2208 = vmatpush.bf16.msra.mxu0 %v1909
      %2209 = vmatpush.bf16.msra.mxu0 %v1908
      %2210 = vmatpush.bf16.msra.mxu0 %v1907
      %2211 = vmatpush.bf16.msra.mxu0 %v1906
      %2212 = vmatpush.bf16.msra.mxu0 %v1905
      %2213 = vmatpush.bf16.msra.mxu0 %v1904
      %2214 = vmatpush.bf16.msra.mxu0 %v1903
      %2215 = vmatpush.bf16.msra.mxu0 %v1902
      %2216 = vmatmul.bf16.gmra.mxu0 %v1373
      %v2217 = vpop.f32.mrf.mxu0
      %v2218 = vadd.f32 %v2129, %v2217
      %v2219 = vpop.f32.mrf.mxu0
      %v2220 = vadd.f32 %v2131, %v2219
      %2221 = vmatmul.bf16.gmra.mxu0 %v1376
      %v2222 = vpop.f32.mrf.mxu0
      %v2223 = vadd.f32 %v2134, %v2222
      %v2224 = vpop.f32.mrf.mxu0
      %v2225 = vadd.f32 %v2136, %v2224
      %2226 = vmatmul.bf16.gmra.mxu0 %v1379
      %v2227 = vpop.f32.mrf.mxu0
      %v2228 = vadd.f32 %v2139, %v2227
      %v2229 = vpop.f32.mrf.mxu0
      %v2230 = vadd.f32 %v2141, %v2229
      %2231 = vmatmul.bf16.gmra.mxu0 %v1382
      %v2232 = vpop.f32.mrf.mxu0
      %v2233 = vadd.f32 %v2144, %v2232
      %v2234 = vpop.f32.mrf.mxu0
      %v2235 = vadd.f32 %v2146, %v2234
      %2236 = vmatmul.bf16.gmra.mxu0 %v1385
      %v2237 = vpop.f32.mrf.mxu0
      %v2238 = vadd.f32 %v2149, %v2237
      %v2239 = vpop.f32.mrf.mxu0
      %v2240 = vadd.f32 %v2151, %v2239
      %2241 = vmatmul.bf16.gmra.mxu0 %v1388
      %v2242 = vpop.f32.mrf.mxu0
      %v2243 = vadd.f32 %v2154, %v2242
      %v2244 = vpop.f32.mrf.mxu0
      %v2245 = vadd.f32 %v2156, %v2244
      %2246 = vmatmul.bf16.gmra.mxu0 %v1391
      %v2247 = vpop.f32.mrf.mxu0
      %v2248 = vadd.f32 %v2159, %v2247
      %v2249 = vpop.f32.mrf.mxu0
      %v2250 = vadd.f32 %v2161, %v2249
      %2251 = vmatmul.bf16.gmra.mxu0 %v1394
      %v2252 = vpop.f32.mrf.mxu0
      %v2253 = vadd.f32 %v2164, %v2252
      %v2254 = vpop.f32.mrf.mxu0
      %v2255 = vadd.f32 %v2166, %v2254
      %2256 = vmatmul.bf16.gmra.mxu0 %v1397
      %v2257 = vpop.f32.mrf.mxu0
      %v2258 = vadd.f32 %v2169, %v2257
      %v2259 = vpop.f32.mrf.mxu0
      %v2260 = vadd.f32 %v2171, %v2259
      %2261 = vmatmul.bf16.gmra.mxu0 %v1400
      %v2262 = vpop.f32.mrf.mxu0
      %v2263 = vadd.f32 %v2174, %v2262
      %v2264 = vpop.f32.mrf.mxu0
      %v2265 = vadd.f32 %v2176, %v2264
      %2266 = vmatmul.bf16.gmra.mxu0 %v1403
      %v2267 = vpop.f32.mrf.mxu0
      %v2268 = vadd.f32 %v2179, %v2267
      %v2269 = vpop.f32.mrf.mxu0
      %v2270 = vadd.f32 %v2181, %v2269
      %2271 = vmatmul.bf16.gmra.mxu0 %v1406
      %v2272 = vpop.f32.mrf.mxu0
      %v2273 = vadd.f32 %v2184, %v2272
      %v2274 = vpop.f32.mrf.mxu0
      %v2275 = vadd.f32 %v2186, %v2274
      %2276 = vmatmul.bf16.gmra.mxu0 %v1409
      %v2277 = vpop.f32.mrf.mxu0
      %v2278 = vadd.f32 %v2189, %v2277
      %v2279 = vpop.f32.mrf.mxu0
      %v2280 = vadd.f32 %v2191, %v2279
      %2281 = vmatmul.bf16.gmra.mxu0 %v1412
      %v2282 = vpop.f32.mrf.mxu0
      %v2283 = vadd.f32 %v2194, %v2282
      %v2284 = vpop.f32.mrf.mxu0
      %v2285 = vadd.f32 %v2196, %v2284
      %2286 = vmatmul.bf16.gmra.mxu0 %v1415
      %v2287 = vpop.f32.mrf.mxu0
      %v2288 = vadd.f32 %v2199, %v2287
      %v2289 = vpop.f32.mrf.mxu0
      %v2290 = vadd.f32 %v2201, %v2289
      %2291 = vmatmul.bf16.gmra.mxu0 %v1418
      %v2292 = vpop.f32.mrf.mxu0
      %v2293 = vadd.f32 %v2204, %v2292
      %v2294 = vpop.f32.mrf.mxu0
      %v2295 = vadd.f32 %v2206, %v2294
      %2296 = vdwg.mxu0
      %2297 = vmatpush.bf16.msra.mxu0 %v1917
      %2298 = vmatpush.bf16.msra.mxu0 %v1916
      %2299 = vmatpush.bf16.msra.mxu0 %v1915
      %2300 = vmatpush.bf16.msra.mxu0 %v1914
      %2301 = vmatpush.bf16.msra.mxu0 %v1913
      %2302 = vmatpush.bf16.msra.mxu0 %v1912
      %2303 = vmatpush.bf16.msra.mxu0 %v1911
      %2304 = vmatpush.bf16.msra.mxu0 %v1910
      %2305 = vmatmul.bf16.gmra.mxu0 %v1096
      %v2306 = vpop.f32.mrf.mxu0
      %v2307 = vadd.f32 %v2218, %v2306
      %v2308 = vpop.f32.mrf.mxu0
      %v2309 = vadd.f32 %v2220, %v2308
      %2310 = vmatmul.bf16.gmra.mxu0 %v1097
      %v2311 = vpop.f32.mrf.mxu0
      %v2312 = vadd.f32 %v2223, %v2311
      %v2313 = vpop.f32.mrf.mxu0
      %v2314 = vadd.f32 %v2225, %v2313
      %2315 = vmatmul.bf16.gmra.mxu0 %v1098
      %v2316 = vpop.f32.mrf.mxu0
      %v2317 = vadd.f32 %v2228, %v2316
      %v2318 = vpop.f32.mrf.mxu0
      %v2319 = vadd.f32 %v2230, %v2318
      %2320 = vmatmul.bf16.gmra.mxu0 %v1099
      %v2321 = vpop.f32.mrf.mxu0
      %v2322 = vadd.f32 %v2233, %v2321
      %v2323 = vpop.f32.mrf.mxu0
      %v2324 = vadd.f32 %v2235, %v2323
      %2325 = vmatmul.bf16.gmra.mxu0 %v1100
      %v2326 = vpop.f32.mrf.mxu0
      %v2327 = vadd.f32 %v2238, %v2326
      %v2328 = vpop.f32.mrf.mxu0
      %v2329 = vadd.f32 %v2240, %v2328
      %2330 = vmatmul.bf16.gmra.mxu0 %v1101
      %v2331 = vpop.f32.mrf.mxu0
      %v2332 = vadd.f32 %v2243, %v2331
      %v2333 = vpop.f32.mrf.mxu0
      %v2334 = vadd.f32 %v2245, %v2333
      %2335 = vmatmul.bf16.gmra.mxu0 %v1102
      %v2336 = vpop.f32.mrf.mxu0
      %v2337 = vadd.f32 %v2248, %v2336
      %v2338 = vpop.f32.mrf.mxu0
      %v2339 = vadd.f32 %v2250, %v2338
      %2340 = vmatmul.bf16.gmra.mxu0 %v1103
      %v2341 = vpop.f32.mrf.mxu0
      %v2342 = vadd.f32 %v2253, %v2341
      %v2343 = vpop.f32.mrf.mxu0
      %v2344 = vadd.f32 %v2255, %v2343
      %2345 = vmatmul.bf16.gmra.mxu0 %v1104
      %v2346 = vpop.f32.mrf.mxu0
      %v2347 = vadd.f32 %v2258, %v2346
      %v2348 = vpop.f32.mrf.mxu0
      %v2349 = vadd.f32 %v2260, %v2348
      %2350 = vmatmul.bf16.gmra.mxu0 %v1105
      %v2351 = vpop.f32.mrf.mxu0
      %v2352 = vadd.f32 %v2263, %v2351
      %v2353 = vpop.f32.mrf.mxu0
      %v2354 = vadd.f32 %v2265, %v2353
      %2355 = vmatmul.bf16.gmra.mxu0 %v1106
      %v2356 = vpop.f32.mrf.mxu0
      %v2357 = vadd.f32 %v2268, %v2356
      %v2358 = vpop.f32.mrf.mxu0
      %v2359 = vadd.f32 %v2270, %v2358
      %2360 = vmatmul.bf16.gmra.mxu0 %v1107
      %v2361 = vpop.f32.mrf.mxu0
      %v2362 = vadd.f32 %v2273, %v2361
      %v2363 = vpop.f32.mrf.mxu0
      %v2364 = vadd.f32 %v2275, %v2363
      %2365 = vmatmul.bf16.gmra.mxu0 %v1108
      %v2366 = vpop.f32.mrf.mxu0
      %v2367 = vadd.f32 %v2278, %v2366
      %v2368 = vpop.f32.mrf.mxu0
      %v2369 = vadd.f32 %v2280, %v2368
      %2370 = vmatmul.bf16.gmra.mxu0 %v1109
      %v2371 = vpop.f32.mrf.mxu0
      %v2372 = vadd.f32 %v2283, %v2371
      %v2373 = vpop.f32.mrf.mxu0
      %v2374 = vadd.f32 %v2285, %v2373
      %2375 = vmatmul.bf16.gmra.mxu0 %v1110
      %v2376 = vpop.f32.mrf.mxu0
      %v2377 = vadd.f32 %v2288, %v2376
      %v2378 = vpop.f32.mrf.mxu0
      %v2379 = vadd.f32 %v2290, %v2378
      %2380 = vmatmul.bf16.gmra.mxu0 %v1111
      %v2381 = vpop.f32.mrf.mxu0
      %v2382 = vadd.f32 %v2293, %v2381
      %v2383 = vpop.f32.mrf.mxu0
      %v2384 = vadd.f32 %v2295, %v2383
      %2385 = vdwg.mxu0
      %2386 = vmatpush.bf16.msra.mxu0 %v1925
      %2387 = vmatpush.bf16.msra.mxu0 %v1924
      %2388 = vmatpush.bf16.msra.mxu0 %v1923
      %2389 = vmatpush.bf16.msra.mxu0 %v1922
      %2390 = vmatpush.bf16.msra.mxu0 %v1921
      %2391 = vmatpush.bf16.msra.mxu0 %v1920
      %2392 = vmatpush.bf16.msra.mxu0 %v1919
      %2393 = vmatpush.bf16.msra.mxu0 %v1918
      %2394 = vmatmul.bf16.gmra.mxu0 %v1153
      %v2395 = vpop.f32.mrf.mxu0
      %v2396 = vadd.f32 %v2307, %v2395
      %v2397 = vpop.f32.mrf.mxu0
      %v2398 = vadd.f32 %v2309, %v2397
      %2399 = vmatmul.bf16.gmra.mxu0 %v1165
      %v2400 = vpop.f32.mrf.mxu0
      %v2401 = vadd.f32 %v2312, %v2400
      %v2402 = vpop.f32.mrf.mxu0
      %v2403 = vadd.f32 %v2314, %v2402
      %2404 = vmatmul.bf16.gmra.mxu0 %v1177
      %v2405 = vpop.f32.mrf.mxu0
      %v2406 = vadd.f32 %v2317, %v2405
      %v2407 = vpop.f32.mrf.mxu0
      %v2408 = vadd.f32 %v2319, %v2407
      %2409 = vmatmul.bf16.gmra.mxu0 %v1189
      %v2410 = vpop.f32.mrf.mxu0
      %v2411 = vadd.f32 %v2322, %v2410
      %v2412 = vpop.f32.mrf.mxu0
      %v2413 = vadd.f32 %v2324, %v2412
      %2414 = vmatmul.bf16.gmra.mxu0 %v1201
      %v2415 = vpop.f32.mrf.mxu0
      %v2416 = vadd.f32 %v2327, %v2415
      %v2417 = vpop.f32.mrf.mxu0
      %v2418 = vadd.f32 %v2329, %v2417
      %2419 = vmatmul.bf16.gmra.mxu0 %v1213
      %v2420 = vpop.f32.mrf.mxu0
      %v2421 = vadd.f32 %v2332, %v2420
      %v2422 = vpop.f32.mrf.mxu0
      %v2423 = vadd.f32 %v2334, %v2422
      %2424 = vmatmul.bf16.gmra.mxu0 %v1225
      %v2425 = vpop.f32.mrf.mxu0
      %v2426 = vadd.f32 %v2337, %v2425
      %v2427 = vpop.f32.mrf.mxu0
      %v2428 = vadd.f32 %v2339, %v2427
      %2429 = vmatmul.bf16.gmra.mxu0 %v1237
      %v2430 = vpop.f32.mrf.mxu0
      %v2431 = vadd.f32 %v2342, %v2430
      %v2432 = vpop.f32.mrf.mxu0
      %v2433 = vadd.f32 %v2344, %v2432
      %2434 = vmatmul.bf16.gmra.mxu0 %v1249
      %v2435 = vpop.f32.mrf.mxu0
      %v2436 = vadd.f32 %v2347, %v2435
      %v2437 = vpop.f32.mrf.mxu0
      %v2438 = vadd.f32 %v2349, %v2437
      %2439 = vmatmul.bf16.gmra.mxu0 %v1261
      %v2440 = vpop.f32.mrf.mxu0
      %v2441 = vadd.f32 %v2352, %v2440
      %v2442 = vpop.f32.mrf.mxu0
      %v2443 = vadd.f32 %v2354, %v2442
      %2444 = vmatmul.bf16.gmra.mxu0 %v1273
      %v2445 = vpop.f32.mrf.mxu0
      %v2446 = vadd.f32 %v2357, %v2445
      %v2447 = vpop.f32.mrf.mxu0
      %v2448 = vadd.f32 %v2359, %v2447
      %2449 = vmatmul.bf16.gmra.mxu0 %v1285
      %v2450 = vpop.f32.mrf.mxu0
      %v2451 = vadd.f32 %v2362, %v2450
      %v2452 = vpop.f32.mrf.mxu0
      %v2453 = vadd.f32 %v2364, %v2452
      %2454 = vmatmul.bf16.gmra.mxu0 %v1297
      %v2455 = vpop.f32.mrf.mxu0
      %v2456 = vadd.f32 %v2367, %v2455
      %v2457 = vpop.f32.mrf.mxu0
      %v2458 = vadd.f32 %v2369, %v2457
      %2459 = vmatmul.bf16.gmra.mxu0 %v1309
      %v2460 = vpop.f32.mrf.mxu0
      %v2461 = vadd.f32 %v2372, %v2460
      %v2462 = vpop.f32.mrf.mxu0
      %v2463 = vadd.f32 %v2374, %v2462
      %2464 = vmatmul.bf16.gmra.mxu0 %v1321
      %v2465 = vpop.f32.mrf.mxu0
      %v2466 = vadd.f32 %v2377, %v2465
      %v2467 = vpop.f32.mrf.mxu0
      %v2468 = vadd.f32 %v2379, %v2467
      %2469 = vmatmul.bf16.gmra.mxu0 %v1446
      %v2470 = vpop.f32.mrf.mxu0
      %v2471 = vadd.f32 %v2382, %v2470
      %v2472 = vpop.f32.mrf.mxu0
      %v2473 = vadd.f32 %v2384, %v2472
      %2474 = vdwg.mxu0
      %2475 = vmatpush.bf16.msra.mxu0 %v1933
      %2476 = vmatpush.bf16.msra.mxu0 %v1932
      %2477 = vmatpush.bf16.msra.mxu0 %v1931
      %2478 = vmatpush.bf16.msra.mxu0 %v1930
      %2479 = vmatpush.bf16.msra.mxu0 %v1929
      %2480 = vmatpush.bf16.msra.mxu0 %v1928
      %2481 = vmatpush.bf16.msra.mxu0 %v1927
      %2482 = vmatpush.bf16.msra.mxu0 %v1926
      %2483 = vmatmul.bf16.gmra.mxu0 %v1376
      %v2484 = vpop.f32.mrf.mxu0
      %v2485 = vadd.f32 %v2396, %v2484
      %v2486 = vpop.f32.mrf.mxu0
      %v2487 = vadd.f32 %v2398, %v2486
      %2488 = vmatmul.bf16.gmra.mxu0 %v1379
      %v2489 = vpop.f32.mrf.mxu0
      %v2490 = vadd.f32 %v2401, %v2489
      %v2491 = vpop.f32.mrf.mxu0
      %v2492 = vadd.f32 %v2403, %v2491
      %2493 = vmatmul.bf16.gmra.mxu0 %v1382
      %v2494 = vpop.f32.mrf.mxu0
      %v2495 = vadd.f32 %v2406, %v2494
      %v2496 = vpop.f32.mrf.mxu0
      %v2497 = vadd.f32 %v2408, %v2496
      %2498 = vmatmul.bf16.gmra.mxu0 %v1385
      %v2499 = vpop.f32.mrf.mxu0
      %v2500 = vadd.f32 %v2411, %v2499
      %v2501 = vpop.f32.mrf.mxu0
      %v2502 = vadd.f32 %v2413, %v2501
      %2503 = vmatmul.bf16.gmra.mxu0 %v1388
      %v2504 = vpop.f32.mrf.mxu0
      %v2505 = vadd.f32 %v2416, %v2504
      %v2506 = vpop.f32.mrf.mxu0
      %v2507 = vadd.f32 %v2418, %v2506
      %2508 = vmatmul.bf16.gmra.mxu0 %v1391
      %v2509 = vpop.f32.mrf.mxu0
      %v2510 = vadd.f32 %v2421, %v2509
      %v2511 = vpop.f32.mrf.mxu0
      %v2512 = vadd.f32 %v2423, %v2511
      %2513 = vmatmul.bf16.gmra.mxu0 %v1394
      %v2514 = vpop.f32.mrf.mxu0
      %v2515 = vadd.f32 %v2426, %v2514
      %v2516 = vpop.f32.mrf.mxu0
      %v2517 = vadd.f32 %v2428, %v2516
      %2518 = vmatmul.bf16.gmra.mxu0 %v1397
      %v2519 = vpop.f32.mrf.mxu0
      %v2520 = vadd.f32 %v2431, %v2519
      %v2521 = vpop.f32.mrf.mxu0
      %v2522 = vadd.f32 %v2433, %v2521
      %2523 = vmatmul.bf16.gmra.mxu0 %v1400
      %v2524 = vpop.f32.mrf.mxu0
      %v2525 = vadd.f32 %v2436, %v2524
      %v2526 = vpop.f32.mrf.mxu0
      %v2527 = vadd.f32 %v2438, %v2526
      %2528 = vmatmul.bf16.gmra.mxu0 %v1403
      %v2529 = vpop.f32.mrf.mxu0
      %v2530 = vadd.f32 %v2441, %v2529
      %v2531 = vpop.f32.mrf.mxu0
      %v2532 = vadd.f32 %v2443, %v2531
      %2533 = vmatmul.bf16.gmra.mxu0 %v1406
      %v2534 = vpop.f32.mrf.mxu0
      %v2535 = vadd.f32 %v2446, %v2534
      %v2536 = vpop.f32.mrf.mxu0
      %v2537 = vadd.f32 %v2448, %v2536
      %2538 = vmatmul.bf16.gmra.mxu0 %v1409
      %v2539 = vpop.f32.mrf.mxu0
      %v2540 = vadd.f32 %v2451, %v2539
      %v2541 = vpop.f32.mrf.mxu0
      %v2542 = vadd.f32 %v2453, %v2541
      %2543 = vmatmul.bf16.gmra.mxu0 %v1412
      %v2544 = vpop.f32.mrf.mxu0
      %v2545 = vadd.f32 %v2456, %v2544
      %v2546 = vpop.f32.mrf.mxu0
      %v2547 = vadd.f32 %v2458, %v2546
      %2548 = vmatmul.bf16.gmra.mxu0 %v1415
      %v2549 = vpop.f32.mrf.mxu0
      %v2550 = vadd.f32 %v2461, %v2549
      %v2551 = vpop.f32.mrf.mxu0
      %v2552 = vadd.f32 %v2463, %v2551
      %2553 = vmatmul.bf16.gmra.mxu0 %v1418
      %v2554 = vpop.f32.mrf.mxu0
      %v2555 = vadd.f32 %v2466, %v2554
      %v2556 = vpop.f32.mrf.mxu0
      %v2557 = vadd.f32 %v2468, %v2556
      %2558 = vmatmul.bf16.gmra.mxu0 %v1452
      %v2559 = vpop.f32.mrf.mxu0
      %v2560 = vadd.f32 %v2471, %v2559
      %v2561 = vpop.f32.mrf.mxu0
      %v2562 = vadd.f32 %v2473, %v2561
      %2563 = vdwg.mxu0
      %2564 = vmatpush.bf16.msra.mxu0 %v1941
      %2565 = vmatpush.bf16.msra.mxu0 %v1940
      %2566 = vmatpush.bf16.msra.mxu0 %v1939
      %2567 = vmatpush.bf16.msra.mxu0 %v1938
      %2568 = vmatpush.bf16.msra.mxu0 %v1937
      %2569 = vmatpush.bf16.msra.mxu0 %v1936
      %2570 = vmatpush.bf16.msra.mxu0 %v1935
      %2571 = vmatpush.bf16.msra.mxu0 %v1934
      %2572 = vmatmul.bf16.gmra.mxu0 %v1097
      %v2573 = vpop.f32.mrf.mxu0
      %v2574 = vadd.f32 %v2485, %v2573
      %v2575 = vpop.f32.mrf.mxu0
      %v2576 = vadd.f32 %v2487, %v2575
      %2577 = vmatmul.bf16.gmra.mxu0 %v1098
      %v2578 = vpop.f32.mrf.mxu0
      %v2579 = vadd.f32 %v2490, %v2578
      %v2580 = vpop.f32.mrf.mxu0
      %v2581 = vadd.f32 %v2492, %v2580
      %2582 = vmatmul.bf16.gmra.mxu0 %v1099
      %v2583 = vpop.f32.mrf.mxu0
      %v2584 = vadd.f32 %v2495, %v2583
      %v2585 = vpop.f32.mrf.mxu0
      %v2586 = vadd.f32 %v2497, %v2585
      %2587 = vmatmul.bf16.gmra.mxu0 %v1100
      %v2588 = vpop.f32.mrf.mxu0
      %v2589 = vadd.f32 %v2500, %v2588
      %v2590 = vpop.f32.mrf.mxu0
      %v2591 = vadd.f32 %v2502, %v2590
      %2592 = vmatmul.bf16.gmra.mxu0 %v1101
      %v2593 = vpop.f32.mrf.mxu0
      %v2594 = vadd.f32 %v2505, %v2593
      %v2595 = vpop.f32.mrf.mxu0
      %v2596 = vadd.f32 %v2507, %v2595
      %2597 = vmatmul.bf16.gmra.mxu0 %v1102
      %v2598 = vpop.f32.mrf.mxu0
      %v2599 = vadd.f32 %v2510, %v2598
      %v2600 = vpop.f32.mrf.mxu0
      %v2601 = vadd.f32 %v2512, %v2600
      %2602 = vmatmul.bf16.gmra.mxu0 %v1103
      %v2603 = vpop.f32.mrf.mxu0
      %v2604 = vadd.f32 %v2515, %v2603
      %v2605 = vpop.f32.mrf.mxu0
      %v2606 = vadd.f32 %v2517, %v2605
      %2607 = vmatmul.bf16.gmra.mxu0 %v1104
      %v2608 = vpop.f32.mrf.mxu0
      %v2609 = vadd.f32 %v2520, %v2608
      %v2610 = vpop.f32.mrf.mxu0
      %v2611 = vadd.f32 %v2522, %v2610
      %2612 = vmatmul.bf16.gmra.mxu0 %v1105
      %v2613 = vpop.f32.mrf.mxu0
      %v2614 = vadd.f32 %v2525, %v2613
      %v2615 = vpop.f32.mrf.mxu0
      %v2616 = vadd.f32 %v2527, %v2615
      %2617 = vmatmul.bf16.gmra.mxu0 %v1106
      %v2618 = vpop.f32.mrf.mxu0
      %v2619 = vadd.f32 %v2530, %v2618
      %v2620 = vpop.f32.mrf.mxu0
      %v2621 = vadd.f32 %v2532, %v2620
      %2622 = vmatmul.bf16.gmra.mxu0 %v1107
      %v2623 = vpop.f32.mrf.mxu0
      %v2624 = vadd.f32 %v2535, %v2623
      %v2625 = vpop.f32.mrf.mxu0
      %v2626 = vadd.f32 %v2537, %v2625
      %2627 = vmatmul.bf16.gmra.mxu0 %v1108
      %v2628 = vpop.f32.mrf.mxu0
      %v2629 = vadd.f32 %v2540, %v2628
      %v2630 = vpop.f32.mrf.mxu0
      %v2631 = vadd.f32 %v2542, %v2630
      %2632 = vmatmul.bf16.gmra.mxu0 %v1109
      %v2633 = vpop.f32.mrf.mxu0
      %v2634 = vadd.f32 %v2545, %v2633
      %v2635 = vpop.f32.mrf.mxu0
      %v2636 = vadd.f32 %v2547, %v2635
      %2637 = vmatmul.bf16.gmra.mxu0 %v1110
      %v2638 = vpop.f32.mrf.mxu0
      %v2639 = vadd.f32 %v2550, %v2638
      %v2640 = vpop.f32.mrf.mxu0
      %v2641 = vadd.f32 %v2552, %v2640
      %2642 = vmatmul.bf16.gmra.mxu0 %v1111
      %v2643 = vpop.f32.mrf.mxu0
      %v2644 = vadd.f32 %v2555, %v2643
      %v2645 = vpop.f32.mrf.mxu0
      %v2646 = vadd.f32 %v2557, %v2645
      %2647 = vmatmul.bf16.gmra.mxu0 %v1095
      %v2648 = vpop.f32.mrf.mxu0
      %v2649 = vadd.f32 %v2560, %v2648
      %v2650 = vpop.f32.mrf.mxu0
      %v2651 = vadd.f32 %v2562, %v2650
      %2652 = vdwg.mxu0
      %2653 = vmatpush.bf16.msra.mxu0 %v1949
      %2654 = vmatpush.bf16.msra.mxu0 %v1948
      %2655 = vmatpush.bf16.msra.mxu0 %v1947
      %2656 = vmatpush.bf16.msra.mxu0 %v1946
      %2657 = vmatpush.bf16.msra.mxu0 %v1945
      %2658 = vmatpush.bf16.msra.mxu0 %v1944
      %2659 = vmatpush.bf16.msra.mxu0 %v1943
      %2660 = vmatpush.bf16.msra.mxu0 %v1942
      %2661 = vmatmul.bf16.gmra.mxu0 %v1165
      %v2662 = vpop.f32.mrf.mxu0
      %v2663 = vadd.f32 %v2574, %v2662
      %v2664 = vpop.f32.mrf.mxu0
      %v2665 = vadd.f32 %v2576, %v2664
      %2666 = vmatmul.bf16.gmra.mxu0 %v1177
      %v2667 = vpop.f32.mrf.mxu0
      %v2668 = vadd.f32 %v2579, %v2667
      %v2669 = vpop.f32.mrf.mxu0
      %v2670 = vadd.f32 %v2581, %v2669
      %2671 = vmatmul.bf16.gmra.mxu0 %v1189
      %v2672 = vpop.f32.mrf.mxu0
      %v2673 = vadd.f32 %v2584, %v2672
      %v2674 = vpop.f32.mrf.mxu0
      %v2675 = vadd.f32 %v2586, %v2674
      %2676 = vmatmul.bf16.gmra.mxu0 %v1201
      %v2677 = vpop.f32.mrf.mxu0
      %v2678 = vadd.f32 %v2589, %v2677
      %v2679 = vpop.f32.mrf.mxu0
      %v2680 = vadd.f32 %v2591, %v2679
      %2681 = vmatmul.bf16.gmra.mxu0 %v1213
      %v2682 = vpop.f32.mrf.mxu0
      %v2683 = vadd.f32 %v2594, %v2682
      %v2684 = vpop.f32.mrf.mxu0
      %v2685 = vadd.f32 %v2596, %v2684
      %2686 = vmatmul.bf16.gmra.mxu0 %v1225
      %v2687 = vpop.f32.mrf.mxu0
      %v2688 = vadd.f32 %v2599, %v2687
      %v2689 = vpop.f32.mrf.mxu0
      %v2690 = vadd.f32 %v2601, %v2689
      %2691 = vmatmul.bf16.gmra.mxu0 %v1237
      %v2692 = vpop.f32.mrf.mxu0
      %v2693 = vadd.f32 %v2604, %v2692
      %v2694 = vpop.f32.mrf.mxu0
      %v2695 = vadd.f32 %v2606, %v2694
      %2696 = vmatmul.bf16.gmra.mxu0 %v1249
      %v2697 = vpop.f32.mrf.mxu0
      %v2698 = vadd.f32 %v2609, %v2697
      %v2699 = vpop.f32.mrf.mxu0
      %v2700 = vadd.f32 %v2611, %v2699
      %2701 = vmatmul.bf16.gmra.mxu0 %v1261
      %v2702 = vpop.f32.mrf.mxu0
      %v2703 = vadd.f32 %v2614, %v2702
      %v2704 = vpop.f32.mrf.mxu0
      %v2705 = vadd.f32 %v2616, %v2704
      %2706 = vmatmul.bf16.gmra.mxu0 %v1273
      %v2707 = vpop.f32.mrf.mxu0
      %v2708 = vadd.f32 %v2619, %v2707
      %v2709 = vpop.f32.mrf.mxu0
      %v2710 = vadd.f32 %v2621, %v2709
      %2711 = vmatmul.bf16.gmra.mxu0 %v1285
      %v2712 = vpop.f32.mrf.mxu0
      %v2713 = vadd.f32 %v2624, %v2712
      %v2714 = vpop.f32.mrf.mxu0
      %v2715 = vadd.f32 %v2626, %v2714
      %2716 = vmatmul.bf16.gmra.mxu0 %v1297
      %v2717 = vpop.f32.mrf.mxu0
      %v2718 = vadd.f32 %v2629, %v2717
      %v2719 = vpop.f32.mrf.mxu0
      %v2720 = vadd.f32 %v2631, %v2719
      %2721 = vmatmul.bf16.gmra.mxu0 %v1309
      %v2722 = vpop.f32.mrf.mxu0
      %v2723 = vadd.f32 %v2634, %v2722
      %v2724 = vpop.f32.mrf.mxu0
      %v2725 = vadd.f32 %v2636, %v2724
      %2726 = vmatmul.bf16.gmra.mxu0 %v1321
      %v2727 = vpop.f32.mrf.mxu0
      %v2728 = vadd.f32 %v2639, %v2727
      %v2729 = vpop.f32.mrf.mxu0
      %v2730 = vadd.f32 %v2641, %v2729
      %2731 = vmatmul.bf16.gmra.mxu0 %v1446
      %v2732 = vpop.f32.mrf.mxu0
      %v2733 = vadd.f32 %v2644, %v2732
      %v2734 = vpop.f32.mrf.mxu0
      %v2735 = vadd.f32 %v2646, %v2734
      %2736 = vmatmul.bf16.gmra.mxu0 %v1141
      %v2737 = vpop.f32.mrf.mxu0
      %v2738 = vadd.f32 %v2649, %v2737
      %v2739 = vpop.f32.mrf.mxu0
      %v2740 = vadd.f32 %v2651, %v2739
      %2741 = vdwg.mxu0
      %2742 = vmatpush.bf16.msra.mxu0 %v1957
      %2743 = vmatpush.bf16.msra.mxu0 %v1956
      %2744 = vmatpush.bf16.msra.mxu0 %v1955
      %2745 = vmatpush.bf16.msra.mxu0 %v1954
      %2746 = vmatpush.bf16.msra.mxu0 %v1953
      %2747 = vmatpush.bf16.msra.mxu0 %v1952
      %2748 = vmatpush.bf16.msra.mxu0 %v1951
      %2749 = vmatpush.bf16.msra.mxu0 %v1950
      %2750 = vmatmul.bf16.gmra.mxu0 %v1379
      %v2751 = vpop.f32.mrf.mxu0
      %v2752 = vadd.f32 %v2663, %v2751
      %v2753 = vpop.f32.mrf.mxu0
      %v2754 = vadd.f32 %v2665, %v2753
      %2755 = vmatmul.bf16.gmra.mxu0 %v1382
      %v2756 = vpop.f32.mrf.mxu0
      %v2757 = vadd.f32 %v2668, %v2756
      %v2758 = vpop.f32.mrf.mxu0
      %v2759 = vadd.f32 %v2670, %v2758
      %2760 = vmatmul.bf16.gmra.mxu0 %v1385
      %v2761 = vpop.f32.mrf.mxu0
      %v2762 = vadd.f32 %v2673, %v2761
      %v2763 = vpop.f32.mrf.mxu0
      %v2764 = vadd.f32 %v2675, %v2763
      %2765 = vmatmul.bf16.gmra.mxu0 %v1388
      %v2766 = vpop.f32.mrf.mxu0
      %v2767 = vadd.f32 %v2678, %v2766
      %v2768 = vpop.f32.mrf.mxu0
      %v2769 = vadd.f32 %v2680, %v2768
      %2770 = vmatmul.bf16.gmra.mxu0 %v1391
      %v2771 = vpop.f32.mrf.mxu0
      %v2772 = vadd.f32 %v2683, %v2771
      %v2773 = vpop.f32.mrf.mxu0
      %v2774 = vadd.f32 %v2685, %v2773
      %2775 = vmatmul.bf16.gmra.mxu0 %v1394
      %v2776 = vpop.f32.mrf.mxu0
      %v2777 = vadd.f32 %v2688, %v2776
      %v2778 = vpop.f32.mrf.mxu0
      %v2779 = vadd.f32 %v2690, %v2778
      %2780 = vmatmul.bf16.gmra.mxu0 %v1397
      %v2781 = vpop.f32.mrf.mxu0
      %v2782 = vadd.f32 %v2693, %v2781
      %v2783 = vpop.f32.mrf.mxu0
      %v2784 = vadd.f32 %v2695, %v2783
      %2785 = vmatmul.bf16.gmra.mxu0 %v1400
      %v2786 = vpop.f32.mrf.mxu0
      %v2787 = vadd.f32 %v2698, %v2786
      %v2788 = vpop.f32.mrf.mxu0
      %v2789 = vadd.f32 %v2700, %v2788
      %2790 = vmatmul.bf16.gmra.mxu0 %v1403
      %v2791 = vpop.f32.mrf.mxu0
      %v2792 = vadd.f32 %v2703, %v2791
      %v2793 = vpop.f32.mrf.mxu0
      %v2794 = vadd.f32 %v2705, %v2793
      %2795 = vmatmul.bf16.gmra.mxu0 %v1406
      %v2796 = vpop.f32.mrf.mxu0
      %v2797 = vadd.f32 %v2708, %v2796
      %v2798 = vpop.f32.mrf.mxu0
      %v2799 = vadd.f32 %v2710, %v2798
      %2800 = vmatmul.bf16.gmra.mxu0 %v1409
      %v2801 = vpop.f32.mrf.mxu0
      %v2802 = vadd.f32 %v2713, %v2801
      %v2803 = vpop.f32.mrf.mxu0
      %v2804 = vadd.f32 %v2715, %v2803
      %2805 = vmatmul.bf16.gmra.mxu0 %v1412
      %v2806 = vpop.f32.mrf.mxu0
      %v2807 = vadd.f32 %v2718, %v2806
      %v2808 = vpop.f32.mrf.mxu0
      %v2809 = vadd.f32 %v2720, %v2808
      %2810 = vmatmul.bf16.gmra.mxu0 %v1415
      %v2811 = vpop.f32.mrf.mxu0
      %v2812 = vadd.f32 %v2723, %v2811
      %v2813 = vpop.f32.mrf.mxu0
      %v2814 = vadd.f32 %v2725, %v2813
      %2815 = vmatmul.bf16.gmra.mxu0 %v1418
      %v2816 = vpop.f32.mrf.mxu0
      %v2817 = vadd.f32 %v2728, %v2816
      %v2818 = vpop.f32.mrf.mxu0
      %v2819 = vadd.f32 %v2730, %v2818
      %2820 = vmatmul.bf16.gmra.mxu0 %v1452
      %v2821 = vpop.f32.mrf.mxu0
      %v2822 = vadd.f32 %v2733, %v2821
      %v2823 = vpop.f32.mrf.mxu0
      %v2824 = vadd.f32 %v2735, %v2823
      %2825 = vmatmul.bf16.gmra.mxu0 %v1373
      %v2826 = vpop.f32.mrf.mxu0
      %v2827 = vadd.f32 %v2738, %v2826
      %v2828 = vpop.f32.mrf.mxu0
      %v2829 = vadd.f32 %v2740, %v2828
      %2830 = vdwg.mxu0
      %v2831 = vld [vmem:[%s5] sm:$0x1]
      %v2833 = vperm.slane %v2831, 0
      %v2835 = vmul.f32 %v2752, %v2833
      %v2836 = vmul.f32 %v2754, %v2833
      %v2837 = vmul.f32 %v2757, %v2833
      %v2838 = vmul.f32 %v2759, %v2833
      %v2839 = vmul.f32 %v2762, %v2833
      %v2840 = vmul.f32 %v2764, %v2833
      %v2841 = vmul.f32 %v2767, %v2833
      %v2842 = vmul.f32 %v2769, %v2833
      %v2843 = vmul.f32 %v2772, %v2833
      %v2844 = vmul.f32 %v2774, %v2833
      %v2845 = vmul.f32 %v2777, %v2833
      %v2846 = vmul.f32 %v2779, %v2833
      %v2847 = vmul.f32 %v2782, %v2833
      %v2848 = vmul.f32 %v2784, %v2833
      %v2849 = vmul.f32 %v2787, %v2833
      %v2850 = vmul.f32 %v2789, %v2833
      %v2851 = vmul.f32 %v2792, %v2833
      %v2852 = vmul.f32 %v2794, %v2833
      %v2853 = vmul.f32 %v2797, %v2833
      %v2854 = vmul.f32 %v2799, %v2833
      %v2855 = vmul.f32 %v2802, %v2833
      %v2856 = vmul.f32 %v2804, %v2833
      %v2857 = vmul.f32 %v2807, %v2833
      %v2858 = vmul.f32 %v2809, %v2833
      %v2859 = vmul.f32 %v2812, %v2833
      %v2860 = vmul.f32 %v2814, %v2833
      %v2861 = vmul.f32 %v2817, %v2833
      %v2862 = vmul.f32 %v2819, %v2833
      %v2863 = vmul.f32 %v2822, %v2833
      %v2864 = vmul.f32 %v2824, %v2833
      %v2865 = vmul.f32 %v2827, %v2833
      %v2866 = vmul.f32 %v2829, %v2833
      %v2867 = vld [vmem:[%s6] sm:$0x1]
      %v2869 = vperm.slane %v2867, 0
      %v2871 = vadd.f32 %v2835, %v2869
      %v2872 = vadd.f32 %v2836, %v2869
      %v2873 = vadd.f32 %v2837, %v2869
      %v2874 = vadd.f32 %v2838, %v2869
      %v2875 = vadd.f32 %v2839, %v2869
      %v2876 = vadd.f32 %v2840, %v2869
      %v2877 = vadd.f32 %v2841, %v2869
      %v2878 = vadd.f32 %v2842, %v2869
      %v2879 = vadd.f32 %v2843, %v2869
      %v2880 = vadd.f32 %v2844, %v2869
      %v2881 = vadd.f32 %v2845, %v2869
      %v2882 = vadd.f32 %v2846, %v2869
      %v2883 = vadd.f32 %v2847, %v2869
      %v2884 = vadd.f32 %v2848, %v2869
      %v2885 = vadd.f32 %v2849, %v2869
      %v2886 = vadd.f32 %v2850, %v2869
      %v2887 = vadd.f32 %v2851, %v2869
      %v2888 = vadd.f32 %v2852, %v2869
      %v2889 = vadd.f32 %v2853, %v2869
      %v2890 = vadd.f32 %v2854, %v2869
      %v2891 = vadd.f32 %v2855, %v2869
      %v2892 = vadd.f32 %v2856, %v2869
      %v2893 = vadd.f32 %v2857, %v2869
      %v2894 = vadd.f32 %v2858, %v2869
      %v2895 = vadd.f32 %v2859, %v2869
      %v2896 = vadd.f32 %v2860, %v2869
      %v2897 = vadd.f32 %v2861, %v2869
      %v2898 = vadd.f32 %v2862, %v2869
      %v2899 = vadd.f32 %v2863, %v2869
      %v2900 = vadd.f32 %v2864, %v2869
      %v2901 = vadd.f32 %v2865, %v2869
      %v2902 = vadd.f32 %v2866, %v2869
      %v2903 = vmax.f32 %v2871, 0.0
      %v2904 = vmax.f32 %v2872, 0.0
      %v2905 = vmax.f32 %v2873, 0.0
      %v2906 = vmax.f32 %v2874, 0.0
      %v2907 = vmax.f32 %v2875, 0.0
      %v2908 = vmax.f32 %v2876, 0.0
      %v2909 = vmax.f32 %v2877, 0.0
      %v2910 = vmax.f32 %v2878, 0.0
      %v2911 = vmax.f32 %v2879, 0.0
      %v2912 = vmax.f32 %v2880, 0.0
      %v2913 = vmax.f32 %v2881, 0.0
      %v2914 = vmax.f32 %v2882, 0.0
      %v2915 = vmax.f32 %v2883, 0.0
      %v2916 = vmax.f32 %v2884, 0.0
      %v2917 = vmax.f32 %v2885, 0.0
      %v2918 = vmax.f32 %v2886, 0.0
      %v2919 = vmax.f32 %v2887, 0.0
      %v2920 = vmax.f32 %v2888, 0.0
      %v2921 = vmax.f32 %v2889, 0.0
      %v2922 = vmax.f32 %v2890, 0.0
      %v2923 = vmax.f32 %v2891, 0.0
      %v2924 = vmax.f32 %v2892, 0.0
      %v2925 = vmax.f32 %v2893, 0.0
      %v2926 = vmax.f32 %v2894, 0.0
      %v2927 = vmax.f32 %v2895, 0.0
      %v2928 = vmax.f32 %v2896, 0.0
      %v2929 = vmax.f32 %v2897, 0.0
      %v2930 = vmax.f32 %v2898, 0.0
      %v2931 = vmax.f32 %v2899, 0.0
      %v2932 = vmax.f32 %v2900, 0.0
      %v2933 = vmax.f32 %v2901, 0.0
      %v2934 = vmax.f32 %v2902, 0.0
      %v2935 = vpack.c.bf16 %v2904, %v2903
      %v2936 = vpack.c.bf16 %v2906, %v2905
      %v2937 = vpack.c.bf16 %v2908, %v2907
      %v2938 = vpack.c.bf16 %v2910, %v2909
      %v2939 = vpack.c.bf16 %v2912, %v2911
      %v2940 = vpack.c.bf16 %v2914, %v2913
      %v2941 = vpack.c.bf16 %v2916, %v2915
      %v2942 = vpack.c.bf16 %v2918, %v2917
      %v2943 = vpack.c.bf16 %v2920, %v2919
      %v2944 = vpack.c.bf16 %v2922, %v2921
      %v2945 = vpack.c.bf16 %v2924, %v2923
      %v2946 = vpack.c.bf16 %v2926, %v2925
      %v2947 = vpack.c.bf16 %v2928, %v2927
      %v2948 = vpack.c.bf16 %v2930, %v2929
      %v2949 = vpack.c.bf16 %v2932, %v2931
      %v2950 = vpack.c.bf16 %v2934, %v2933
      %v2951 = vld [vmem:[%s7] sm:$0xf]
      %v2952 = vld [vmem:[%s7 + $0x4] sm:$0xf]
      %v2953 = vld [vmem:[%s7 + $0x8] sm:$0xf]
      %v2954 = vld [vmem:[%s7 + $0xc] sm:$0xf]
      %v2955 = vld [vmem:[%s7 + $0x10] sm:$0xf]
      %v2956 = vld [vmem:[%s7 + $0x14] sm:$0xf]
      %v2957 = vld [vmem:[%s7 + $0x18] sm:$0xf]
      %v2958 = vld [vmem:[%s7 + $0x1c] sm:$0xf]
      %v2959 = vld [vmem:[%s7 + $0x20] sm:$0xf]
      %v2960 = vld [vmem:[%s7 + $0x24] sm:$0xf]
      %v2961 = vld [vmem:[%s7 + $0x28] sm:$0xf]
      %v2962 = vld [vmem:[%s7 + $0x2c] sm:$0xf]
      %v2963 = vld [vmem:[%s7 + $0x30] sm:$0xf]
      %v2964 = vld [vmem:[%s7 + $0x34] sm:$0xf]
      %v2965 = vld [vmem:[%s7 + $0x38] sm:$0xf]
      %v2966 = vld [vmem:[%s7 + $0x3c] sm:$0xf]
      %v2983 = vunpack.c.l.b16 %v2951
      %v2984 = vunpack.c.l.b16 %v2952
      %v2985 = vunpack.c.l.b16 %v2953
      %v2986 = vunpack.c.l.b16 %v2954
      %v2987 = vunpack.c.l.b16 %v2955
      %v2988 = vunpack.c.l.b16 %v2956
      %v2989 = vunpack.c.l.b16 %v2957
      %v2990 = vunpack.c.l.b16 %v2958
      %v2991 = vunpack.c.l.b16 %v2959
      %v2992 = vunpack.c.l.b16 %v2960
      %v2993 = vunpack.c.l.b16 %v2961
      %v2994 = vunpack.c.l.b16 %v2962
      %v2995 = vunpack.c.l.b16 %v2963
      %v2996 = vunpack.c.l.b16 %v2964
      %v2997 = vunpack.c.l.b16 %v2965
      %v2998 = vunpack.c.l.b16 %v2966
      %v2999 = vpack.c.b16 %v2984, %v2983
      %v3000 = vpack.c.b16 %v2986, %v2985
      %v3001 = vpack.c.b16 %v2988, %v2987
      %v3002 = vpack.c.b16 %v2990, %v2989
      %v3003 = vpack.c.b16 %v2992, %v2991
      %v3004 = vpack.c.b16 %v2994, %v2993
      %v3005 = vpack.c.b16 %v2996, %v2995
      %v3006 = vpack.c.b16 %v2998, %v2997
      %3015 = vmatpush.bf16.msra.mxu0 %v3006
      %3016 = vmatpush.bf16.msra.mxu0 %v3005
      %3017 = vmatpush.bf16.msra.mxu0 %v3004
      %3018 = vmatpush.bf16.msra.mxu0 %v3003
      %3019 = vmatpush.bf16.msra.mxu0 %v3002
      %3020 = vmatpush.bf16.msra.mxu0 %v3001
      %3021 = vmatpush.bf16.msra.mxu0 %v3000
      %3022 = vmatpush.bf16.msra.mxu0 %v2999
      %3023 = vmatmul.bf16.gmra.mxu0 %v2935
      %v3024 = vpop.f32.mrf.mxu0
      %v3025 = vadd.f32 0.0, %v3024
      %v3026 = vpop.f32.mrf.mxu0
      %v3027 = vadd.f32 0.0, %v3026
      %3028 = vmatmul.bf16.gmra.mxu0 %v2936
      %v3029 = vpop.f32.mrf.mxu0
      %v3030 = vadd.f32 0.0, %v3029
      %v3031 = vpop.f32.mrf.mxu0
      %v3032 = vadd.f32 0.0, %v3031
      %3033 = vmatmul.bf16.gmra.mxu0 %v2937
      %v3034 = vpop.f32.mrf.mxu0
      %v3035 = vadd.f32 0.0, %v3034
      %v3036 = vpop.f32.mrf.mxu0
      %v3037 = vadd.f32 0.0, %v3036
      %3038 = vmatmul.bf16.gmra.mxu0 %v2938
      %v3039 = vpop.f32.mrf.mxu0
      %v3040 = vadd.f32 0.0, %v3039
      %v3041 = vpop.f32.mrf.mxu0
      %v3042 = vadd.f32 0.0, %v3041
      %3043 = vmatmul.bf16.gmra.mxu0 %v2939
      %v3044 = vpop.f32.mrf.mxu0
      %v3045 = vadd.f32 0.0, %v3044
      %v3046 = vpop.f32.mrf.mxu0
      %v3047 = vadd.f32 0.0, %v3046
      %3048 = vmatmul.bf16.gmra.mxu0 %v2940
      %v3049 = vpop.f32.mrf.mxu0
      %v3050 = vadd.f32 0.0, %v3049
      %v3051 = vpop.f32.mrf.mxu0
      %v3052 = vadd.f32 0.0, %v3051
      %3053 = vmatmul.bf16.gmra.mxu0 %v2941
      %v3054 = vpop.f32.mrf.mxu0
      %v3055 = vadd.f32 0.0, %v3054
      %v3056 = vpop.f32.mrf.mxu0
      %v3057 = vadd.f32 0.0, %v3056
      %3058 = vmatmul.bf16.gmra.mxu0 %v2942
      %v3059 = vpop.f32.mrf.mxu0
      %v3060 = vadd.f32 0.0, %v3059
      %v3061 = vpop.f32.mrf.mxu0
      %v3062 = vadd.f32 0.0, %v3061
      %3063 = vmatmul.bf16.gmra.mxu0 %v2943
      %v3064 = vpop.f32.mrf.mxu0
      %v3065 = vadd.f32 0.0, %v3064
      %v3066 = vpop.f32.mrf.mxu0
      %v3067 = vadd.f32 0.0, %v3066
      %3068 = vmatmul.bf16.gmra.mxu0 %v2944
      %v3069 = vpop.f32.mrf.mxu0
      %v3070 = vadd.f32 0.0, %v3069
      %v3071 = vpop.f32.mrf.mxu0
      %v3072 = vadd.f32 0.0, %v3071
      %3073 = vmatmul.bf16.gmra.mxu0 %v2945
      %v3074 = vpop.f32.mrf.mxu0
      %v3075 = vadd.f32 0.0, %v3074
      %v3076 = vpop.f32.mrf.mxu0
      %v3077 = vadd.f32 0.0, %v3076
      %3078 = vmatmul.bf16.gmra.mxu0 %v2946
      %v3079 = vpop.f32.mrf.mxu0
      %v3080 = vadd.f32 0.0, %v3079
      %v3081 = vpop.f32.mrf.mxu0
      %v3082 = vadd.f32 0.0, %v3081
      %3083 = vmatmul.bf16.gmra.mxu0 %v2947
      %v3084 = vpop.f32.mrf.mxu0
      %v3085 = vadd.f32 0.0, %v3084
      %v3086 = vpop.f32.mrf.mxu0
      %v3087 = vadd.f32 0.0, %v3086
      %3088 = vmatmul.bf16.gmra.mxu0 %v2948
      %v3089 = vpop.f32.mrf.mxu0
      %v3090 = vadd.f32 0.0, %v3089
      %v3091 = vpop.f32.mrf.mxu0
      %v3092 = vadd.f32 0.0, %v3091
      %3093 = vmatmul.bf16.gmra.mxu0 %v2949
      %v3094 = vpop.f32.mrf.mxu0
      %v3095 = vadd.f32 0.0, %v3094
      %v3096 = vpop.f32.mrf.mxu0
      %v3097 = vadd.f32 0.0, %v3096
      %3098 = vmatmul.bf16.gmra.mxu0 %v2950
      %v3099 = vpop.f32.mrf.mxu0
      %v3100 = vadd.f32 0.0, %v3099
      %v3101 = vpop.f32.mrf.mxu0
      %v3102 = vadd.f32 0.0, %v3101
      %3103 = vdwg.mxu0
      %v3104 = vld [vmem:[%s8] sm:$0x1]
      %v3106 = vperm.slane %v3104, 0
      %v3108 = vmul.f32 %v3025, %v3106
      %v3109 = vmul.f32 %v3027, %v3106
      %v3110 = vmul.f32 %v3030, %v3106
      %v3111 = vmul.f32 %v3032, %v3106
      %v3112 = vmul.f32 %v3035, %v3106
      %v3113 = vmul.f32 %v3037, %v3106
      %v3114 = vmul.f32 %v3040, %v3106
      %v3115 = vmul.f32 %v3042, %v3106
      %v3116 = vmul.f32 %v3045, %v3106
      %v3117 = vmul.f32 %v3047, %v3106
      %v3118 = vmul.f32 %v3050, %v3106
      %v3119 = vmul.f32 %v3052, %v3106
      %v3120 = vmul.f32 %v3055, %v3106
      %v3121 = vmul.f32 %v3057, %v3106
      %v3122 = vmul.f32 %v3060, %v3106
      %v3123 = vmul.f32 %v3062, %v3106
      %v3124 = vmul.f32 %v3065, %v3106
      %v3125 = vmul.f32 %v3067, %v3106
      %v3126 = vmul.f32 %v3070, %v3106
      %v3127 = vmul.f32 %v3072, %v3106
      %v3128 = vmul.f32 %v3075, %v3106
      %v3129 = vmul.f32 %v3077, %v3106
      %v3130 = vmul.f32 %v3080, %v3106
      %v3131 = vmul.f32 %v3082, %v3106
      %v3132 = vmul.f32 %v3085, %v3106
      %v3133 = vmul.f32 %v3087, %v3106
      %v3134 = vmul.f32 %v3090, %v3106
      %v3135 = vmul.f32 %v3092, %v3106
      %v3136 = vmul.f32 %v3095, %v3106
      %v3137 = vmul.f32 %v3097, %v3106
      %v3138 = vmul.f32 %v3100, %v3106
      %v3139 = vmul.f32 %v3102, %v3106
      %v3140 = vld [vmem:[%s9] sm:$0x1]
      %v3142 = vperm.slane %v3140, 0
      %v3144 = vadd.f32 %v3108, %v3142
      %v3145 = vadd.f32 %v3109, %v3142
      %v3146 = vadd.f32 %v3110, %v3142
      %v3147 = vadd.f32 %v3111, %v3142
      %v3148 = vadd.f32 %v3112, %v3142
      %v3149 = vadd.f32 %v3113, %v3142
      %v3150 = vadd.f32 %v3114, %v3142
      %v3151 = vadd.f32 %v3115, %v3142
      %v3152 = vadd.f32 %v3116, %v3142
      %v3153 = vadd.f32 %v3117, %v3142
      %v3154 = vadd.f32 %v3118, %v3142
      %v3155 = vadd.f32 %v3119, %v3142
      %v3156 = vadd.f32 %v3120, %v3142
      %v3157 = vadd.f32 %v3121, %v3142
      %v3158 = vadd.f32 %v3122, %v3142
      %v3159 = vadd.f32 %v3123, %v3142
      %v3160 = vadd.f32 %v3124, %v3142
      %v3161 = vadd.f32 %v3125, %v3142
      %v3162 = vadd.f32 %v3126, %v3142
      %v3163 = vadd.f32 %v3127, %v3142
      %v3164 = vadd.f32 %v3128, %v3142
      %v3165 = vadd.f32 %v3129, %v3142
      %v3166 = vadd.f32 %v3130, %v3142
      %v3167 = vadd.f32 %v3131, %v3142
      %v3168 = vadd.f32 %v3132, %v3142
      %v3169 = vadd.f32 %v3133, %v3142
      %v3170 = vadd.f32 %v3134, %v3142
      %v3171 = vadd.f32 %v3135, %v3142
      %v3172 = vadd.f32 %v3136, %v3142
      %v3173 = vadd.f32 %v3137, %v3142
      %v3174 = vadd.f32 %v3138, %v3142
      %v3175 = vadd.f32 %v3139, %v3142
      %v3176 = vld [vmem:[%s10] sm:$0xf]
      %v3177 = vld [vmem:[%s10 + $0x4] sm:$0xf]
      %v3178 = vld [vmem:[%s10 + $0x8] sm:$0xf]
      %v3179 = vld [vmem:[%s10 + $0xc] sm:$0xf]
      %v3180 = vld [vmem:[%s10 + $0x10] sm:$0xf]
      %v3181 = vld [vmem:[%s10 + $0x14] sm:$0xf]
      %v3182 = vld [vmem:[%s10 + $0x18] sm:$0xf]
      %v3183 = vld [vmem:[%s10 + $0x1c] sm:$0xf]
      %v3184 = vld [vmem:[%s10 + $0x20] sm:$0xf]
      %v3185 = vld [vmem:[%s10 + $0x24] sm:$0xf]
      %v3186 = vld [vmem:[%s10 + $0x28] sm:$0xf]
      %v3187 = vld [vmem:[%s10 + $0x2c] sm:$0xf]
      %v3188 = vld [vmem:[%s10 + $0x30] sm:$0xf]
      %v3189 = vld [vmem:[%s10 + $0x34] sm:$0xf]
      %v3190 = vld [vmem:[%s10 + $0x38] sm:$0xf]
      %v3191 = vld [vmem:[%s10 + $0x3c] sm:$0xf]
      %v3208 = vunpack.c.l.b16 %v3176
      %v3209 = vunpack.c.l.b16 %v3177
      %v3210 = vunpack.c.l.b16 %v3178
      %v3211 = vunpack.c.l.b16 %v3179
      %v3212 = vunpack.c.l.b16 %v3180
      %v3213 = vunpack.c.l.b16 %v3181
      %v3214 = vunpack.c.l.b16 %v3182
      %v3215 = vunpack.c.l.b16 %v3183
      %v3216 = vunpack.c.l.b16 %v3184
      %v3217 = vunpack.c.l.b16 %v3185
      %v3218 = vunpack.c.l.b16 %v3186
      %v3219 = vunpack.c.l.b16 %v3187
      %v3220 = vunpack.c.l.b16 %v3188
      %v3221 = vunpack.c.l.b16 %v3189
      %v3222 = vunpack.c.l.b16 %v3190
      %v3223 = vunpack.c.l.b16 %v3191
      %v3224 = vpack.c.b16 %v3209, %v3208
      %v3225 = vpack.c.b16 %v3211, %v3210
      %v3226 = vpack.c.b16 %v3213, %v3212
      %v3227 = vpack.c.b16 %v3215, %v3214
      %v3228 = vpack.c.b16 %v3217, %v3216
      %v3229 = vpack.c.b16 %v3219, %v3218
      %v3230 = vpack.c.b16 %v3221, %v3220
      %v3231 = vpack.c.b16 %v3223, %v3222
      %3240 = vmatpush.bf16.msra.mxu0 %v3231
      %3241 = vmatpush.bf16.msra.mxu0 %v3230
      %3242 = vmatpush.bf16.msra.mxu0 %v3229
      %3243 = vmatpush.bf16.msra.mxu0 %v3228
      %3244 = vmatpush.bf16.msra.mxu0 %v3227
      %3245 = vmatpush.bf16.msra.mxu0 %v3226
      %3246 = vmatpush.bf16.msra.mxu0 %v3225
      %3247 = vmatpush.bf16.msra.mxu0 %v3224
      %3248 = vmatmul.bf16.gmra.mxu0 %v554
      %v3249 = vpop.f32.mrf.mxu0
      %v3250 = vadd.f32 0.0, %v3249
      %v3251 = vpop.f32.mrf.mxu0
      %v3252 = vadd.f32 0.0, %v3251
      %3253 = vmatmul.bf16.gmra.mxu0 %v555
      %v3254 = vpop.f32.mrf.mxu0
      %v3255 = vadd.f32 0.0, %v3254
      %v3256 = vpop.f32.mrf.mxu0
      %v3257 = vadd.f32 0.0, %v3256
      %3258 = vmatmul.bf16.gmra.mxu0 %v556
      %v3259 = vpop.f32.mrf.mxu0
      %v3260 = vadd.f32 0.0, %v3259
      %v3261 = vpop.f32.mrf.mxu0
      %v3262 = vadd.f32 0.0, %v3261
      %3263 = vmatmul.bf16.gmra.mxu0 %v557
      %v3264 = vpop.f32.mrf.mxu0
      %v3265 = vadd.f32 0.0, %v3264
      %v3266 = vpop.f32.mrf.mxu0
      %v3267 = vadd.f32 0.0, %v3266
      %3268 = vmatmul.bf16.gmra.mxu0 %v558
      %v3269 = vpop.f32.mrf.mxu0
      %v3270 = vadd.f32 0.0, %v3269
      %v3271 = vpop.f32.mrf.mxu0
      %v3272 = vadd.f32 0.0, %v3271
      %3273 = vmatmul.bf16.gmra.mxu0 %v559
      %v3274 = vpop.f32.mrf.mxu0
      %v3275 = vadd.f32 0.0, %v3274
      %v3276 = vpop.f32.mrf.mxu0
      %v3277 = vadd.f32 0.0, %v3276
      %3278 = vmatmul.bf16.gmra.mxu0 %v560
      %v3279 = vpop.f32.mrf.mxu0
      %v3280 = vadd.f32 0.0, %v3279
      %v3281 = vpop.f32.mrf.mxu0
      %v3282 = vadd.f32 0.0, %v3281
      %3283 = vmatmul.bf16.gmra.mxu0 %v561
      %v3284 = vpop.f32.mrf.mxu0
      %v3285 = vadd.f32 0.0, %v3284
      %v3286 = vpop.f32.mrf.mxu0
      %v3287 = vadd.f32 0.0, %v3286
      %3288 = vmatmul.bf16.gmra.mxu0 %v562
      %v3289 = vpop.f32.mrf.mxu0
      %v3290 = vadd.f32 0.0, %v3289
      %v3291 = vpop.f32.mrf.mxu0
      %v3292 = vadd.f32 0.0, %v3291
      %3293 = vmatmul.bf16.gmra.mxu0 %v563
      %v3294 = vpop.f32.mrf.mxu0
      %v3295 = vadd.f32 0.0, %v3294
      %v3296 = vpop.f32.mrf.mxu0
      %v3297 = vadd.f32 0.0, %v3296
      %3298 = vmatmul.bf16.gmra.mxu0 %v564
      %v3299 = vpop.f32.mrf.mxu0
      %v3300 = vadd.f32 0.0, %v3299
      %v3301 = vpop.f32.mrf.mxu0
      %v3302 = vadd.f32 0.0, %v3301
      %3303 = vmatmul.bf16.gmra.mxu0 %v565
      %v3304 = vpop.f32.mrf.mxu0
      %v3305 = vadd.f32 0.0, %v3304
      %v3306 = vpop.f32.mrf.mxu0
      %v3307 = vadd.f32 0.0, %v3306
      %3308 = vmatmul.bf16.gmra.mxu0 %v566
      %v3309 = vpop.f32.mrf.mxu0
      %v3310 = vadd.f32 0.0, %v3309
      %v3311 = vpop.f32.mrf.mxu0
      %v3312 = vadd.f32 0.0, %v3311
      %3313 = vmatmul.bf16.gmra.mxu0 %v567
      %v3314 = vpop.f32.mrf.mxu0
      %v3315 = vadd.f32 0.0, %v3314
      %v3316 = vpop.f32.mrf.mxu0
      %v3317 = vadd.f32 0.0, %v3316
      %3318 = vmatmul.bf16.gmra.mxu0 %v568
      %v3319 = vpop.f32.mrf.mxu0
      %v3320 = vadd.f32 0.0, %v3319
      %v3321 = vpop.f32.mrf.mxu0
      %v3322 = vadd.f32 0.0, %v3321
      %3323 = vmatmul.bf16.gmra.mxu0 %v569
      %v3324 = vpop.f32.mrf.mxu0
      %v3325 = vadd.f32 0.0, %v3324
      %v3326 = vpop.f32.mrf.mxu0
      %v3327 = vadd.f32 0.0, %v3326
      %3328 = vdwg.mxu0
      %v3329 = vld [vmem:[%s11] sm:$0x1]
      %v3331 = vperm.slane %v3329, 0
      %v3333 = vmul.f32 %v3250, %v3331
      %v3334 = vmul.f32 %v3252, %v3331
      %v3335 = vmul.f32 %v3255, %v3331
      %v3336 = vmul.f32 %v3257, %v3331
      %v3337 = vmul.f32 %v3260, %v3331
      %v3338 = vmul.f32 %v3262, %v3331
      %v3339 = vmul.f32 %v3265, %v3331
      %v3340 = vmul.f32 %v3267, %v3331
      %v3341 = vmul.f32 %v3270, %v3331
      %v3342 = vmul.f32 %v3272, %v3331
      %v3343 = vmul.f32 %v3275, %v3331
      %v3344 = vmul.f32 %v3277, %v3331
      %v3345 = vmul.f32 %v3280, %v3331
      %v3346 = vmul.f32 %v3282, %v3331
      %v3347 = vmul.f32 %v3285, %v3331
      %v3348 = vmul.f32 %v3287, %v3331
      %v3349 = vmul.f32 %v3290, %v3331
      %v3350 = vmul.f32 %v3292, %v3331
      %v3351 = vmul.f32 %v3295, %v3331
      %v3352 = vmul.f32 %v3297, %v3331
      %v3353 = vmul.f32 %v3300, %v3331
      %v3354 = vmul.f32 %v3302, %v3331
      %v3355 = vmul.f32 %v3305, %v3331
      %v3356 = vmul.f32 %v3307, %v3331
      %v3357 = vmul.f32 %v3310, %v3331
      %v3358 = vmul.f32 %v3312, %v3331
      %v3359 = vmul.f32 %v3315, %v3331
      %v3360 = vmul.f32 %v3317, %v3331
      %v3361 = vmul.f32 %v3320, %v3331
      %v3362 = vmul.f32 %v3322, %v3331
      %v3363 = vmul.f32 %v3325, %v3331
      %v3364 = vmul.f32 %v3327, %v3331
      %v3365 = vld [vmem:[%s12] sm:$0x1]
      %v3367 = vperm.slane %v3365, 0
      %v3369 = vadd.f32 %v3333, %v3367
      %v3370 = vadd.f32 %v3334, %v3367
      %v3371 = vadd.f32 %v3335, %v3367
      %v3372 = vadd.f32 %v3336, %v3367
      %v3373 = vadd.f32 %v3337, %v3367
      %v3374 = vadd.f32 %v3338, %v3367
      %v3375 = vadd.f32 %v3339, %v3367
      %v3376 = vadd.f32 %v3340, %v3367
      %v3377 = vadd.f32 %v3341, %v3367
      %v3378 = vadd.f32 %v3342, %v3367
      %v3379 = vadd.f32 %v3343, %v3367
      %v3380 = vadd.f32 %v3344, %v3367
      %v3381 = vadd.f32 %v3345, %v3367
      %v3382 = vadd.f32 %v3346, %v3367
      %v3383 = vadd.f32 %v3347, %v3367
      %v3384 = vadd.f32 %v3348, %v3367
      %v3385 = vadd.f32 %v3349, %v3367
      %v3386 = vadd.f32 %v3350, %v3367
      %v3387 = vadd.f32 %v3351, %v3367
      %v3388 = vadd.f32 %v3352, %v3367
      %v3389 = vadd.f32 %v3353, %v3367
      %v3390 = vadd.f32 %v3354, %v3367
      %v3391 = vadd.f32 %v3355, %v3367
      %v3392 = vadd.f32 %v3356, %v3367
      %v3393 = vadd.f32 %v3357, %v3367
      %v3394 = vadd.f32 %v3358, %v3367
      %v3395 = vadd.f32 %v3359, %v3367
      %v3396 = vadd.f32 %v3360, %v3367
      %v3397 = vadd.f32 %v3361, %v3367
      %v3398 = vadd.f32 %v3362, %v3367
      %v3399 = vadd.f32 %v3363, %v3367
      %v3400 = vadd.f32 %v3364, %v3367
      %v3401 = vadd.f32 %v3144, %v3369
      %v3402 = vadd.f32 %v3145, %v3370
      %v3403 = vadd.f32 %v3146, %v3371
      %v3404 = vadd.f32 %v3147, %v3372
      %v3405 = vadd.f32 %v3148, %v3373
      %v3406 = vadd.f32 %v3149, %v3374
      %v3407 = vadd.f32 %v3150, %v3375
      %v3408 = vadd.f32 %v3151, %v3376
      %v3409 = vadd.f32 %v3152, %v3377
      %v3410 = vadd.f32 %v3153, %v3378
      %v3411 = vadd.f32 %v3154, %v3379
      %v3412 = vadd.f32 %v3155, %v3380
      %v3413 = vadd.f32 %v3156, %v3381
      %v3414 = vadd.f32 %v3157, %v3382
      %v3415 = vadd.f32 %v3158, %v3383
      %v3416 = vadd.f32 %v3159, %v3384
      %v3417 = vadd.f32 %v3160, %v3385
      %v3418 = vadd.f32 %v3161, %v3386
      %v3419 = vadd.f32 %v3162, %v3387
      %v3420 = vadd.f32 %v3163, %v3388
      %v3421 = vadd.f32 %v3164, %v3389
      %v3422 = vadd.f32 %v3165, %v3390
      %v3423 = vadd.f32 %v3166, %v3391
      %v3424 = vadd.f32 %v3167, %v3392
      %v3425 = vadd.f32 %v3168, %v3393
      %v3426 = vadd.f32 %v3169, %v3394
      %v3427 = vadd.f32 %v3170, %v3395
      %v3428 = vadd.f32 %v3171, %v3396
      %v3429 = vadd.f32 %v3172, %v3397
      %v3430 = vadd.f32 %v3173, %v3398
      %v3431 = vadd.f32 %v3174, %v3399
      %v3432 = vadd.f32 %v3175, %v3400
      %v3433 = vmax.f32 %v3401, 0.0
      %v3434 = vmax.f32 %v3402, 0.0
      %v3435 = vmax.f32 %v3403, 0.0
      %v3436 = vmax.f32 %v3404, 0.0
      %v3437 = vmax.f32 %v3405, 0.0
      %v3438 = vmax.f32 %v3406, 0.0
      %v3439 = vmax.f32 %v3407, 0.0
      %v3440 = vmax.f32 %v3408, 0.0
      %v3441 = vmax.f32 %v3409, 0.0
      %v3442 = vmax.f32 %v3410, 0.0
      %v3443 = vmax.f32 %v3411, 0.0
      %v3444 = vmax.f32 %v3412, 0.0
      %v3445 = vmax.f32 %v3413, 0.0
      %v3446 = vmax.f32 %v3414, 0.0
      %v3447 = vmax.f32 %v3415, 0.0
      %v3448 = vmax.f32 %v3416, 0.0
      %v3449 = vmax.f32 %v3417, 0.0
      %v3450 = vmax.f32 %v3418, 0.0
      %v3451 = vmax.f32 %v3419, 0.0
      %v3452 = vmax.f32 %v3420, 0.0
      %v3453 = vmax.f32 %v3421, 0.0
      %v3454 = vmax.f32 %v3422, 0.0
      %v3455 = vmax.f32 %v3423, 0.0
      %v3456 = vmax.f32 %v3424, 0.0
      %v3457 = vmax.f32 %v3425, 0.0
      %v3458 = vmax.f32 %v3426, 0.0
      %v3459 = vmax.f32 %v3427, 0.0
      %v3460 = vmax.f32 %v3428, 0.0
      %v3461 = vmax.f32 %v3429, 0.0
      %v3462 = vmax.f32 %v3430, 0.0
      %v3463 = vmax.f32 %v3431, 0.0
      %v3464 = vmax.f32 %v3432, 0.0
      %3465 = vst [vmem:[%s440] sm:$0xff] %v3433
      %3466 = vst [vmem:[%s440 + $0x8] sm:$0xff] %v3434
      %3467 = vst [vmem:[%s440 + $0x10] sm:$0xff] %v3435
      %3468 = vst [vmem:[%s440 + $0x18] sm:$0xff] %v3436
      %3469 = vst [vmem:[%s440 + $0x20] sm:$0xff] %v3437
      %3470 = vst [vmem:[%s440 + $0x28] sm:$0xff] %v3438
      %3471 = vst [vmem:[%s440 + $0x30] sm:$0xff] %v3439
      %3472 = vst [vmem:[%s440 + $0x38] sm:$0xff] %v3440
      %3473 = vst [vmem:[%s440 + $0x40] sm:$0xff] %v3441
      %3474 = vst [vmem:[%s440 + $0x48] sm:$0xff] %v3442
      %3475 = vst [vmem:[%s440 + $0x50] sm:$0xff] %v3443
      %3476 = vst [vmem:[%s440 + $0x58] sm:$0xff] %v3444
      %3477 = vst [vmem:[%s440 + $0x60] sm:$0xff] %v3445
      %3478 = vst [vmem:[%s440 + $0x68] sm:$0xff] %v3446
      %3479 = vst [vmem:[%s440 + $0x70] sm:$0xff] %v3447
      %3480 = vst [vmem:[%s440 + $0x78] sm:$0xff] %v3448
      %3481 = vst [vmem:[%s440 + $0x80] sm:$0xff] %v3449
      %3482 = vst [vmem:[%s440 + $0x88] sm:$0xff] %v3450
      %3483 = vst [vmem:[%s440 + $0x90] sm:$0xff] %v3451
      %3484 = vst [vmem:[%s440 + $0x98] sm:$0xff] %v3452
      %3485 = vst [vmem:[%s440 + $0xa0] sm:$0xff] %v3453
      %3486 = vst [vmem:[%s440 + $0xa8] sm:$0xff] %v3454
      %3487 = vst [vmem:[%s440 + $0xb0] sm:$0xff] %v3455
      %3488 = vst [vmem:[%s440 + $0xb8] sm:$0xff] %v3456
      %3489 = vst [vmem:[%s440 + $0xc0] sm:$0xff] %v3457
      %3490 = vst [vmem:[%s440 + $0xc8] sm:$0xff] %v3458
      %3491 = vst [vmem:[%s440 + $0xd0] sm:$0xff] %v3459
      %3492 = vst [vmem:[%s440 + $0xd8] sm:$0xff] %v3460
      %3493 = vst [vmem:[%s440 + $0xe0] sm:$0xff] %v3461
      %3494 = vst [vmem:[%s440 + $0xe8] sm:$0xff] %v3462
      %3495 = vst [vmem:[%s440 + $0xf0] sm:$0xff] %v3463
      %3496 = vst [vmem:[%s440 + $0xf8] sm:$0xff] %v3464
      %p3497 = scmp.lt.s32.totalorder %s24, 1
      %s3498 = scalar_select %p3497, %s24, 1
      %s3499 = smul.addr %s3498, 32
      %s3500 = smul.addr %s3499, 8
      %s3501 = scalar_lea.vmem %s13, %s3500
      // Predicated region
      $region73: #{bottleneck_forward.1} parent=71 // pred_check
        %p3502 = pneg %p320
      $region74: #{bottleneck_forward.1} parent=71 // pred_check_branch
        %3504 = sbr.rel (%p3502) target = $region76
      $region75: #{bottleneck_forward.1} parent=71 // pred_region
        _
      $region76: #{bottleneck_forward.1} parent=71 // pred_fallthru
        _
    $region72: #{bottleneck_forward.1} parent=5 // pred_fallthru
      _
    %p3505 = scmp.le.s32.totalorder 2, %s19
    // Predicated region
    $region77: #{bottleneck_forward.1} parent=5 // pred_check
      %p3506 = pneg %p3505
    $region78: #{bottleneck_forward.1} parent=5 // pred_check_branch
      %3508 = sbr.rel (%p3506) target = $region80
    $region79: #{bottleneck_forward.1} parent=5 // pred_region
      %s3509 = ssub.s32 %s19, 2
      // Predicated region
      $region81: #{bottleneck_forward.1} parent=79 // pred_check
        %p3510 = pneg %p326
      $region82: #{bottleneck_forward.1} parent=79 // pred_check_branch
        %3512 = sbr.rel (%p3510) target = $region84
      $region83: #{bottleneck_forward.1} parent=79 // pred_region
        %p3513 = scmp.lt.s32.totalorder %s25, 1
        %s3514 = scalar_select %p3513, %s25, 1
        %s3515 = smul.addr %s3514, 32
        %s3516 = smul.addr %s3515, 8
        %s3517 = scalar_lea.vmem %s13, %s3516
      $region84: #{bottleneck_forward.1} parent=79 // pred_fallthru
        _
    $region80: #{bottleneck_forward.1} parent=5 // pred_fallthru
      _
  $region6: #{bottleneck_forward.1} parent=0 // loop_footer
    %s23 = sadd.s32 1, %s19
  $region7: #{bottleneck_forward.1} parent=0 // loop_footer_branch
    %18 = sbr.rel target = $region3
  $region8: #{bottleneck_forward.1} parent=0 // loop_exit
    _

</llo_original>
